<compile_context>
chip_gen: v5e
topology: v5e:2x2
jax: 0.10.0
libtpu: 0.0.40
codegen_flags: <defaults>
</compile_context>

<pallas_src>
import jax
import jax.numpy as jnp
from jax import lax
from jax.experimental import pallas as pl
from jax.experimental.pallas import tpu as pltpu

C_IN = 2048   # conv111 in_channels  (fixed by the module)
C_OUT = 256   # conv111 out_channels (fixed by the module)
HW = 7        # spatial size of the 7x7 maps (fixed by the module's .view(-1, 7, 7))
P = HW * HW   # 49 spatial positions


# ----------------------------- fused Pallas kernel --------------------------- #

def _mapaa_fused_kernel(x_ref, wt_ref, b_ref, lut_ref, map_ref, valid_ref, o_ref):
    # x_ref    : (R, 2048)  bf16  B samples' NHWC rows (R = B*49), channels on lanes
    # wt_ref   : (2048, 256) bf16 conv111 weight, already transposed (resident)
    # b_ref    : (1, 256)   f32   conv111 bias (resident)
    # lut_ref  : (R, 256)   f32   lut[label] broadcast per spatial row (0 when invalid)
    # map_ref  : (R, 1)     f32   the 7x7 "map", flattened per row
    # valid_ref: (R, 1)     f32   1.0 where the sample contributes
    # o_ref    : (1, 1, 1)  f32   per-grid-step partial loss
    x = x_ref[...]                                               # (R, 2048) bf16
    wt = wt_ref[...]                                             # (2048, 256) bf16

    # conv111 as one big MXU matmul with f32 accumulation: (R,2048)@(2048,256)
    feat = jnp.dot(x, wt, preferred_element_type=jnp.float32) + b_ref[...]   # (R, 256)

    lut = lut_ref[...]                                           # (R, 256) f32
    dot = jnp.sum(feat * lut, axis=-1, keepdims=True)            # (R, 1)  lane reduce
    fns = jnp.sum(feat * feat, axis=-1, keepdims=True)           # (R, 1)  ||f||^2
    lns = jnp.sum(lut * lut, axis=-1, keepdims=True)             # (R, 1)  ||l||^2

    # cosine_similarity with each norm clamped at 1e-8 (rsqrt -> EUP slot).
    cos = dot * lax.rsqrt(jnp.maximum(fns, 1e-16)) * lax.rsqrt(jnp.maximum(lns, 1e-16))

    sub = jnp.abs(cos - map_ref[...])                            # (R, 1)
    # Mask invalid / padded samples BEFORE summing (NaN-safe: where drops them).
    sub = jnp.where(valid_ref[...] > 0.5, sub, 0.0)

    total = jnp.sum(sub, axis=(0, 1), keepdims=True)             # (1, 1)
    o_ref[0] = total * jnp.float32(1.0 / 324.0)


def mapaa_fused_pallas(x_rows, wT, bias_row, lut_rows, map_rows, valid_rows, B, G):
    R = B * P
    return pl.pallas_call(
        _mapaa_fused_kernel,
        out_shape=jax.ShapeDtypeStruct((G, 1, 1), jnp.float32),
        grid=(G,),
        in_specs=[
            pl.BlockSpec((R, C_IN), lambda i: (i, 0)),      # feature rows (per step, bf16)
            pl.BlockSpec((C_IN, C_OUT), lambda i: (0, 0)),  # W^T (resident, constant index)
            pl.BlockSpec((1, C_OUT), lambda i: (0, 0)),     # bias (resident)
            pl.BlockSpec((R, C_OUT), lambda i: (i, 0)),     # lut rows
            pl.BlockSpec((R, 1), lambda i: (i, 0)),         # map rows
            pl.BlockSpec((R, 1), lambda i: (i, 0)),         # valid rows
        ],
        out_specs=pl.BlockSpec((1, 1, 1), lambda i: (i, 0, 0)),
        compiler_params=pltpu.CompilerParams(
            dimension_semantics=("parallel",)),             # megacore split on v7x
    )(x_rows, wT, bias_row, lut_rows, map_rows, valid_rows)


def _pick_batch(n):
    # Single grid step for small N (ideal for the test case).  For larger N use
    # 8 samples/step: 8*49=392 rows keeps blocks sublane-aligned, gives >=2 grid
    # steps for v7x megacore, and stays well under every generation's VMEM limit
    # (~1.6 MiB bf16 feature block, double-buffered, + 1 MiB resident weight).
    return n if n <= 8 else 8


# ------------------------------ forward glue -------------------------------- #

def mapaa_forward(feature, inp, lut, label_list, conv_w, conv_b):
    targets = jnp.concatenate(label_list)          # torch.cat(label)
    label = targets - 1                            # (N,)
    N = feature.shape[0]
    L = lut.shape[0]

    # Channels-last bf16 feature rows: NCHW -> NHWC -> (N*49, 2048).
    # One wrapper-side transpose + cast; ideally the producer emits NHWC/bf16.
    x_rows = jnp.transpose(feature, (0, 2, 3, 1)).reshape(N * P, C_IN).astype(jnp.bfloat16)

    # conv weight (256,2048,1,1) -> W^T (2048,256) bf16; bias as a lane-dense row.
    wT = conv_w.reshape(C_OUT, C_IN).T.astype(jnp.bfloat16)
    b = conv_b.reshape(1, C_OUT)

    mp = inp.reshape(N, P)                         # squeeze(dim=1) + flatten 7x7

    # Static-shape equivalent of: inds = (label >= 0); y < len(lut); lut[y] != 0
    clip_lab = jnp.clip(label, 0, L - 1)
    lut_sel = lut[clip_lab]                        # (N, 256)
    valid = (label >= 0) & (label < L) & jnp.any(lut_sel != 0.0, axis=-1)
    validf = valid.astype(jnp.float32)
    lut_sel = lut_sel * validf[:, None]            # zero lut rows of invalid samples

    # Batch samples per grid step; pad N with zero-valid samples if needed.
    B = _pick_batch(N)
    G = pl.cdiv(N, B)
    n_pad = G * B
    if n_pad != N:
        pad = n_pad - N
        x_rows = jnp.pad(x_rows, ((0, pad * P), (0, 0)))
        lut_sel = jnp.pad(lut_sel, ((0, pad), (0, 0)))
        mp = jnp.pad(mp, ((0, pad), (0, 0)))
        validf = jnp.pad(validf, ((0, pad),))

    # Expand per-sample side data to per-row so the kernel stays pure 2-D.
    lut_rows = jnp.broadcast_to(lut_sel[:, None, :], (n_pad, P, C_OUT)).reshape(n_pad * P, C_OUT)
    map_rows = mp.reshape(n_pad * P, 1)
    valid_rows = jnp.broadcast_to(validf[:, None], (n_pad, P)).reshape(n_pad * P, 1)

    per_step = mapaa_fused_pallas(x_rows, wT, b, lut_rows, map_rows, valid_rows, B, G)
    return jnp.sum(per_step) + 0.01


# ------------------------------ pure-JAX reference --------------------------- #

def mapaa_reference(feature, inp, lut, label_list, conv_w, conv_b):
    targets = jnp.concatenate(label_list)
    label = targets - 1
    N = feature.shape[0]
    L = lut.shape[0]
    x = jnp.transpose(feature, (0, 2, 3, 1)).reshape(N * P, C_IN)
    wmat = conv_w.reshape(C_OUT, C_IN).T
    feat = (x @ wmat + conv_b).reshape(N, P, C_OUT)
    mp = inp.reshape(N, P)
    total = jnp.float32(0.0)
    for i in range(N):
        li = int(label[i])
        if li < 0 or li >= L:
            continue
        lv = lut[li]
        if not bool(jnp.any(lv != 0.0)):
            continue
        f = feat[i]                                                   # (49, 256)
        dot = f @ lv                                                  # (49,)
        denom = jnp.maximum(jnp.linalg.norm(f, axis=-1) * jnp.linalg.norm(lv), 1e-8)
        cos = dot / denom
        total = total + jnp.sum(jnp.abs(cos - mp[i])) / 324.0
    return total + 0.01


# ----------------------------------- main ------------------------------------ #

if __name__ == "__main__":
    key = jax.random.PRNGKey(0)
    kf, ki, kl, kw, kb = jax.random.split(key, 5)

    N = 4    # total number of labels / samples
    L = 6    # lut rows

    feature = jax.random.normal(kf, (N, C_IN, HW, HW), dtype=jnp.float32)
    inp = jax.random.uniform(ki, (N, 1, HW, HW), dtype=jnp.float32)
    lut = jax.random.normal(kl, (L, C_OUT), dtype=jnp.float32)
    lut = lut.at[2].set(0.0)   # one all-zero lut row -> exercises the skip path

    # label is a list of 1-D tensors in the PyTorch API (torch.cat(label))
    # labels - 1 = [0, 2, -1, 4]: valid, zero-lut-skip, invalid, valid
    label_list = [jnp.array([1, 3], dtype=jnp.int32),
                  jnp.array([0, 5], dtype=jnp.int32)]

    # Deterministic conv111 parameters (shape fixed by nn.Conv2d(2048, 256, 1)).
    conv_w = 0.02 * jax.random.normal(kw, (C_OUT, C_IN, 1, 1), dtype=jnp.float32)
    conv_b = 0.01 * jax.random.normal(kb, (C_OUT,), dtype=jnp.float32)

    loss = mapaa_forward(feature, inp, lut, label_list, conv_w, conv_b)
    loss = jax.block_until_ready(loss)

    ref = mapaa_reference(feature, inp, lut, label_list, conv_w, conv_b)
    assert jnp.allclose(loss, ref, rtol=5e-3, atol=5e-3), (float(loss), float(ref))

    print("KERNEL_OK")
</pallas_src>

<mosaic_0001>
module attributes {stable_mosaic.version = 11 : i64} {
  func.func @_mapaa_fused_kernel(%arg0: i32, %arg1: memref<196x2048xbf16, #tpu.memory_space<vmem>>, %arg2: memref<2048x256xbf16, #tpu.memory_space<vmem>>, %arg3: memref<1x256xf32, #tpu.memory_space<vmem>>, %arg4: memref<196x256xf32, #tpu.memory_space<vmem>>, %arg5: memref<196x1xf32, #tpu.memory_space<vmem>>, %arg6: memref<196x1xf32, #tpu.memory_space<vmem>>, %arg7: memref<1x1x1xf32, #tpu.memory_space<vmem>>) attributes {dimension_semantics = [#tpu.dimension_semantics<parallel>], iteration_bounds = array<i64: 1>, scalar_prefetch = 0 : i64, scratch_operands = 0 : i64, tpu.core_type = #tpu.core_type<tc>, window_params = [{transform_indices = @transform_0, window_bounds = array<i64: 196, 2048>}, {pipeline_mode = #tpu.pipeline_mode<synchronous>, transform_indices = @transform_1, window_bounds = array<i64: 2048, 256>}, {pipeline_mode = #tpu.pipeline_mode<synchronous>, transform_indices = @transform_2, window_bounds = array<i64: 1, 256>}, {transform_indices = @transform_3, window_bounds = array<i64: 196, 256>}, {transform_indices = @transform_4, window_bounds = array<i64: 196, 1>}, {transform_indices = @transform_5, window_bounds = array<i64: 196, 1>}, {transform_indices = @transform_6, window_bounds = array<i64: 1, 1, 1>}]} {
    %c0 = arith.constant 0 : index
    %c0_0 = arith.constant 0 : index
    %0 = vector.load %arg1[%c0, %c0_0] : memref<196x2048xbf16, #tpu.memory_space<vmem>>, vector<196x2048xbf16>
    %c0_1 = arith.constant 0 : index
    %c0_2 = arith.constant 0 : index
    %1 = vector.load %arg2[%c0_1, %c0_2] : memref<2048x256xbf16, #tpu.memory_space<vmem>>, vector<2048x256xbf16>
    %cst = arith.constant dense<0.000000e+00> : vector<196x256xf32>
    %2 = tpu.matmul %0, %1, %cst {dimension_numbers = #tpu.dot_dimension_numbers<[1], [0], [0], [1], [0, 0, 1, 1], [], []>} : vector<196x2048xbf16>, vector<2048x256xbf16>, vector<196x256xf32> -> vector<196x256xf32>
    %c0_3 = arith.constant 0 : index
    %c0_4 = arith.constant 0 : index
    %3 = vector.load %arg3[%c0_3, %c0_4] : memref<1x256xf32, #tpu.memory_space<vmem>>, vector<1x256xf32>
    %4 = vector.broadcast %3 : vector<1x256xf32> to vector<196x256xf32>
    %5 = arith.addf %2, %4 : vector<196x256xf32>
    %c0_5 = arith.constant 0 : index
    %c0_6 = arith.constant 0 : index
    %6 = vector.load %arg4[%c0_5, %c0_6] : memref<196x256xf32, #tpu.memory_space<vmem>>, vector<196x256xf32>
    %7 = arith.mulf %5, %6 : vector<196x256xf32>
    %cst_7 = arith.constant dense<0.000000e+00> : vector<196xf32>
    %8 = vector.multi_reduction <add>, %7, %cst_7 [1] : vector<196x256xf32> to vector<196xf32>
    %9 = vector.shape_cast %8 : vector<196xf32> to vector<196x1xf32>
    %10 = arith.mulf %5, %5 : vector<196x256xf32>
    %cst_8 = arith.constant dense<0.000000e+00> : vector<196xf32>
    %11 = vector.multi_reduction <add>, %10, %cst_8 [1] : vector<196x256xf32> to vector<196xf32>
    %12 = vector.shape_cast %11 : vector<196xf32> to vector<196x1xf32>
    %13 = arith.mulf %6, %6 : vector<196x256xf32>
    %cst_9 = arith.constant dense<0.000000e+00> : vector<196xf32>
    %14 = vector.multi_reduction <add>, %13, %cst_9 [1] : vector<196x256xf32> to vector<196xf32>
    %15 = vector.shape_cast %14 : vector<196xf32> to vector<196x1xf32>
    %cst_10 = arith.constant 1.000000e-16 : f32
    %16 = vector.broadcast %cst_10 : f32 to vector<196x1xf32>
    %17 = arith.maximumf %12, %16 : vector<196x1xf32>
    %18 = math.rsqrt %17 : vector<196x1xf32>
    %19 = arith.mulf %9, %18 : vector<196x1xf32>
    %cst_11 = arith.constant 1.000000e-16 : f32
    %20 = vector.broadcast %cst_11 : f32 to vector<196x1xf32>
    %21 = arith.maximumf %15, %20 : vector<196x1xf32>
    %22 = math.rsqrt %21 : vector<196x1xf32>
    %23 = arith.mulf %19, %22 : vector<196x1xf32>
    %c0_12 = arith.constant 0 : index
    %c0_13 = arith.constant 0 : index
    %24 = vector.load %arg5[%c0_12, %c0_13] : memref<196x1xf32, #tpu.memory_space<vmem>>, vector<196x1xf32>
    %25 = arith.subf %23, %24 : vector<196x1xf32>
    %26 = math.absf %25 : vector<196x1xf32>
    %c0_14 = arith.constant 0 : index
    %c0_15 = arith.constant 0 : index
    %27 = vector.load %arg6[%c0_14, %c0_15] : memref<196x1xf32, #tpu.memory_space<vmem>>, vector<196x1xf32>
    %cst_16 = arith.constant 5.000000e-01 : f32
    %28 = vector.broadcast %cst_16 : f32 to vector<196x1xf32>
    %29 = arith.cmpf ogt, %27, %28 : vector<196x1xf32>
    %cst_17 = arith.constant 0.000000e+00 : f32
    %30 = vector.broadcast %cst_17 : f32 to vector<196x1xf32>
    %31 = arith.select %29, %26, %30 : vector<196x1xi1>, vector<196x1xf32>
    %32 = vector.shape_cast %31 : vector<196x1xf32> to vector<1x196x1xf32>
    %cst_18 = arith.constant dense<0.000000e+00> : vector<1xf32>
    %33 = vector.multi_reduction <add>, %32, %cst_18 [1, 2] : vector<1x196x1xf32> to vector<1xf32>
    %34 = vector.shape_cast %33 : vector<1xf32> to vector<1x1x1xf32>
    %35 = vector.extract %34[0, 0, 0] : f32 from vector<1x1x1xf32>
    %36 = vector.broadcast %35 : f32 to vector<1x1xf32>
    %cst_19 = arith.constant 0.00308641978 : f32
    %37 = vector.broadcast %cst_19 : f32 to vector<1x1xf32>
    %38 = arith.mulf %36, %37 : vector<1x1xf32>
    %c0_20 = arith.constant 0 : index
    %c0_21 = arith.constant 0 : index
    %c0_22 = arith.constant 0 : index
    %39 = vector.load %arg7[%c0_20, %c0_21, %c0_22] : memref<1x1x1xf32, #tpu.memory_space<vmem>>, vector<1x1x1xf32>
    %40 = vector.shape_cast %39 : vector<1x1x1xf32> to vector<1x1xf32>
    %41 = vector.shape_cast %38 : vector<1x1xf32> to vector<1x1x1xf32>
    tpu.vector_store %arg7[%c0_20, %c0_21, %c0_22], %41 {strides = array<i32>} : memref<1x1x1xf32, #tpu.memory_space<vmem>>, vector<1x1x1xf32>,
    return
  }
  func.func @transform_0(%arg0: i32) -> (i32, i32) {
    %c0_i32 = arith.constant 0 : i32
    %c0_i32_0 = arith.constant 0 : i32
    return %arg0, %c0_i32 : i32, i32
  }
  func.func @transform_1(%arg0: i32) -> (i32, i32) {
    %c0_i32 = arith.constant 0 : i32
    %c0_i32_0 = arith.constant 0 : i32
    %c0_i32_1 = arith.constant 0 : i32
    return %c0_i32, %c0_i32_0 : i32, i32
  }
  func.func @transform_2(%arg0: i32) -> (i32, i32) {
    %c0_i32 = arith.constant 0 : i32
    %c0_i32_0 = arith.constant 0 : i32
    %c0_i32_1 = arith.constant 0 : i32
    return %c0_i32, %c0_i32_0 : i32, i32
  }
  func.func @transform_3(%arg0: i32) -> (i32, i32) {
    %c0_i32 = arith.constant 0 : i32
    %c0_i32_0 = arith.constant 0 : i32
    return %arg0, %c0_i32 : i32, i32
  }
  func.func @transform_4(%arg0: i32) -> (i32, i32) {
    %c0_i32 = arith.constant 0 : i32
    %c0_i32_0 = arith.constant 0 : i32
    return %arg0, %c0_i32 : i32, i32
  }
  func.func @transform_5(%arg0: i32) -> (i32, i32) {
    %c0_i32 = arith.constant 0 : i32
    %c0_i32_0 = arith.constant 0 : i32
    return %arg0, %c0_i32 : i32, i32
  }
  func.func @transform_6(%arg0: i32) -> (i32, i32, i32) {
    %c0_i32 = arith.constant 0 : i32
    %c0_i32_0 = arith.constant 0 : i32
    %c0_i32_1 = arith.constant 0 : i32
    return %arg0, %c0_i32, %c0_i32_0 : i32, i32, i32
  }
}

</mosaic_0001>

<llo_original>
// kernel: tpu_custom_call.1
$region0: #{tpu_custom_call.1}
  #allocation0 [shape = 'u32[]', space=smem, size = 0x4, offset = 0x4, fixed_abs, tag = 'smem constant byte address 0x4 - core index']
  #allocation1 [shape = 'u32[72,128]{1,0:T(1,128)}', space=vmem, size = 0x9000, scoped, tag = 'internal scratch']
  %s0 = inlined_call_operand.hbm [shape: bf16[196,2048], index: 0, kind: input, shape index: {}]
  %s1 = inlined_call_operand.hbm [shape: bf16[2048,256], index: 1, kind: input, shape index: {}]
  %s2 = inlined_call_operand.vmem [shape: f32[1,256], index: 2, kind: input, shape index: {}]
  %s3 = inlined_call_operand.vmem [shape: f32[196,256], index: 3, kind: input, shape index: {}]
  %s4 = inlined_call_operand.vmem [shape: f32[196,1], index: 4, kind: input, shape index: {}]
  %s5 = inlined_call_operand.vmem [shape: f32[196,1], index: 5, kind: input, shape index: {}]
  %s6 = inlined_call_operand.hbm [shape: f32[1,1,1], index: 6, kind: output, shape index: {}]
  %s7 = sld [smem:[#allocation0]]
  $region42: #{tpu_custom_call.1} parent=0
    _
  %s9 = ssub.s32 1, %s7
  %s10 = scalar_select 0, %s9, %s7
  $region1: #{tpu_custom_call.1} parent=0
    #allocation2 [shape = 'u8[819200]{0}', space=vmem, size = 0xc8000, scoped, tag = 'input window, operand 0, single buffered']
    #allocation3 [shape = 's32[1]{0}', space=sflag, size = 0x4, scoped, tag = 'scoped memory for tpu_custom_call.1']
    #allocation4 [shape = 's32[1]{0}', space=sflag, size = 0x4, scoped, tag = 'scoped memory for tpu_custom_call.1']
    #allocation5 [shape = 'u8[1048576]{0}', space=vmem, size = 0x100000, scoped, tag = 'input window, operand 1, single buffered']
    #allocation6 [shape = 's32[1]{0}', space=sflag, size = 0x4, scoped, tag = 'scoped memory for tpu_custom_call.1']
    #allocation7 [shape = 'u8[512]{0}', space=vmem, size = 0x400, scoped, tag = 'output window, operand 0, single buffered']
    %11 = vsyncpa [#allocation3], 0
    %12 = vsyncpa [#allocation6], 0
    %13 = vsyncpa [#allocation4], 0
    // Predicated region
    $region2: #{tpu_custom_call.1} parent=1 // pred_check
      _
    $region3: #{tpu_custom_call.1} parent=1 // pred_check_branch
      %15 = sbr.rel (0) target = $region5
    $region4: #{tpu_custom_call.1} parent=1 // pred_region
      %17 = vsyncadd [#allocation3], 0
      %s18 = sshll.u32 %s0, 4
      %s19 = int_to_ptr.hbm [resolvable:$true] %s18
      %s20 = sshll.u32 [#allocation2], 4
      %s21 = int_to_ptr.vmem [resolvable:$true] %s20
      %26 = dma.hbm_to_vmem [thread:$0]  %s19, 25600, %s21, [#allocation3], 1024, 1024, 64
    $region5: #{tpu_custom_call.1} parent=1 // pred_fallthru
      _
    // Predicated region
    $region6: #{tpu_custom_call.1} parent=1 // pred_check
      _
    $region7: #{tpu_custom_call.1} parent=1 // pred_check_branch
      %28 = sbr.rel (0) target = $region9
    $region8: #{tpu_custom_call.1} parent=1 // pred_region
      %30 = vsyncadd [#allocation6], 0
      %s31 = sshll.u32 %s1, 4
      %s32 = int_to_ptr.hbm [resolvable:$true] %s31
      %s33 = sshll.u32 [#allocation5], 4
      %s34 = int_to_ptr.vmem [resolvable:$true] %s33
      %39 = dma.hbm_to_vmem [thread:$0]  %s32, 32768, %s34, [#allocation6], 128, 128, 8
    $region9: #{tpu_custom_call.1} parent=1 // pred_fallthru
      _
    // Predicated region
    $region10: #{tpu_custom_call.1} parent=1 // pred_check
      _
    $region11: #{tpu_custom_call.1} parent=1 // pred_check_branch
      %41 = sbr.rel (0) target = $region13
    $region12: #{tpu_custom_call.1} parent=1 // pred_region
      _
    $region13: #{tpu_custom_call.1} parent=1 // pred_fallthru
      _
    // Predicated region
    $region14: #{tpu_custom_call.1} parent=1 // pred_check
      _
    $region15: #{tpu_custom_call.1} parent=1 // pred_check_branch
      %43 = sbr.rel (0) target = $region17
    $region16: #{tpu_custom_call.1} parent=1 // pred_region
      _
    $region17: #{tpu_custom_call.1} parent=1 // pred_fallthru
      _
    // Predicated region
    $region18: #{tpu_custom_call.1} parent=1 // pred_check
      _
    $region19: #{tpu_custom_call.1} parent=1 // pred_check_branch
      %45 = sbr.rel (0) target = $region21
    $region20: #{tpu_custom_call.1} parent=1 // pred_region
      _
    $region21: #{tpu_custom_call.1} parent=1 // pred_fallthru
      _
    // Predicated region
    $region22: #{tpu_custom_call.1} parent=1 // pred_check
      _
    $region23: #{tpu_custom_call.1} parent=1 // pred_check_branch
      %47 = sbr.rel (0) target = $region25
    $region24: #{tpu_custom_call.1} parent=1 // pred_region
      _
    $region25: #{tpu_custom_call.1} parent=1 // pred_fallthru
      _
    // Predicated region
    $region26: #{tpu_custom_call.1} parent=1 // pred_check
      _
    $region27: #{tpu_custom_call.1} parent=1 // pred_check_branch
      %49 = sbr.rel (0) target = $region29
    $region28: #{tpu_custom_call.1} parent=1 // pred_region
      %51 = dma.done [#allocation3], 25600
    $region29: #{tpu_custom_call.1} parent=1 // pred_fallthru
      _
    // Predicated region
    $region30: #{tpu_custom_call.1} parent=1 // pred_check
      _
    $region31: #{tpu_custom_call.1} parent=1 // pred_check_branch
      %53 = sbr.rel (0) target = $region33
    $region32: #{tpu_custom_call.1} parent=1 // pred_region
      %55 = dma.done [#allocation6], 32768
    $region33: #{tpu_custom_call.1} parent=1 // pred_fallthru
      _
    %v56 = vld [vmem:[#allocation2] sm:$0xff]
    %v57 = vld [vmem:[#allocation2 + $0x8] sm:$0xff]
    %v58 = vld [vmem:[#allocation2 + $0x10] sm:$0xff]
    %v59 = vld [vmem:[#allocation2 + $0x18] sm:$0xff]
    %v60 = vld [vmem:[#allocation2 + $0x20] sm:$0xff]
    %v61 = vld [vmem:[#allocation2 + $0x28] sm:$0xff]
    %v62 = vld [vmem:[#allocation2 + $0x30] sm:$0xff]
    %v63 = vld [vmem:[#allocation2 + $0x38] sm:$0xff]
    %v64 = vld [vmem:[#allocation2 + $0x40] sm:$0xff]
    %v65 = vld [vmem:[#allocation2 + $0x48] sm:$0xff]
    %v66 = vld [vmem:[#allocation2 + $0x50] sm:$0xff]
    %v67 = vld [vmem:[#allocation2 + $0x58] sm:$0xff]
    %v68 = vld [vmem:[#allocation2 + $0x60] sm:$0xff]
    %v69 = vld [vmem:[#allocation2 + $0x68] sm:$0xff]
    %v70 = vld [vmem:[#allocation2 + $0x70] sm:$0xff]
    %v71 = vld [vmem:[#allocation2 + $0x78] sm:$0xff]
    %v72 = vld [vmem:[#allocation2 + $0x80] sm:$0xff]
    %v73 = vld [vmem:[#allocation2 + $0x88] sm:$0xff]
    %v74 = vld [vmem:[#allocation2 + $0x90] sm:$0xff]
    %v75 = vld [vmem:[#allocation2 + $0x98] sm:$0xff]
    %v76 = vld [vmem:[#allocation2 + $0xa0] sm:$0xff]
    %v77 = vld [vmem:[#allocation2 + $0xa8] sm:$0xff]
    %v78 = vld [vmem:[#allocation2 + $0xb0] sm:$0xff]
    %v79 = vld [vmem:[#allocation2 + $0xb8] sm:$0xff]
    %v80 = vld [vmem:[#allocation2 + $0xc0] sm:$0xff]
    %v81 = vld [vmem:[#allocation2 + $0xc8] sm:$0xff]
    %v82 = vld [vmem:[#allocation2 + $0xd0] sm:$0xff]
    %v83 = vld [vmem:[#allocation2 + $0xd8] sm:$0xff]
    %v84 = vld [vmem:[#allocation2 + $0xe0] sm:$0xff]
    %v85 = vld [vmem:[#allocation2 + $0xe8] sm:$0xff]
    %v86 = vld [vmem:[#allocation2 + $0xf0] sm:$0xff]
    %v87 = vld [vmem:[#allocation2 + $0xf8] sm:$0xff]
    %v88 = vld [vmem:[#allocation2 + $0x100] sm:$0xff]
    %v89 = vld [vmem:[#allocation2 + $0x108] sm:$0xff]
    %v90 = vld [vmem:[#allocation2 + $0x110] sm:$0xff]
    %v91 = vld [vmem:[#allocation2 + $0x118] sm:$0xff]
    %v92 = vld [vmem:[#allocation2 + $0x120] sm:$0xff]
    %v93 = vld [vmem:[#allocation2 + $0x128] sm:$0xff]
    %v94 = vld [vmem:[#allocation2 + $0x130] sm:$0xff]
    %v95 = vld [vmem:[#allocation2 + $0x138] sm:$0xff]
    %v96 = vld [vmem:[#allocation2 + $0x140] sm:$0xff]
    %v97 = vld [vmem:[#allocation2 + $0x148] sm:$0xff]
    %v98 = vld [vmem:[#allocation2 + $0x150] sm:$0xff]
    %v99 = vld [vmem:[#allocation2 + $0x158] sm:$0xff]
    %v100 = vld [vmem:[#allocation2 + $0x160] sm:$0xff]
    %v101 = vld [vmem:[#allocation2 + $0x168] sm:$0xff]
    %v102 = vld [vmem:[#allocation2 + $0x170] sm:$0xff]
    %v103 = vld [vmem:[#allocation2 + $0x178] sm:$0xff]
    %v104 = vld [vmem:[#allocation2 + $0x180] sm:$0xff]
    %v105 = vld [vmem:[#allocation2 + $0x188] sm:$0xff]
    %v106 = vld [vmem:[#allocation2 + $0x190] sm:$0xff]
    %v107 = vld [vmem:[#allocation2 + $0x198] sm:$0xff]
    %v108 = vld [vmem:[#allocation2 + $0x1a0] sm:$0xff]
    %v109 = vld [vmem:[#allocation2 + $0x1a8] sm:$0xff]
    %v110 = vld [vmem:[#allocation2 + $0x1b0] sm:$0xff]
    %v111 = vld [vmem:[#allocation2 + $0x1b8] sm:$0xff]
    %v112 = vld [vmem:[#allocation2 + $0x1c0] sm:$0xff]
    %v113 = vld [vmem:[#allocation2 + $0x1c8] sm:$0xff]
    %v114 = vld [vmem:[#allocation2 + $0x1d0] sm:$0xff]
    %v115 = vld [vmem:[#allocation2 + $0x1d8] sm:$0xff]
    %v116 = vld [vmem:[#allocation2 + $0x1e0] sm:$0xff]
    %v117 = vld [vmem:[#allocation2 + $0x1e8] sm:$0xff]
    %v118 = vld [vmem:[#allocation2 + $0x1f0] sm:$0xff]
    %v119 = vld [vmem:[#allocation2 + $0x1f8] sm:$0xff]
    %v120 = vld [vmem:[#allocation2 + $0x200] sm:$0xff]
    %v121 = vld [vmem:[#allocation2 + $0x208] sm:$0xff]
    %v122 = vld [vmem:[#allocation2 + $0x210] sm:$0xff]
    %v123 = vld [vmem:[#allocation2 + $0x218] sm:$0xff]
    %v124 = vld [vmem:[#allocation2 + $0x220] sm:$0xff]
    %v125 = vld [vmem:[#allocation2 + $0x228] sm:$0xff]
    %v126 = vld [vmem:[#allocation2 + $0x230] sm:$0xff]
    %v127 = vld [vmem:[#allocation2 + $0x238] sm:$0xff]
    %v128 = vld [vmem:[#allocation2 + $0x240] sm:$0xff]
    %v129 = vld [vmem:[#allocation2 + $0x248] sm:$0xff]
    %v130 = vld [vmem:[#allocation2 + $0x250] sm:$0xff]
    %v131 = vld [vmem:[#allocation2 + $0x258] sm:$0xff]
    %v132 = vld [vmem:[#allocation2 + $0x260] sm:$0xff]
    %v133 = vld [vmem:[#allocation2 + $0x268] sm:$0xff]
    %v134 = vld [vmem:[#allocation2 + $0x270] sm:$0xff]
    %v135 = vld [vmem:[#allocation2 + $0x278] sm:$0xff]
    %v136 = vld [vmem:[#allocation2 + $0x280] sm:$0xff]
    %v137 = vld [vmem:[#allocation2 + $0x288] sm:$0xff]
    %v138 = vld [vmem:[#allocation2 + $0x290] sm:$0xff]
    %v139 = vld [vmem:[#allocation2 + $0x298] sm:$0xff]
    %v140 = vld [vmem:[#allocation2 + $0x2a0] sm:$0xff]
    %v141 = vld [vmem:[#allocation2 + $0x2a8] sm:$0xff]
    %v142 = vld [vmem:[#allocation2 + $0x2b0] sm:$0xff]
    %v143 = vld [vmem:[#allocation2 + $0x2b8] sm:$0xff]
    %v144 = vld [vmem:[#allocation2 + $0x2c0] sm:$0xff]
    %v145 = vld [vmem:[#allocation2 + $0x2c8] sm:$0xff]
    %v146 = vld [vmem:[#allocation2 + $0x2d0] sm:$0xff]
    %v147 = vld [vmem:[#allocation2 + $0x2d8] sm:$0xff]
    %v148 = vld [vmem:[#allocation2 + $0x2e0] sm:$0xff]
    %v149 = vld [vmem:[#allocation2 + $0x2e8] sm:$0xff]
    %v150 = vld [vmem:[#allocation2 + $0x2f0] sm:$0xff]
    %v151 = vld [vmem:[#allocation2 + $0x2f8] sm:$0xff]
    %v152 = vld [vmem:[#allocation2 + $0x300] sm:$0xff]
    %v153 = vld [vmem:[#allocation2 + $0x308] sm:$0xff]
    %v154 = vld [vmem:[#allocation2 + $0x310] sm:$0xff]
    %v155 = vld [vmem:[#allocation2 + $0x318] sm:$0xff]
    %v156 = vld [vmem:[#allocation2 + $0x320] sm:$0xff]
    %v157 = vld [vmem:[#allocation2 + $0x328] sm:$0xff]
    %v158 = vld [vmem:[#allocation2 + $0x330] sm:$0xff]
    %v159 = vld [vmem:[#allocation2 + $0x338] sm:$0xff]
    %v160 = vld [vmem:[#allocation2 + $0x340] sm:$0xff]
    %v161 = vld [vmem:[#allocation2 + $0x348] sm:$0xff]
    %v162 = vld [vmem:[#allocation2 + $0x350] sm:$0xff]
    %v163 = vld [vmem:[#allocation2 + $0x358] sm:$0xff]
    %v164 = vld [vmem:[#allocation2 + $0x360] sm:$0xff]
    %v165 = vld [vmem:[#allocation2 + $0x368] sm:$0xff]
    %v166 = vld [vmem:[#allocation2 + $0x370] sm:$0xff]
    %v167 = vld [vmem:[#allocation2 + $0x378] sm:$0xff]
    %v168 = vld [vmem:[#allocation2 + $0x380] sm:$0xff]
    %v169 = vld [vmem:[#allocation2 + $0x388] sm:$0xff]
    %v170 = vld [vmem:[#allocation2 + $0x390] sm:$0xff]
    %v171 = vld [vmem:[#allocation2 + $0x398] sm:$0xff]
    %v172 = vld [vmem:[#allocation2 + $0x3a0] sm:$0xff]
    %v173 = vld [vmem:[#allocation2 + $0x3a8] sm:$0xff]
    %v174 = vld [vmem:[#allocation2 + $0x3b0] sm:$0xff]
    %v175 = vld [vmem:[#allocation2 + $0x3b8] sm:$0xff]
    %v176 = vld [vmem:[#allocation2 + $0x3c0] sm:$0xff]
    %v177 = vld [vmem:[#allocation2 + $0x3c8] sm:$0xff]
    %v178 = vld [vmem:[#allocation2 + $0x3d0] sm:$0xff]
    %v179 = vld [vmem:[#allocation2 + $0x3d8] sm:$0xff]
    %v180 = vld [vmem:[#allocation2 + $0x3e0] sm:$0xff]
    %v181 = vld [vmem:[#allocation2 + $0x3e8] sm:$0xff]
    %v182 = vld [vmem:[#allocation2 + $0x3f0] sm:$0xff]
    %v183 = vld [vmem:[#allocation2 + $0x3f8] sm:$0xff]
    %v184 = vld [vmem:[#allocation2 + $0x400] sm:$0xff]
    %v185 = vld [vmem:[#allocation2 + $0x408] sm:$0xff]
    %v186 = vld [vmem:[#allocation2 + $0x410] sm:$0xff]
    %v187 = vld [vmem:[#allocation2 + $0x418] sm:$0xff]
    %v188 = vld [vmem:[#allocation2 + $0x420] sm:$0xff]
    %v189 = vld [vmem:[#allocation2 + $0x428] sm:$0xff]
    %v190 = vld [vmem:[#allocation2 + $0x430] sm:$0xff]
    %v191 = vld [vmem:[#allocation2 + $0x438] sm:$0xff]
    %v192 = vld [vmem:[#allocation2 + $0x440] sm:$0xff]
    %v193 = vld [vmem:[#allocation2 + $0x448] sm:$0xff]
    %v194 = vld [vmem:[#allocation2 + $0x450] sm:$0xff]
    %v195 = vld [vmem:[#allocation2 + $0x458] sm:$0xff]
    %v196 = vld [vmem:[#allocation2 + $0x460] sm:$0xff]
    %v197 = vld [vmem:[#allocation2 + $0x468] sm:$0xff]
    %v198 = vld [vmem:[#allocation2 + $0x470] sm:$0xff]
    %v199 = vld [vmem:[#allocation2 + $0x478] sm:$0xff]
    %v200 = vld [vmem:[#allocation2 + $0x480] sm:$0xff]
    %v201 = vld [vmem:[#allocation2 + $0x488] sm:$0xff]
    %v202 = vld [vmem:[#allocation2 + $0x490] sm:$0xff]
    %v203 = vld [vmem:[#allocation2 + $0x498] sm:$0xff]
    %v204 = vld [vmem:[#allocation2 + $0x4a0] sm:$0xff]
    %v205 = vld [vmem:[#allocation2 + $0x4a8] sm:$0xff]
    %v206 = vld [vmem:[#allocation2 + $0x4b0] sm:$0xff]
    %v207 = vld [vmem:[#allocation2 + $0x4b8] sm:$0xff]
    %v208 = vld [vmem:[#allocation2 + $0x4c0] sm:$0xff]
    %v209 = vld [vmem:[#allocation2 + $0x4c8] sm:$0xff]
    %v210 = vld [vmem:[#allocation2 + $0x4d0] sm:$0xff]
    %v211 = vld [vmem:[#allocation2 + $0x4d8] sm:$0xff]
    %v212 = vld [vmem:[#allocation2 + $0x4e0] sm:$0xff]
    %v213 = vld [vmem:[#allocation2 + $0x4e8] sm:$0xff]
    %v214 = vld [vmem:[#allocation2 + $0x4f0] sm:$0xff]
    %v215 = vld [vmem:[#allocation2 + $0x4f8] sm:$0xff]
    %v216 = vld [vmem:[#allocation2 + $0x500] sm:$0xff]
    %v217 = vld [vmem:[#allocation2 + $0x508] sm:$0xff]
    %v218 = vld [vmem:[#allocation2 + $0x510] sm:$0xff]
    %v219 = vld [vmem:[#allocation2 + $0x518] sm:$0xff]
    %v220 = vld [vmem:[#allocation2 + $0x520] sm:$0xff]
    %v221 = vld [vmem:[#allocation2 + $0x528] sm:$0xff]
    %v222 = vld [vmem:[#allocation2 + $0x530] sm:$0xff]
    %v223 = vld [vmem:[#allocation2 + $0x538] sm:$0xff]
    %v224 = vld [vmem:[#allocation2 + $0x540] sm:$0xff]
    %v225 = vld [vmem:[#allocation2 + $0x548] sm:$0xff]
    %v226 = vld [vmem:[#allocation2 + $0x550] sm:$0xff]
    %v227 = vld [vmem:[#allocation2 + $0x558] sm:$0xff]
    %v228 = vld [vmem:[#allocation2 + $0x560] sm:$0xff]
    %v229 = vld [vmem:[#allocation2 + $0x568] sm:$0xff]
    %v230 = vld [vmem:[#allocation2 + $0x570] sm:$0xff]
    %v231 = vld [vmem:[#allocation2 + $0x578] sm:$0xff]
    %v232 = vld [vmem:[#allocation2 + $0x580] sm:$0xff]
    %v233 = vld [vmem:[#allocation2 + $0x588] sm:$0xff]
    %v234 = vld [vmem:[#allocation2 + $0x590] sm:$0xff]
    %v235 = vld [vmem:[#allocation2 + $0x598] sm:$0xff]
    %v236 = vld [vmem:[#allocation2 + $0x5a0] sm:$0xff]
    %v237 = vld [vmem:[#allocation2 + $0x5a8] sm:$0xff]
    %v238 = vld [vmem:[#allocation2 + $0x5b0] sm:$0xff]
    %v239 = vld [vmem:[#allocation2 + $0x5b8] sm:$0xff]
    %v240 = vld [vmem:[#allocation2 + $0x5c0] sm:$0xff]
    %v241 = vld [vmem:[#allocation2 + $0x5c8] sm:$0xff]
    %v242 = vld [vmem:[#allocation2 + $0x5d0] sm:$0xff]
    %v243 = vld [vmem:[#allocation2 + $0x5d8] sm:$0xff]
    %v244 = vld [vmem:[#allocation2 + $0x5e0] sm:$0xff]
    %v245 = vld [vmem:[#allocation2 + $0x5e8] sm:$0xff]
    %v246 = vld [vmem:[#allocation2 + $0x5f0] sm:$0xff]
    %v247 = vld [vmem:[#allocation2 + $0x5f8] sm:$0xff]
    %v248 = vld [vmem:[#allocation2 + $0x600] sm:$0x33]
    %v249 = vld [vmem:[#allocation2 + $0x608] sm:$0x33]
    %v250 = vld [vmem:[#allocation2 + $0x610] sm:$0x33]
    %v251 = vld [vmem:[#allocation2 + $0x618] sm:$0x33]
    %v252 = vld [vmem:[#allocation2 + $0x620] sm:$0x33]
    %v253 = vld [vmem:[#allocation2 + $0x628] sm:$0x33]
    %v254 = vld [vmem:[#allocation2 + $0x630] sm:$0x33]
    %v255 = vld [vmem:[#allocation2 + $0x638] sm:$0x33]
    %v256 = vld [vmem:[#allocation5] sm:$0xff]
    %v257 = vld [vmem:[#allocation5 + $0x8] sm:$0xff]
    %v258 = vld [vmem:[#allocation5 + $0x10] sm:$0xff]
    %v259 = vld [vmem:[#allocation5 + $0x18] sm:$0xff]
    %v260 = vld [vmem:[#allocation5 + $0x20] sm:$0xff]
    %v261 = vld [vmem:[#allocation5 + $0x28] sm:$0xff]
    %v262 = vld [vmem:[#allocation5 + $0x30] sm:$0xff]
    %v263 = vld [vmem:[#allocation5 + $0x38] sm:$0xff]
    %v264 = vld [vmem:[#allocation5 + $0x40] sm:$0xff]
    %v265 = vld [vmem:[#allocation5 + $0x48] sm:$0xff]
    %v266 = vld [vmem:[#allocation5 + $0x50] sm:$0xff]
    %v267 = vld [vmem:[#allocation5 + $0x58] sm:$0xff]
    %v268 = vld [vmem:[#allocation5 + $0x60] sm:$0xff]
    %v269 = vld [vmem:[#allocation5 + $0x68] sm:$0xff]
    %v270 = vld [vmem:[#allocation5 + $0x70] sm:$0xff]
    %v271 = vld [vmem:[#allocation5 + $0x78] sm:$0xff]
    %v272 = vld [vmem:[#allocation5 + $0x80] sm:$0xff]
    %v273 = vld [vmem:[#allocation5 + $0x88] sm:$0xff]
    %v274 = vld [vmem:[#allocation5 + $0x90] sm:$0xff]
    %v275 = vld [vmem:[#allocation5 + $0x98] sm:$0xff]
    %v276 = vld [vmem:[#allocation5 + $0xa0] sm:$0xff]
    %v277 = vld [vmem:[#allocation5 + $0xa8] sm:$0xff]
    %v278 = vld [vmem:[#allocation5 + $0xb0] sm:$0xff]
    %v279 = vld [vmem:[#allocation5 + $0xb8] sm:$0xff]
    %v280 = vld [vmem:[#allocation5 + $0xc0] sm:$0xff]
    %v281 = vld [vmem:[#allocation5 + $0xc8] sm:$0xff]
    %v282 = vld [vmem:[#allocation5 + $0xd0] sm:$0xff]
    %v283 = vld [vmem:[#allocation5 + $0xd8] sm:$0xff]
    %v284 = vld [vmem:[#allocation5 + $0xe0] sm:$0xff]
    %v285 = vld [vmem:[#allocation5 + $0xe8] sm:$0xff]
    %v286 = vld [vmem:[#allocation5 + $0xf0] sm:$0xff]
    %v287 = vld [vmem:[#allocation5 + $0xf8] sm:$0xff]
    %v288 = vld [vmem:[#allocation5 + $0x100] sm:$0xff]
    %v289 = vld [vmem:[#allocation5 + $0x108] sm:$0xff]
    %v290 = vld [vmem:[#allocation5 + $0x110] sm:$0xff]
    %v291 = vld [vmem:[#allocation5 + $0x118] sm:$0xff]
    %v292 = vld [vmem:[#allocation5 + $0x120] sm:$0xff]
    %v293 = vld [vmem:[#allocation5 + $0x128] sm:$0xff]
    %v294 = vld [vmem:[#allocation5 + $0x130] sm:$0xff]
    %v295 = vld [vmem:[#allocation5 + $0x138] sm:$0xff]
    %v296 = vld [vmem:[#allocation5 + $0x140] sm:$0xff]
    %v297 = vld [vmem:[#allocation5 + $0x148] sm:$0xff]
    %v298 = vld [vmem:[#allocation5 + $0x150] sm:$0xff]
    %v299 = vld [vmem:[#allocation5 + $0x158] sm:$0xff]
    %v300 = vld [vmem:[#allocation5 + $0x160] sm:$0xff]
    %v301 = vld [vmem:[#allocation5 + $0x168] sm:$0xff]
    %v302 = vld [vmem:[#allocation5 + $0x170] sm:$0xff]
    %v303 = vld [vmem:[#allocation5 + $0x178] sm:$0xff]
    %v304 = vld [vmem:[#allocation5 + $0x180] sm:$0xff]
    %v305 = vld [vmem:[#allocation5 + $0x188] sm:$0xff]
    %v306 = vld [vmem:[#allocation5 + $0x190] sm:$0xff]
    %v307 = vld [vmem:[#allocation5 + $0x198] sm:$0xff]
    %v308 = vld [vmem:[#allocation5 + $0x1a0] sm:$0xff]
    %v309 = vld [vmem:[#allocation5 + $0x1a8] sm:$0xff]
    %v310 = vld [vmem:[#allocation5 + $0x1b0] sm:$0xff]
    %v311 = vld [vmem:[#allocation5 + $0x1b8] sm:$0xff]
    %v312 = vld [vmem:[#allocation5 + $0x1c0] sm:$0xff]
    %v313 = vld [vmem:[#allocation5 + $0x1c8] sm:$0xff]
    %v314 = vld [vmem:[#allocation5 + $0x1d0] sm:$0xff]
    %v315 = vld [vmem:[#allocation5 + $0x1d8] sm:$0xff]
    %v316 = vld [vmem:[#allocation5 + $0x1e0] sm:$0xff]
    %v317 = vld [vmem:[#allocation5 + $0x1e8] sm:$0xff]
    %v318 = vld [vmem:[#allocation5 + $0x1f0] sm:$0xff]
    %v319 = vld [vmem:[#allocation5 + $0x1f8] sm:$0xff]
    %v320 = vld [vmem:[#allocation5 + $0x200] sm:$0xff]
    %v321 = vld [vmem:[#allocation5 + $0x208] sm:$0xff]
    %v322 = vld [vmem:[#allocation5 + $0x210] sm:$0xff]
    %v323 = vld [vmem:[#allocation5 + $0x218] sm:$0xff]
    %v324 = vld [vmem:[#allocation5 + $0x220] sm:$0xff]
    %v325 = vld [vmem:[#allocation5 + $0x228] sm:$0xff]
    %v326 = vld [vmem:[#allocation5 + $0x230] sm:$0xff]
    %v327 = vld [vmem:[#allocation5 + $0x238] sm:$0xff]
    %v328 = vld [vmem:[#allocation5 + $0x240] sm:$0xff]
    %v329 = vld [vmem:[#allocation5 + $0x248] sm:$0xff]
    %v330 = vld [vmem:[#allocation5 + $0x250] sm:$0xff]
    %v331 = vld [vmem:[#allocation5 + $0x258] sm:$0xff]
    %v332 = vld [vmem:[#allocation5 + $0x260] sm:$0xff]
    %v333 = vld [vmem:[#allocation5 + $0x268] sm:$0xff]
    %v334 = vld [vmem:[#allocation5 + $0x270] sm:$0xff]
    %v335 = vld [vmem:[#allocation5 + $0x278] sm:$0xff]
    %v336 = vld [vmem:[#allocation5 + $0x280] sm:$0xff]
    %v337 = vld [vmem:[#allocation5 + $0x288] sm:$0xff]
    %v338 = vld [vmem:[#allocation5 + $0x290] sm:$0xff]
    %v339 = vld [vmem:[#allocation5 + $0x298] sm:$0xff]
    %v340 = vld [vmem:[#allocation5 + $0x2a0] sm:$0xff]
    %v341 = vld [vmem:[#allocation5 + $0x2a8] sm:$0xff]
    %v342 = vld [vmem:[#allocation5 + $0x2b0] sm:$0xff]
    %v343 = vld [vmem:[#allocation5 + $0x2b8] sm:$0xff]
    %v344 = vld [vmem:[#allocation5 + $0x2c0] sm:$0xff]
    %v345 = vld [vmem:[#allocation5 + $0x2c8] sm:$0xff]
    %v346 = vld [vmem:[#allocation5 + $0x2d0] sm:$0xff]
    %v347 = vld [vmem:[#allocation5 + $0x2d8] sm:$0xff]
    %v348 = vld [vmem:[#allocation5 + $0x2e0] sm:$0xff]
    %v349 = vld [vmem:[#allocation5 + $0x2e8] sm:$0xff]
    %v350 = vld [vmem:[#allocation5 + $0x2f0] sm:$0xff]
    %v351 = vld [vmem:[#allocation5 + $0x2f8] sm:$0xff]
    %v352 = vld [vmem:[#allocation5 + $0x300] sm:$0xff]
    %v353 = vld [vmem:[#allocation5 + $0x308] sm:$0xff]
    %v354 = vld [vmem:[#allocation5 + $0x310] sm:$0xff]
    %v355 = vld [vmem:[#allocation5 + $0x318] sm:$0xff]
    %v356 = vld [vmem:[#allocation5 + $0x320] sm:$0xff]
    %v357 = vld [vmem:[#allocation5 + $0x328] sm:$0xff]
    %v358 = vld [vmem:[#allocation5 + $0x330] sm:$0xff]
    %v359 = vld [vmem:[#allocation5 + $0x338] sm:$0xff]
    %v360 = vld [vmem:[#allocation5 + $0x340] sm:$0xff]
    %v361 = vld [vmem:[#allocation5 + $0x348] sm:$0xff]
    %v362 = vld [vmem:[#allocation5 + $0x350] sm:$0xff]
    %v363 = vld [vmem:[#allocation5 + $0x358] sm:$0xff]
    %v364 = vld [vmem:[#allocation5 + $0x360] sm:$0xff]
    %v365 = vld [vmem:[#allocation5 + $0x368] sm:$0xff]
    %v366 = vld [vmem:[#allocation5 + $0x370] sm:$0xff]
    %v367 = vld [vmem:[#allocation5 + $0x378] sm:$0xff]
    %v368 = vld [vmem:[#allocation5 + $0x380] sm:$0xff]
    %v369 = vld [vmem:[#allocation5 + $0x388] sm:$0xff]
    %v370 = vld [vmem:[#allocation5 + $0x390] sm:$0xff]
    %v371 = vld [vmem:[#allocation5 + $0x398] sm:$0xff]
    %v372 = vld [vmem:[#allocation5 + $0x3a0] sm:$0xff]
    %v373 = vld [vmem:[#allocation5 + $0x3a8] sm:$0xff]
    %v374 = vld [vmem:[#allocation5 + $0x3b0] sm:$0xff]
    %v375 = vld [vmem:[#allocation5 + $0x3b8] sm:$0xff]
    %v376 = vld [vmem:[#allocation5 + $0x3c0] sm:$0xff]
    %v377 = vld [vmem:[#allocation5 + $0x3c8] sm:$0xff]
    %v378 = vld [vmem:[#allocation5 + $0x3d0] sm:$0xff]
    %v379 = vld [vmem:[#allocation5 + $0x3d8] sm:$0xff]
    %v380 = vld [vmem:[#allocation5 + $0x3e0] sm:$0xff]
    %v381 = vld [vmem:[#allocation5 + $0x3e8] sm:$0xff]
    %v382 = vld [vmem:[#allocation5 + $0x3f0] sm:$0xff]
    %v383 = vld [vmem:[#allocation5 + $0x3f8] sm:$0xff]
    %v384 = vld [vmem:[#allocation5 + $0x400] sm:$0xff]
    %v385 = vld [vmem:[#allocation5 + $0x408] sm:$0xff]
    %v386 = vld [vmem:[#allocation5 + $0x410] sm:$0xff]
    %v387 = vld [vmem:[#allocation5 + $0x418] sm:$0xff]
    %v388 = vld [vmem:[#allocation5 + $0x420] sm:$0xff]
    %v389 = vld [vmem:[#allocation5 + $0x428] sm:$0xff]
    %v390 = vld [vmem:[#allocation5 + $0x430] sm:$0xff]
    %v391 = vld [vmem:[#allocation5 + $0x438] sm:$0xff]
    %v392 = vld [vmem:[#allocation5 + $0x440] sm:$0xff]
    %v393 = vld [vmem:[#allocation5 + $0x448] sm:$0xff]
    %v394 = vld [vmem:[#allocation5 + $0x450] sm:$0xff]
    %v395 = vld [vmem:[#allocation5 + $0x458] sm:$0xff]
    %v396 = vld [vmem:[#allocation5 + $0x460] sm:$0xff]
    %v397 = vld [vmem:[#allocation5 + $0x468] sm:$0xff]
    %v398 = vld [vmem:[#allocation5 + $0x470] sm:$0xff]
    %v399 = vld [vmem:[#allocation5 + $0x478] sm:$0xff]
    %v400 = vld [vmem:[#allocation5 + $0x480] sm:$0xff]
    %v401 = vld [vmem:[#allocation5 + $0x488] sm:$0xff]
    %v402 = vld [vmem:[#allocation5 + $0x490] sm:$0xff]
    %v403 = vld [vmem:[#allocation5 + $0x498] sm:$0xff]
    %v404 = vld [vmem:[#allocation5 + $0x4a0] sm:$0xff]
    %v405 = vld [vmem:[#allocation5 + $0x4a8] sm:$0xff]
    %v406 = vld [vmem:[#allocation5 + $0x4b0] sm:$0xff]
    %v407 = vld [vmem:[#allocation5 + $0x4b8] sm:$0xff]
    %v408 = vld [vmem:[#allocation5 + $0x4c0] sm:$0xff]
    %v409 = vld [vmem:[#allocation5 + $0x4c8] sm:$0xff]
    %v410 = vld [vmem:[#allocation5 + $0x4d0] sm:$0xff]
    %v411 = vld [vmem:[#allocation5 + $0x4d8] sm:$0xff]
    %v412 = vld [vmem:[#allocation5 + $0x4e0] sm:$0xff]
    %v413 = vld [vmem:[#allocation5 + $0x4e8] sm:$0xff]
    %v414 = vld [vmem:[#allocation5 + $0x4f0] sm:$0xff]
    %v415 = vld [vmem:[#allocation5 + $0x4f8] sm:$0xff]
    %v416 = vld [vmem:[#allocation5 + $0x500] sm:$0xff]
    %v417 = vld [vmem:[#allocation5 + $0x508] sm:$0xff]
    %v418 = vld [vmem:[#allocation5 + $0x510] sm:$0xff]
    %v419 = vld [vmem:[#allocation5 + $0x518] sm:$0xff]
    %v420 = vld [vmem:[#allocation5 + $0x520] sm:$0xff]
    %v421 = vld [vmem:[#allocation5 + $0x528] sm:$0xff]
    %v422 = vld [vmem:[#allocation5 + $0x530] sm:$0xff]
    %v423 = vld [vmem:[#allocation5 + $0x538] sm:$0xff]
    %v424 = vld [vmem:[#allocation5 + $0x540] sm:$0xff]
    %v425 = vld [vmem:[#allocation5 + $0x548] sm:$0xff]
    %v426 = vld [vmem:[#allocation5 + $0x550] sm:$0xff]
    %v427 = vld [vmem:[#allocation5 + $0x558] sm:$0xff]
    %v428 = vld [vmem:[#allocation5 + $0x560] sm:$0xff]
    %v429 = vld [vmem:[#allocation5 + $0x568] sm:$0xff]
    %v430 = vld [vmem:[#allocation5 + $0x570] sm:$0xff]
    %v431 = vld [vmem:[#allocation5 + $0x578] sm:$0xff]
    %v432 = vld [vmem:[#allocation5 + $0x580] sm:$0xff]
    %v433 = vld [vmem:[#allocation5 + $0x588] sm:$0xff]
    %v434 = vld [vmem:[#allocation5 + $0x590] sm:$0xff]
    %v435 = vld [vmem:[#allocation5 + $0x598] sm:$0xff]
    %v436 = vld [vmem:[#allocation5 + $0x5a0] sm:$0xff]
    %v437 = vld [vmem:[#allocation5 + $0x5a8] sm:$0xff]
    %v438 = vld [vmem:[#allocation5 + $0x5b0] sm:$0xff]
    %v439 = vld [vmem:[#allocation5 + $0x5b8] sm:$0xff]
    %v440 = vld [vmem:[#allocation5 + $0x5c0] sm:$0xff]
    %v441 = vld [vmem:[#allocation5 + $0x5c8] sm:$0xff]
    %v442 = vld [vmem:[#allocation5 + $0x5d0] sm:$0xff]
    %v443 = vld [vmem:[#allocation5 + $0x5d8] sm:$0xff]
    %v444 = vld [vmem:[#allocation5 + $0x5e0] sm:$0xff]
    %v445 = vld [vmem:[#allocation5 + $0x5e8] sm:$0xff]
    %v446 = vld [vmem:[#allocation5 + $0x5f0] sm:$0xff]
    %v447 = vld [vmem:[#allocation5 + $0x5f8] sm:$0xff]
    %v448 = vld [vmem:[#allocation5 + $0x600] sm:$0xff]
    %v449 = vld [vmem:[#allocation5 + $0x608] sm:$0xff]
    %v450 = vld [vmem:[#allocation5 + $0x610] sm:$0xff]
    %v451 = vld [vmem:[#allocation5 + $0x618] sm:$0xff]
    %v452 = vld [vmem:[#allocation5 + $0x620] sm:$0xff]
    %v453 = vld [vmem:[#allocation5 + $0x628] sm:$0xff]
    %v454 = vld [vmem:[#allocation5 + $0x630] sm:$0xff]
    %v455 = vld [vmem:[#allocation5 + $0x638] sm:$0xff]
    %v456 = vld [vmem:[#allocation5 + $0x640] sm:$0xff]
    %v457 = vld [vmem:[#allocation5 + $0x648] sm:$0xff]
    %v458 = vld [vmem:[#allocation5 + $0x650] sm:$0xff]
    %v459 = vld [vmem:[#allocation5 + $0x658] sm:$0xff]
    %v460 = vld [vmem:[#allocation5 + $0x660] sm:$0xff]
    %v461 = vld [vmem:[#allocation5 + $0x668] sm:$0xff]
    %v462 = vld [vmem:[#allocation5 + $0x670] sm:$0xff]
    %v463 = vld [vmem:[#allocation5 + $0x678] sm:$0xff]
    %v464 = vld [vmem:[#allocation5 + $0x680] sm:$0xff]
    %v465 = vld [vmem:[#allocation5 + $0x688] sm:$0xff]
    %v466 = vld [vmem:[#allocation5 + $0x690] sm:$0xff]
    %v467 = vld [vmem:[#allocation5 + $0x698] sm:$0xff]
    %v468 = vld [vmem:[#allocation5 + $0x6a0] sm:$0xff]
    %v469 = vld [vmem:[#allocation5 + $0x6a8] sm:$0xff]
    %v470 = vld [vmem:[#allocation5 + $0x6b0] sm:$0xff]
    %v471 = vld [vmem:[#allocation5 + $0x6b8] sm:$0xff]
    %v472 = vld [vmem:[#allocation5 + $0x6c0] sm:$0xff]
    %v473 = vld [vmem:[#allocation5 + $0x6c8] sm:$0xff]
    %v474 = vld [vmem:[#allocation5 + $0x6d0] sm:$0xff]
    %v475 = vld [vmem:[#allocation5 + $0x6d8] sm:$0xff]
    %v476 = vld [vmem:[#allocation5 + $0x6e0] sm:$0xff]
    %v477 = vld [vmem:[#allocation5 + $0x6e8] sm:$0xff]
    %v478 = vld [vmem:[#allocation5 + $0x6f0] sm:$0xff]
    %v479 = vld [vmem:[#allocation5 + $0x6f8] sm:$0xff]
    %v480 = vld [vmem:[#allocation5 + $0x700] sm:$0xff]
    %v481 = vld [vmem:[#allocation5 + $0x708] sm:$0xff]
    %v482 = vld [vmem:[#allocation5 + $0x710] sm:$0xff]
    %v483 = vld [vmem:[#allocation5 + $0x718] sm:$0xff]
    %v484 = vld [vmem:[#allocation5 + $0x720] sm:$0xff]
    %v485 = vld [vmem:[#allocation5 + $0x728] sm:$0xff]
    %v486 = vld [vmem:[#allocation5 + $0x730] sm:$0xff]
    %v487 = vld [vmem:[#allocation5 + $0x738] sm:$0xff]
    %v488 = vld [vmem:[#allocation5 + $0x740] sm:$0xff]
    %v489 = vld [vmem:[#allocation5 + $0x748] sm:$0xff]
    %v490 = vld [vmem:[#allocation5 + $0x750] sm:$0xff]
    %v491 = vld [vmem:[#allocation5 + $0x758] sm:$0xff]
    %v492 = vld [vmem:[#allocation5 + $0x760] sm:$0xff]
    %v493 = vld [vmem:[#allocation5 + $0x768] sm:$0xff]
    %v494 = vld [vmem:[#allocation5 + $0x770] sm:$0xff]
    %v495 = vld [vmem:[#allocation5 + $0x778] sm:$0xff]
    %v496 = vld [vmem:[#allocation5 + $0x780] sm:$0xff]
    %v497 = vld [vmem:[#allocation5 + $0x788] sm:$0xff]
    %v498 = vld [vmem:[#allocation5 + $0x790] sm:$0xff]
    %v499 = vld [vmem:[#allocation5 + $0x798] sm:$0xff]
    %v500 = vld [vmem:[#allocation5 + $0x7a0] sm:$0xff]
    %v501 = vld [vmem:[#allocation5 + $0x7a8] sm:$0xff]
    %v502 = vld [vmem:[#allocation5 + $0x7b0] sm:$0xff]
    %v503 = vld [vmem:[#allocation5 + $0x7b8] sm:$0xff]
    %v504 = vld [vmem:[#allocation5 + $0x7c0] sm:$0xff]
    %v505 = vld [vmem:[#allocation5 + $0x7c8] sm:$0xff]
    %v506 = vld [vmem:[#allocation5 + $0x7d0] sm:$0xff]
    %v507 = vld [vmem:[#allocation5 + $0x7d8] sm:$0xff]
    %v508 = vld [vmem:[#allocation5 + $0x7e0] sm:$0xff]
    %v509 = vld [vmem:[#allocation5 + $0x7e8] sm:$0xff]
    %v510 = vld [vmem:[#allocation5 + $0x7f0] sm:$0xff]
    %v511 = vld [vmem:[#allocation5 + $0x7f8] sm:$0xff]
    %v512 = vld [vmem:[%s2] sm:$0x3]
    %v514 = vperm.slane %v512, 0
    %v515 = vperm.slane %v512, 1
    %v718 = vunpack.c.l.b16 %v56
    %v719 = vunpack.c.h.b16 %v56
    %v720 = vunpack.c.l.b16 %v57
    %v721 = vunpack.c.h.b16 %v57
    %v722 = vunpack.c.l.b16 %v58
    %v723 = vunpack.c.h.b16 %v58
    %v724 = vunpack.c.l.b16 %v59
    %v725 = vunpack.c.h.b16 %v59
    %v726 = vunpack.c.l.b16 %v60
    %v727 = vunpack.c.h.b16 %v60
    %v728 = vunpack.c.l.b16 %v61
    %v729 = vunpack.c.h.b16 %v61
    %v730 = vunpack.c.l.b16 %v62
    %v731 = vunpack.c.h.b16 %v62
    %v732 = vunpack.c.l.b16 %v63
    %v733 = vunpack.c.h.b16 %v63
    %v734 = vunpack.c.l.b16 %v64
    %v735 = vunpack.c.h.b16 %v64
    %v736 = vunpack.c.l.b16 %v65
    %v737 = vunpack.c.h.b16 %v65
    %v738 = vunpack.c.l.b16 %v66
    %v739 = vunpack.c.h.b16 %v66
    %v740 = vunpack.c.l.b16 %v67
    %v741 = vunpack.c.h.b16 %v67
    %v742 = vunpack.c.l.b16 %v68
    %v743 = vunpack.c.h.b16 %v68
    %v744 = vunpack.c.l.b16 %v69
    %v745 = vunpack.c.h.b16 %v69
    %v746 = vunpack.c.l.b16 %v70
    %v747 = vunpack.c.h.b16 %v70
    %v748 = vunpack.c.l.b16 %v71
    %v749 = vunpack.c.h.b16 %v71
    %v750 = vunpack.c.l.b16 %v72
    %v751 = vunpack.c.h.b16 %v72
    %v752 = vunpack.c.l.b16 %v73
    %v753 = vunpack.c.h.b16 %v73
    %v754 = vunpack.c.l.b16 %v74
    %v755 = vunpack.c.h.b16 %v74
    %v756 = vunpack.c.l.b16 %v75
    %v757 = vunpack.c.h.b16 %v75
    %v758 = vunpack.c.l.b16 %v76
    %v759 = vunpack.c.h.b16 %v76
    %v760 = vunpack.c.l.b16 %v77
    %v761 = vunpack.c.h.b16 %v77
    %v762 = vunpack.c.l.b16 %v78
    %v763 = vunpack.c.h.b16 %v78
    %v764 = vunpack.c.l.b16 %v79
    %v765 = vunpack.c.h.b16 %v79
    %v766 = vunpack.c.l.b16 %v80
    %v767 = vunpack.c.h.b16 %v80
    %v768 = vunpack.c.l.b16 %v81
    %v769 = vunpack.c.h.b16 %v81
    %v770 = vunpack.c.l.b16 %v82
    %v771 = vunpack.c.h.b16 %v82
    %v772 = vunpack.c.l.b16 %v83
    %v773 = vunpack.c.h.b16 %v83
    %v774 = vunpack.c.l.b16 %v84
    %v775 = vunpack.c.h.b16 %v84
    %v776 = vunpack.c.l.b16 %v85
    %v777 = vunpack.c.h.b16 %v85
    %v778 = vunpack.c.l.b16 %v86
    %v779 = vunpack.c.h.b16 %v86
    %v780 = vunpack.c.l.b16 %v87
    %v781 = vunpack.c.h.b16 %v87
    %v782 = vunpack.c.l.b16 %v88
    %v783 = vunpack.c.h.b16 %v88
    %v784 = vunpack.c.l.b16 %v89
    %v785 = vunpack.c.h.b16 %v89
    %v786 = vunpack.c.l.b16 %v90
    %v787 = vunpack.c.h.b16 %v90
    %v788 = vunpack.c.l.b16 %v91
    %v789 = vunpack.c.h.b16 %v91
    %v790 = vunpack.c.l.b16 %v92
    %v791 = vunpack.c.h.b16 %v92
    %v792 = vunpack.c.l.b16 %v93
    %v793 = vunpack.c.h.b16 %v93
    %v794 = vunpack.c.l.b16 %v94
    %v795 = vunpack.c.h.b16 %v94
    %v796 = vunpack.c.l.b16 %v95
    %v797 = vunpack.c.h.b16 %v95
    %v798 = vunpack.c.l.b16 %v96
    %v799 = vunpack.c.h.b16 %v96
    %v800 = vunpack.c.l.b16 %v97
    %v801 = vunpack.c.h.b16 %v97
    %v802 = vunpack.c.l.b16 %v98
    %v803 = vunpack.c.h.b16 %v98
    %v804 = vunpack.c.l.b16 %v99
    %v805 = vunpack.c.h.b16 %v99
    %v806 = vunpack.c.l.b16 %v100
    %v807 = vunpack.c.h.b16 %v100
    %v808 = vunpack.c.l.b16 %v101
    %v809 = vunpack.c.h.b16 %v101
    %v810 = vunpack.c.l.b16 %v102
    %v811 = vunpack.c.h.b16 %v102
    %v812 = vunpack.c.l.b16 %v103
    %v813 = vunpack.c.h.b16 %v103
    %v814 = vunpack.c.l.b16 %v104
    %v815 = vunpack.c.h.b16 %v104
    %v816 = vunpack.c.l.b16 %v105
    %v817 = vunpack.c.h.b16 %v105
    %v818 = vunpack.c.l.b16 %v106
    %v819 = vunpack.c.h.b16 %v106
    %v820 = vunpack.c.l.b16 %v107
    %v821 = vunpack.c.h.b16 %v107
    %v822 = vunpack.c.l.b16 %v108
    %v823 = vunpack.c.h.b16 %v108
    %v824 = vunpack.c.l.b16 %v109
    %v825 = vunpack.c.h.b16 %v109
    %v826 = vunpack.c.l.b16 %v110
    %v827 = vunpack.c.h.b16 %v110
    %v828 = vunpack.c.l.b16 %v111
    %v829 = vunpack.c.h.b16 %v111
    %v830 = vunpack.c.l.b16 %v112
    %v831 = vunpack.c.h.b16 %v112
    %v832 = vunpack.c.l.b16 %v113
    %v833 = vunpack.c.h.b16 %v113
    %v834 = vunpack.c.l.b16 %v114
    %v835 = vunpack.c.h.b16 %v114
    %v836 = vunpack.c.l.b16 %v115
    %v837 = vunpack.c.h.b16 %v115
    %v838 = vunpack.c.l.b16 %v116
    %v839 = vunpack.c.h.b16 %v116
    %v840 = vunpack.c.l.b16 %v117
    %v841 = vunpack.c.h.b16 %v117
    %v842 = vunpack.c.l.b16 %v118
    %v843 = vunpack.c.h.b16 %v118
    %v844 = vunpack.c.l.b16 %v119
    %v845 = vunpack.c.h.b16 %v119
    %v846 = vunpack.c.l.b16 %v120
    %v847 = vunpack.c.h.b16 %v120
    %v848 = vunpack.c.l.b16 %v121
    %v849 = vunpack.c.h.b16 %v121
    %v850 = vunpack.c.l.b16 %v122
    %v851 = vunpack.c.h.b16 %v122
    %v852 = vunpack.c.l.b16 %v123
    %v853 = vunpack.c.h.b16 %v123
    %v854 = vunpack.c.l.b16 %v124
    %v855 = vunpack.c.h.b16 %v124
    %v856 = vunpack.c.l.b16 %v125
    %v857 = vunpack.c.h.b16 %v125
    %v858 = vunpack.c.l.b16 %v126
    %v859 = vunpack.c.h.b16 %v126
    %v860 = vunpack.c.l.b16 %v127
    %v861 = vunpack.c.h.b16 %v127
    %v862 = vunpack.c.l.b16 %v128
    %v863 = vunpack.c.h.b16 %v128
    %v864 = vunpack.c.l.b16 %v129
    %v865 = vunpack.c.h.b16 %v129
    %v866 = vunpack.c.l.b16 %v130
    %v867 = vunpack.c.h.b16 %v130
    %v868 = vunpack.c.l.b16 %v131
    %v869 = vunpack.c.h.b16 %v131
    %v870 = vunpack.c.l.b16 %v132
    %v871 = vunpack.c.h.b16 %v132
    %v872 = vunpack.c.l.b16 %v133
    %v873 = vunpack.c.h.b16 %v133
    %v874 = vunpack.c.l.b16 %v134
    %v875 = vunpack.c.h.b16 %v134
    %v876 = vunpack.c.l.b16 %v135
    %v877 = vunpack.c.h.b16 %v135
    %v878 = vunpack.c.l.b16 %v136
    %v879 = vunpack.c.h.b16 %v136
    %v880 = vunpack.c.l.b16 %v137
    %v881 = vunpack.c.h.b16 %v137
    %v882 = vunpack.c.l.b16 %v138
    %v883 = vunpack.c.h.b16 %v138
    %v884 = vunpack.c.l.b16 %v139
    %v885 = vunpack.c.h.b16 %v139
    %v886 = vunpack.c.l.b16 %v140
    %v887 = vunpack.c.h.b16 %v140
    %v888 = vunpack.c.l.b16 %v141
    %v889 = vunpack.c.h.b16 %v141
    %v890 = vunpack.c.l.b16 %v142
    %v891 = vunpack.c.h.b16 %v142
    %v892 = vunpack.c.l.b16 %v143
    %v893 = vunpack.c.h.b16 %v143
    %v894 = vunpack.c.l.b16 %v144
    %v895 = vunpack.c.h.b16 %v144
    %v896 = vunpack.c.l.b16 %v145
    %v897 = vunpack.c.h.b16 %v145
    %v898 = vunpack.c.l.b16 %v146
    %v899 = vunpack.c.h.b16 %v146
    %v900 = vunpack.c.l.b16 %v147
    %v901 = vunpack.c.h.b16 %v147
    %v902 = vunpack.c.l.b16 %v148
    %v903 = vunpack.c.h.b16 %v148
    %v904 = vunpack.c.l.b16 %v149
    %v905 = vunpack.c.h.b16 %v149
    %v906 = vunpack.c.l.b16 %v150
    %v907 = vunpack.c.h.b16 %v150
    %v908 = vunpack.c.l.b16 %v151
    %v909 = vunpack.c.h.b16 %v151
    %v910 = vunpack.c.l.b16 %v152
    %v911 = vunpack.c.h.b16 %v152
    %v912 = vunpack.c.l.b16 %v153
    %v913 = vunpack.c.h.b16 %v153
    %v914 = vunpack.c.l.b16 %v154
    %v915 = vunpack.c.h.b16 %v154
    %v916 = vunpack.c.l.b16 %v155
    %v917 = vunpack.c.h.b16 %v155
    %v918 = vunpack.c.l.b16 %v156
    %v919 = vunpack.c.h.b16 %v156
    %v920 = vunpack.c.l.b16 %v157
    %v921 = vunpack.c.h.b16 %v157
    %v922 = vunpack.c.l.b16 %v158
    %v923 = vunpack.c.h.b16 %v158
    %v924 = vunpack.c.l.b16 %v159
    %v925 = vunpack.c.h.b16 %v159
    %v926 = vunpack.c.l.b16 %v160
    %v927 = vunpack.c.h.b16 %v160
    %v928 = vunpack.c.l.b16 %v161
    %v929 = vunpack.c.h.b16 %v161
    %v930 = vunpack.c.l.b16 %v162
    %v931 = vunpack.c.h.b16 %v162
    %v932 = vunpack.c.l.b16 %v163
    %v933 = vunpack.c.h.b16 %v163
    %v934 = vunpack.c.l.b16 %v164
    %v935 = vunpack.c.h.b16 %v164
    %v936 = vunpack.c.l.b16 %v165
    %v937 = vunpack.c.h.b16 %v165
    %v938 = vunpack.c.l.b16 %v166
    %v939 = vunpack.c.h.b16 %v166
    %v940 = vunpack.c.l.b16 %v167
    %v941 = vunpack.c.h.b16 %v167
    %v942 = vunpack.c.l.b16 %v168
    %v943 = vunpack.c.h.b16 %v168
    %v944 = vunpack.c.l.b16 %v169
    %v945 = vunpack.c.h.b16 %v169
    %v946 = vunpack.c.l.b16 %v170
    %v947 = vunpack.c.h.b16 %v170
    %v948 = vunpack.c.l.b16 %v171
    %v949 = vunpack.c.h.b16 %v171
    %v950 = vunpack.c.l.b16 %v172
    %v951 = vunpack.c.h.b16 %v172
    %v952 = vunpack.c.l.b16 %v173
    %v953 = vunpack.c.h.b16 %v173
    %v954 = vunpack.c.l.b16 %v174
    %v955 = vunpack.c.h.b16 %v174
    %v956 = vunpack.c.l.b16 %v175
    %v957 = vunpack.c.h.b16 %v175
    %v958 = vunpack.c.l.b16 %v176
    %v959 = vunpack.c.h.b16 %v176
    %v960 = vunpack.c.l.b16 %v177
    %v961 = vunpack.c.h.b16 %v177
    %v962 = vunpack.c.l.b16 %v178
    %v963 = vunpack.c.h.b16 %v178
    %v964 = vunpack.c.l.b16 %v179
    %v965 = vunpack.c.h.b16 %v179
    %v966 = vunpack.c.l.b16 %v180
    %v967 = vunpack.c.h.b16 %v180
    %v968 = vunpack.c.l.b16 %v181
    %v969 = vunpack.c.h.b16 %v181
    %v970 = vunpack.c.l.b16 %v182
    %v971 = vunpack.c.h.b16 %v182
    %v972 = vunpack.c.l.b16 %v183
    %v973 = vunpack.c.h.b16 %v183
    %v974 = vunpack.c.l.b16 %v184
    %v975 = vunpack.c.h.b16 %v184
    %v976 = vunpack.c.l.b16 %v185
    %v977 = vunpack.c.h.b16 %v185
    %v978 = vunpack.c.l.b16 %v186
    %v979 = vunpack.c.h.b16 %v186
    %v980 = vunpack.c.l.b16 %v187
    %v981 = vunpack.c.h.b16 %v187
    %v982 = vunpack.c.l.b16 %v188
    %v983 = vunpack.c.h.b16 %v188
    %v984 = vunpack.c.l.b16 %v189
    %v985 = vunpack.c.h.b16 %v189
    %v986 = vunpack.c.l.b16 %v190
    %v987 = vunpack.c.h.b16 %v190
    %v988 = vunpack.c.l.b16 %v191
    %v989 = vunpack.c.h.b16 %v191
    %v990 = vunpack.c.l.b16 %v192
    %v991 = vunpack.c.h.b16 %v192
    %v992 = vunpack.c.l.b16 %v193
    %v993 = vunpack.c.h.b16 %v193
    %v994 = vunpack.c.l.b16 %v194
    %v995 = vunpack.c.h.b16 %v194
    %v996 = vunpack.c.l.b16 %v195
    %v997 = vunpack.c.h.b16 %v195
    %v998 = vunpack.c.l.b16 %v196
    %v999 = vunpack.c.h.b16 %v196
    %v1000 = vunpack.c.l.b16 %v197
    %v1001 = vunpack.c.h.b16 %v197
    %v1002 = vunpack.c.l.b16 %v198
    %v1003 = vunpack.c.h.b16 %v198
    %v1004 = vunpack.c.l.b16 %v199
    %v1005 = vunpack.c.h.b16 %v199
    %v1006 = vunpack.c.l.b16 %v200
    %v1007 = vunpack.c.h.b16 %v200
    %v1008 = vunpack.c.l.b16 %v201
    %v1009 = vunpack.c.h.b16 %v201
    %v1010 = vunpack.c.l.b16 %v202
    %v1011 = vunpack.c.h.b16 %v202
    %v1012 = vunpack.c.l.b16 %v203
    %v1013 = vunpack.c.h.b16 %v203
    %v1014 = vunpack.c.l.b16 %v204
    %v1015 = vunpack.c.h.b16 %v204
    %v1016 = vunpack.c.l.b16 %v205
    %v1017 = vunpack.c.h.b16 %v205
    %v1018 = vunpack.c.l.b16 %v206
    %v1019 = vunpack.c.h.b16 %v206
    %v1020 = vunpack.c.l.b16 %v207
    %v1021 = vunpack.c.h.b16 %v207
    %v1022 = vunpack.c.l.b16 %v208
    %v1023 = vunpack.c.h.b16 %v208
    %v1024 = vunpack.c.l.b16 %v209
    %v1025 = vunpack.c.h.b16 %v209
    %v1026 = vunpack.c.l.b16 %v210
    %v1027 = vunpack.c.h.b16 %v210
    %v1028 = vunpack.c.l.b16 %v211
    %v1029 = vunpack.c.h.b16 %v211
    %v1030 = vunpack.c.l.b16 %v212
    %v1031 = vunpack.c.h.b16 %v212
    %v1032 = vunpack.c.l.b16 %v213
    %v1033 = vunpack.c.h.b16 %v213
    %v1034 = vunpack.c.l.b16 %v214
    %v1035 = vunpack.c.h.b16 %v214
    %v1036 = vunpack.c.l.b16 %v215
    %v1037 = vunpack.c.h.b16 %v215
    %v1038 = vunpack.c.l.b16 %v216
    %v1039 = vunpack.c.h.b16 %v216
    %v1040 = vunpack.c.l.b16 %v217
    %v1041 = vunpack.c.h.b16 %v217
    %v1042 = vunpack.c.l.b16 %v218
    %v1043 = vunpack.c.h.b16 %v218
    %v1044 = vunpack.c.l.b16 %v219
    %v1045 = vunpack.c.h.b16 %v219
    %v1046 = vunpack.c.l.b16 %v220
    %v1047 = vunpack.c.h.b16 %v220
    %v1048 = vunpack.c.l.b16 %v221
    %v1049 = vunpack.c.h.b16 %v221
    %v1050 = vunpack.c.l.b16 %v222
    %v1051 = vunpack.c.h.b16 %v222
    %v1052 = vunpack.c.l.b16 %v223
    %v1053 = vunpack.c.h.b16 %v223
    %v1054 = vunpack.c.l.b16 %v224
    %v1055 = vunpack.c.h.b16 %v224
    %v1056 = vunpack.c.l.b16 %v225
    %v1057 = vunpack.c.h.b16 %v225
    %v1058 = vunpack.c.l.b16 %v226
    %v1059 = vunpack.c.h.b16 %v226
    %v1060 = vunpack.c.l.b16 %v227
    %v1061 = vunpack.c.h.b16 %v227
    %v1062 = vunpack.c.l.b16 %v228
    %v1063 = vunpack.c.h.b16 %v228
    %v1064 = vunpack.c.l.b16 %v229
    %v1065 = vunpack.c.h.b16 %v229
    %v1066 = vunpack.c.l.b16 %v230
    %v1067 = vunpack.c.h.b16 %v230
    %v1068 = vunpack.c.l.b16 %v231
    %v1069 = vunpack.c.h.b16 %v231
    %v1070 = vunpack.c.l.b16 %v232
    %v1071 = vunpack.c.h.b16 %v232
    %v1072 = vunpack.c.l.b16 %v233
    %v1073 = vunpack.c.h.b16 %v233
    %v1074 = vunpack.c.l.b16 %v234
    %v1075 = vunpack.c.h.b16 %v234
    %v1076 = vunpack.c.l.b16 %v235
    %v1077 = vunpack.c.h.b16 %v235
    %v1078 = vunpack.c.l.b16 %v236
    %v1079 = vunpack.c.h.b16 %v236
    %v1080 = vunpack.c.l.b16 %v237
    %v1081 = vunpack.c.h.b16 %v237
    %v1082 = vunpack.c.l.b16 %v238
    %v1083 = vunpack.c.h.b16 %v238
    %v1084 = vunpack.c.l.b16 %v239
    %v1085 = vunpack.c.h.b16 %v239
    %v1086 = vunpack.c.l.b16 %v240
    %v1087 = vunpack.c.h.b16 %v240
    %v1088 = vunpack.c.l.b16 %v241
    %v1089 = vunpack.c.h.b16 %v241
    %v1090 = vunpack.c.l.b16 %v242
    %v1091 = vunpack.c.h.b16 %v242
    %v1092 = vunpack.c.l.b16 %v243
    %v1093 = vunpack.c.h.b16 %v243
    %v1094 = vunpack.c.l.b16 %v244
    %v1095 = vunpack.c.h.b16 %v244
    %v1096 = vunpack.c.l.b16 %v245
    %v1097 = vunpack.c.h.b16 %v245
    %v1098 = vunpack.c.l.b16 %v246
    %v1099 = vunpack.c.h.b16 %v246
    %v1100 = vunpack.c.l.b16 %v247
    %v1101 = vunpack.c.h.b16 %v247
    %v1102 = vunpack.c.l.b16 %v248
    %v1103 = vunpack.c.h.b16 %v248
    %v1104 = vunpack.c.l.b16 %v249
    %v1105 = vunpack.c.h.b16 %v249
    %v1106 = vunpack.c.l.b16 %v250
    %v1107 = vunpack.c.h.b16 %v250
    %v1108 = vunpack.c.l.b16 %v251
    %v1109 = vunpack.c.h.b16 %v251
    %v1110 = vunpack.c.l.b16 %v252
    %v1111 = vunpack.c.h.b16 %v252
    %v1112 = vunpack.c.l.b16 %v253
    %v1113 = vunpack.c.h.b16 %v253
    %v1114 = vunpack.c.l.b16 %v254
    %v1115 = vunpack.c.h.b16 %v254
    %v1116 = vunpack.c.l.b16 %v255
    %v1117 = vunpack.c.h.b16 %v255
    %v1118 = vpack.c.b16 %v734, %v718
    %v1119 = vpack.c.b16 %v735, %v719
    %v1120 = vpack.c.b16 %v736, %v720
    %v1121 = vpack.c.b16 %v737, %v721
    %v1122 = vpack.c.b16 %v738, %v722
    %v1123 = vpack.c.b16 %v739, %v723
    %v1124 = vpack.c.b16 %v740, %v724
    %v1125 = vpack.c.b16 %v741, %v725
    %v1126 = vpack.c.b16 %v742, %v726
    %v1127 = vpack.c.b16 %v743, %v727
    %v1128 = vpack.c.b16 %v744, %v728
    %v1129 = vpack.c.b16 %v745, %v729
    %v1130 = vpack.c.b16 %v746, %v730
    %v1131 = vpack.c.b16 %v747, %v731
    %v1132 = vpack.c.b16 %v748, %v732
    %v1133 = vpack.c.b16 %v749, %v733
    %v1134 = vpack.c.b16 %v766, %v750
    %v1135 = vpack.c.b16 %v767, %v751
    %v1136 = vpack.c.b16 %v768, %v752
    %v1137 = vpack.c.b16 %v769, %v753
    %v1138 = vpack.c.b16 %v770, %v754
    %v1139 = vpack.c.b16 %v771, %v755
    %v1140 = vpack.c.b16 %v772, %v756
    %v1141 = vpack.c.b16 %v773, %v757
    %v1142 = vpack.c.b16 %v774, %v758
    %v1143 = vpack.c.b16 %v775, %v759
    %v1144 = vpack.c.b16 %v776, %v760
    %v1145 = vpack.c.b16 %v777, %v761
    %v1146 = vpack.c.b16 %v778, %v762
    %v1147 = vpack.c.b16 %v779, %v763
    %v1148 = vpack.c.b16 %v780, %v764
    %v1149 = vpack.c.b16 %v781, %v765
    %v1150 = vpack.c.b16 %v798, %v782
    %v1151 = vpack.c.b16 %v799, %v783
    %v1152 = vpack.c.b16 %v800, %v784
    %v1153 = vpack.c.b16 %v801, %v785
    %v1154 = vpack.c.b16 %v802, %v786
    %v1155 = vpack.c.b16 %v803, %v787
    %v1156 = vpack.c.b16 %v804, %v788
    %v1157 = vpack.c.b16 %v805, %v789
    %v1158 = vpack.c.b16 %v806, %v790
    %v1159 = vpack.c.b16 %v807, %v791
    %v1160 = vpack.c.b16 %v808, %v792
    %v1161 = vpack.c.b16 %v809, %v793
    %v1162 = vpack.c.b16 %v810, %v794
    %v1163 = vpack.c.b16 %v811, %v795
    %v1164 = vpack.c.b16 %v812, %v796
    %v1165 = vpack.c.b16 %v813, %v797
    %v1166 = vpack.c.b16 %v830, %v814
    %v1167 = vpack.c.b16 %v831, %v815
    %v1168 = vpack.c.b16 %v832, %v816
    %v1169 = vpack.c.b16 %v833, %v817
    %v1170 = vpack.c.b16 %v834, %v818
    %v1171 = vpack.c.b16 %v835, %v819
    %v1172 = vpack.c.b16 %v836, %v820
    %v1173 = vpack.c.b16 %v837, %v821
    %v1174 = vpack.c.b16 %v838, %v822
    %v1175 = vpack.c.b16 %v839, %v823
    %v1176 = vpack.c.b16 %v840, %v824
    %v1177 = vpack.c.b16 %v841, %v825
    %v1178 = vpack.c.b16 %v842, %v826
    %v1179 = vpack.c.b16 %v843, %v827
    %v1180 = vpack.c.b16 %v844, %v828
    %v1181 = vpack.c.b16 %v845, %v829
    %v1182 = vpack.c.b16 %v862, %v846
    %v1183 = vpack.c.b16 %v863, %v847
    %v1184 = vpack.c.b16 %v864, %v848
    %v1185 = vpack.c.b16 %v865, %v849
    %v1186 = vpack.c.b16 %v866, %v850
    %v1187 = vpack.c.b16 %v867, %v851
    %v1188 = vpack.c.b16 %v868, %v852
    %v1189 = vpack.c.b16 %v869, %v853
    %v1190 = vpack.c.b16 %v870, %v854
    %v1191 = vpack.c.b16 %v871, %v855
    %v1192 = vpack.c.b16 %v872, %v856
    %v1193 = vpack.c.b16 %v873, %v857
    %v1194 = vpack.c.b16 %v874, %v858
    %v1195 = vpack.c.b16 %v875, %v859
    %v1196 = vpack.c.b16 %v876, %v860
    %v1197 = vpack.c.b16 %v877, %v861
    %v1198 = vpack.c.b16 %v894, %v878
    %v1199 = vpack.c.b16 %v895, %v879
    %v1200 = vpack.c.b16 %v896, %v880
    %v1201 = vpack.c.b16 %v897, %v881
    %v1202 = vpack.c.b16 %v898, %v882
    %v1203 = vpack.c.b16 %v899, %v883
    %v1204 = vpack.c.b16 %v900, %v884
    %v1205 = vpack.c.b16 %v901, %v885
    %v1206 = vpack.c.b16 %v902, %v886
    %v1207 = vpack.c.b16 %v903, %v887
    %v1208 = vpack.c.b16 %v904, %v888
    %v1209 = vpack.c.b16 %v905, %v889
    %v1210 = vpack.c.b16 %v906, %v890
    %v1211 = vpack.c.b16 %v907, %v891
    %v1212 = vpack.c.b16 %v908, %v892
    %v1213 = vpack.c.b16 %v909, %v893
    %v1214 = vpack.c.b16 %v926, %v910
    %v1215 = vpack.c.b16 %v927, %v911
    %v1216 = vpack.c.b16 %v928, %v912
    %v1217 = vpack.c.b16 %v929, %v913
    %v1218 = vpack.c.b16 %v930, %v914
    %v1219 = vpack.c.b16 %v931, %v915
    %v1220 = vpack.c.b16 %v932, %v916
    %v1221 = vpack.c.b16 %v933, %v917
    %v1222 = vpack.c.b16 %v934, %v918
    %v1223 = vpack.c.b16 %v935, %v919
    %v1224 = vpack.c.b16 %v936, %v920
    %v1225 = vpack.c.b16 %v937, %v921
    %v1226 = vpack.c.b16 %v938, %v922
    %v1227 = vpack.c.b16 %v939, %v923
    %v1228 = vpack.c.b16 %v940, %v924
    %v1229 = vpack.c.b16 %v941, %v925
    %v1230 = vpack.c.b16 %v958, %v942
    %v1231 = vpack.c.b16 %v959, %v943
    %v1232 = vpack.c.b16 %v960, %v944
    %v1233 = vpack.c.b16 %v961, %v945
    %v1234 = vpack.c.b16 %v962, %v946
    %v1235 = vpack.c.b16 %v963, %v947
    %v1236 = vpack.c.b16 %v964, %v948
    %v1237 = vpack.c.b16 %v965, %v949
    %v1238 = vpack.c.b16 %v966, %v950
    %v1239 = vpack.c.b16 %v967, %v951
    %v1240 = vpack.c.b16 %v968, %v952
    %v1241 = vpack.c.b16 %v969, %v953
    %v1242 = vpack.c.b16 %v970, %v954
    %v1243 = vpack.c.b16 %v971, %v955
    %v1244 = vpack.c.b16 %v972, %v956
    %v1245 = vpack.c.b16 %v973, %v957
    %v1246 = vpack.c.b16 %v990, %v974
    %v1247 = vpack.c.b16 %v991, %v975
    %v1248 = vpack.c.b16 %v992, %v976
    %v1249 = vpack.c.b16 %v993, %v977
    %v1250 = vpack.c.b16 %v994, %v978
    %v1251 = vpack.c.b16 %v995, %v979
    %v1252 = vpack.c.b16 %v996, %v980
    %v1253 = vpack.c.b16 %v997, %v981
    %v1254 = vpack.c.b16 %v998, %v982
    %v1255 = vpack.c.b16 %v999, %v983
    %v1256 = vpack.c.b16 %v1000, %v984
    %v1257 = vpack.c.b16 %v1001, %v985
    %v1258 = vpack.c.b16 %v1002, %v986
    %v1259 = vpack.c.b16 %v1003, %v987
    %v1260 = vpack.c.b16 %v1004, %v988
    %v1261 = vpack.c.b16 %v1005, %v989
    %v1262 = vpack.c.b16 %v1022, %v1006
    %v1263 = vpack.c.b16 %v1023, %v1007
    %v1264 = vpack.c.b16 %v1024, %v1008
    %v1265 = vpack.c.b16 %v1025, %v1009
    %v1266 = vpack.c.b16 %v1026, %v1010
    %v1267 = vpack.c.b16 %v1027, %v1011
    %v1268 = vpack.c.b16 %v1028, %v1012
    %v1269 = vpack.c.b16 %v1029, %v1013
    %v1270 = vpack.c.b16 %v1030, %v1014
    %v1271 = vpack.c.b16 %v1031, %v1015
    %v1272 = vpack.c.b16 %v1032, %v1016
    %v1273 = vpack.c.b16 %v1033, %v1017
    %v1274 = vpack.c.b16 %v1034, %v1018
    %v1275 = vpack.c.b16 %v1035, %v1019
    %v1276 = vpack.c.b16 %v1036, %v1020
    %v1277 = vpack.c.b16 %v1037, %v1021
    %v1278 = vpack.c.b16 %v1054, %v1038
    %v1279 = vpack.c.b16 %v1055, %v1039
    %v1280 = vpack.c.b16 %v1056, %v1040
    %v1281 = vpack.c.b16 %v1057, %v1041
    %v1282 = vpack.c.b16 %v1058, %v1042
    %v1283 = vpack.c.b16 %v1059, %v1043
    %v1284 = vpack.c.b16 %v1060, %v1044
    %v1285 = vpack.c.b16 %v1061, %v1045
    %v1286 = vpack.c.b16 %v1062, %v1046
    %v1287 = vpack.c.b16 %v1063, %v1047
    %v1288 = vpack.c.b16 %v1064, %v1048
    %v1289 = vpack.c.b16 %v1065, %v1049
    %v1290 = vpack.c.b16 %v1066, %v1050
    %v1291 = vpack.c.b16 %v1067, %v1051
    %v1292 = vpack.c.b16 %v1068, %v1052
    %v1293 = vpack.c.b16 %v1069, %v1053
    %v1294 = vpack.c.b16 %v1086, %v1070
    %v1295 = vpack.c.b16 %v1087, %v1071
    %v1296 = vpack.c.b16 %v1088, %v1072
    %v1297 = vpack.c.b16 %v1089, %v1073
    %v1298 = vpack.c.b16 %v1090, %v1074
    %v1299 = vpack.c.b16 %v1091, %v1075
    %v1300 = vpack.c.b16 %v1092, %v1076
    %v1301 = vpack.c.b16 %v1093, %v1077
    %v1302 = vpack.c.b16 %v1094, %v1078
    %v1303 = vpack.c.b16 %v1095, %v1079
    %v1304 = vpack.c.b16 %v1096, %v1080
    %v1305 = vpack.c.b16 %v1097, %v1081
    %v1306 = vpack.c.b16 %v1098, %v1082
    %v1307 = vpack.c.b16 %v1099, %v1083
    %v1308 = vpack.c.b16 %v1100, %v1084
    %v1309 = vpack.c.b16 %v1101, %v1085
    %v1310 = vpack.c.b16 %v1102, %v1102
    %v1311 = vpack.c.b16 %v1103, %v1103
    %v1312 = vpack.c.b16 %v1104, %v1104
    %v1313 = vpack.c.b16 %v1105, %v1105
    %v1314 = vpack.c.b16 %v1106, %v1106
    %v1315 = vpack.c.b16 %v1107, %v1107
    %v1316 = vpack.c.b16 %v1108, %v1108
    %v1317 = vpack.c.b16 %v1109, %v1109
    %v1318 = vpack.c.b16 %v1110, %v1110
    %v1319 = vpack.c.b16 %v1111, %v1111
    %v1320 = vpack.c.b16 %v1112, %v1112
    %v1321 = vpack.c.b16 %v1113, %v1113
    %v1322 = vpack.c.b16 %v1114, %v1114
    %v1323 = vpack.c.b16 %v1115, %v1115
    %v1324 = vpack.c.b16 %v1116, %v1116
    %v1325 = vpack.c.b16 %v1117, %v1117
    %v1790 = vunpack.c.l.b16 %v256
    %v1791 = vunpack.c.h.b16 %v256
    %v1792 = vunpack.c.l.b16 %v257
    %v1793 = vunpack.c.h.b16 %v257
    %v1794 = vunpack.c.l.b16 %v258
    %v1795 = vunpack.c.h.b16 %v258
    %v1796 = vunpack.c.l.b16 %v259
    %v1797 = vunpack.c.h.b16 %v259
    %v1798 = vunpack.c.l.b16 %v260
    %v1799 = vunpack.c.h.b16 %v260
    %v1800 = vunpack.c.l.b16 %v261
    %v1801 = vunpack.c.h.b16 %v261
    %v1802 = vunpack.c.l.b16 %v262
    %v1803 = vunpack.c.h.b16 %v262
    %v1804 = vunpack.c.l.b16 %v263
    %v1805 = vunpack.c.h.b16 %v263
    %v1806 = vunpack.c.l.b16 %v264
    %v1807 = vunpack.c.h.b16 %v264
    %v1808 = vunpack.c.l.b16 %v265
    %v1809 = vunpack.c.h.b16 %v265
    %v1810 = vunpack.c.l.b16 %v266
    %v1811 = vunpack.c.h.b16 %v266
    %v1812 = vunpack.c.l.b16 %v267
    %v1813 = vunpack.c.h.b16 %v267
    %v1814 = vunpack.c.l.b16 %v268
    %v1815 = vunpack.c.h.b16 %v268
    %v1816 = vunpack.c.l.b16 %v269
    %v1817 = vunpack.c.h.b16 %v269
    %v1818 = vunpack.c.l.b16 %v270
    %v1819 = vunpack.c.h.b16 %v270
    %v1820 = vunpack.c.l.b16 %v271
    %v1821 = vunpack.c.h.b16 %v271
    %v1822 = vunpack.c.l.b16 %v272
    %v1823 = vunpack.c.h.b16 %v272
    %v1824 = vunpack.c.l.b16 %v273
    %v1825 = vunpack.c.h.b16 %v273
    %v1826 = vunpack.c.l.b16 %v274
    %v1827 = vunpack.c.h.b16 %v274
    %v1828 = vunpack.c.l.b16 %v275
    %v1829 = vunpack.c.h.b16 %v275
    %v1830 = vunpack.c.l.b16 %v276
    %v1831 = vunpack.c.h.b16 %v276
    %v1832 = vunpack.c.l.b16 %v277
    %v1833 = vunpack.c.h.b16 %v277
    %v1834 = vunpack.c.l.b16 %v278
    %v1835 = vunpack.c.h.b16 %v278
    %v1836 = vunpack.c.l.b16 %v279
    %v1837 = vunpack.c.h.b16 %v279
    %v1838 = vunpack.c.l.b16 %v280
    %v1839 = vunpack.c.h.b16 %v280
    %v1840 = vunpack.c.l.b16 %v281
    %v1841 = vunpack.c.h.b16 %v281
    %v1842 = vunpack.c.l.b16 %v282
    %v1843 = vunpack.c.h.b16 %v282
    %v1844 = vunpack.c.l.b16 %v283
    %v1845 = vunpack.c.h.b16 %v283
    %v1846 = vunpack.c.l.b16 %v284
    %v1847 = vunpack.c.h.b16 %v284
    %v1848 = vunpack.c.l.b16 %v285
    %v1849 = vunpack.c.h.b16 %v285
    %v1850 = vunpack.c.l.b16 %v286
    %v1851 = vunpack.c.h.b16 %v286
    %v1852 = vunpack.c.l.b16 %v287
    %v1853 = vunpack.c.h.b16 %v287
    %v1854 = vunpack.c.l.b16 %v288
    %v1855 = vunpack.c.h.b16 %v288
    %v1856 = vunpack.c.l.b16 %v289
    %v1857 = vunpack.c.h.b16 %v289
    %v1858 = vunpack.c.l.b16 %v290
    %v1859 = vunpack.c.h.b16 %v290
    %v1860 = vunpack.c.l.b16 %v291
    %v1861 = vunpack.c.h.b16 %v291
    %v1862 = vunpack.c.l.b16 %v292
    %v1863 = vunpack.c.h.b16 %v292
    %v1864 = vunpack.c.l.b16 %v293
    %v1865 = vunpack.c.h.b16 %v293
    %v1866 = vunpack.c.l.b16 %v294
    %v1867 = vunpack.c.h.b16 %v294
    %v1868 = vunpack.c.l.b16 %v295
    %v1869 = vunpack.c.h.b16 %v295
    %v1870 = vunpack.c.l.b16 %v296
    %v1871 = vunpack.c.h.b16 %v296
    %v1872 = vunpack.c.l.b16 %v297
    %v1873 = vunpack.c.h.b16 %v297
    %v1874 = vunpack.c.l.b16 %v298
    %v1875 = vunpack.c.h.b16 %v298
    %v1876 = vunpack.c.l.b16 %v299
    %v1877 = vunpack.c.h.b16 %v299
    %v1878 = vunpack.c.l.b16 %v300
    %v1879 = vunpack.c.h.b16 %v300
    %v1880 = vunpack.c.l.b16 %v301
    %v1881 = vunpack.c.h.b16 %v301
    %v1882 = vunpack.c.l.b16 %v302
    %v1883 = vunpack.c.h.b16 %v302
    %v1884 = vunpack.c.l.b16 %v303
    %v1885 = vunpack.c.h.b16 %v303
    %v1886 = vunpack.c.l.b16 %v304
    %v1887 = vunpack.c.h.b16 %v304
    %v1888 = vunpack.c.l.b16 %v305
    %v1889 = vunpack.c.h.b16 %v305
    %v1890 = vunpack.c.l.b16 %v306
    %v1891 = vunpack.c.h.b16 %v306
    %v1892 = vunpack.c.l.b16 %v307
    %v1893 = vunpack.c.h.b16 %v307
    %v1894 = vunpack.c.l.b16 %v308
    %v1895 = vunpack.c.h.b16 %v308
    %v1896 = vunpack.c.l.b16 %v309
    %v1897 = vunpack.c.h.b16 %v309
    %v1898 = vunpack.c.l.b16 %v310
    %v1899 = vunpack.c.h.b16 %v310
    %v1900 = vunpack.c.l.b16 %v311
    %v1901 = vunpack.c.h.b16 %v311
    %v1902 = vunpack.c.l.b16 %v312
    %v1903 = vunpack.c.h.b16 %v312
    %v1904 = vunpack.c.l.b16 %v313
    %v1905 = vunpack.c.h.b16 %v313
    %v1906 = vunpack.c.l.b16 %v314
    %v1907 = vunpack.c.h.b16 %v314
    %v1908 = vunpack.c.l.b16 %v315
    %v1909 = vunpack.c.h.b16 %v315
    %v1910 = vunpack.c.l.b16 %v316
    %v1911 = vunpack.c.h.b16 %v316
    %v1912 = vunpack.c.l.b16 %v317
    %v1913 = vunpack.c.h.b16 %v317
    %v1914 = vunpack.c.l.b16 %v318
    %v1915 = vunpack.c.h.b16 %v318
    %v1916 = vunpack.c.l.b16 %v319
    %v1917 = vunpack.c.h.b16 %v319
    %v1918 = vunpack.c.l.b16 %v320
    %v1919 = vunpack.c.h.b16 %v320
    %v1920 = vunpack.c.l.b16 %v321
    %v1921 = vunpack.c.h.b16 %v321
    %v1922 = vunpack.c.l.b16 %v322
    %v1923 = vunpack.c.h.b16 %v322
    %v1924 = vunpack.c.l.b16 %v323
    %v1925 = vunpack.c.h.b16 %v323
    %v1926 = vunpack.c.l.b16 %v324
    %v1927 = vunpack.c.h.b16 %v324
    %v1928 = vunpack.c.l.b16 %v325
    %v1929 = vunpack.c.h.b16 %v325
    %v1930 = vunpack.c.l.b16 %v326
    %v1931 = vunpack.c.h.b16 %v326
    %v1932 = vunpack.c.l.b16 %v327
    %v1933 = vunpack.c.h.b16 %v327
    %v1934 = vunpack.c.l.b16 %v328
    %v1935 = vunpack.c.h.b16 %v328
    %v1936 = vunpack.c.l.b16 %v329
    %v1937 = vunpack.c.h.b16 %v329
    %v1938 = vunpack.c.l.b16 %v330
    %v1939 = vunpack.c.h.b16 %v330
    %v1940 = vunpack.c.l.b16 %v331
    %v1941 = vunpack.c.h.b16 %v331
    %v1942 = vunpack.c.l.b16 %v332
    %v1943 = vunpack.c.h.b16 %v332
    %v1944 = vunpack.c.l.b16 %v333
    %v1945 = vunpack.c.h.b16 %v333
    %v1946 = vunpack.c.l.b16 %v334
    %v1947 = vunpack.c.h.b16 %v334
    %v1948 = vunpack.c.l.b16 %v335
    %v1949 = vunpack.c.h.b16 %v335
    %v1950 = vunpack.c.l.b16 %v336
    %v1951 = vunpack.c.h.b16 %v336
    %v1952 = vunpack.c.l.b16 %v337
    %v1953 = vunpack.c.h.b16 %v337
    %v1954 = vunpack.c.l.b16 %v338
    %v1955 = vunpack.c.h.b16 %v338
    %v1956 = vunpack.c.l.b16 %v339
    %v1957 = vunpack.c.h.b16 %v339
    %v1958 = vunpack.c.l.b16 %v340
    %v1959 = vunpack.c.h.b16 %v340
    %v1960 = vunpack.c.l.b16 %v341
    %v1961 = vunpack.c.h.b16 %v341
    %v1962 = vunpack.c.l.b16 %v342
    %v1963 = vunpack.c.h.b16 %v342
    %v1964 = vunpack.c.l.b16 %v343
    %v1965 = vunpack.c.h.b16 %v343
    %v1966 = vunpack.c.l.b16 %v344
    %v1967 = vunpack.c.h.b16 %v344
    %v1968 = vunpack.c.l.b16 %v345
    %v1969 = vunpack.c.h.b16 %v345
    %v1970 = vunpack.c.l.b16 %v346
    %v1971 = vunpack.c.h.b16 %v346
    %v1972 = vunpack.c.l.b16 %v347
    %v1973 = vunpack.c.h.b16 %v347
    %v1974 = vunpack.c.l.b16 %v348
    %v1975 = vunpack.c.h.b16 %v348
    %v1976 = vunpack.c.l.b16 %v349
    %v1977 = vunpack.c.h.b16 %v349
    %v1978 = vunpack.c.l.b16 %v350
    %v1979 = vunpack.c.h.b16 %v350
    %v1980 = vunpack.c.l.b16 %v351
    %v1981 = vunpack.c.h.b16 %v351
    %v1982 = vunpack.c.l.b16 %v352
    %v1983 = vunpack.c.h.b16 %v352
    %v1984 = vunpack.c.l.b16 %v353
    %v1985 = vunpack.c.h.b16 %v353
    %v1986 = vunpack.c.l.b16 %v354
    %v1987 = vunpack.c.h.b16 %v354
    %v1988 = vunpack.c.l.b16 %v355
    %v1989 = vunpack.c.h.b16 %v355
    %v1990 = vunpack.c.l.b16 %v356
    %v1991 = vunpack.c.h.b16 %v356
    %v1992 = vunpack.c.l.b16 %v357
    %v1993 = vunpack.c.h.b16 %v357
    %v1994 = vunpack.c.l.b16 %v358
    %v1995 = vunpack.c.h.b16 %v358
    %v1996 = vunpack.c.l.b16 %v359
    %v1997 = vunpack.c.h.b16 %v359
    %v1998 = vunpack.c.l.b16 %v360
    %v1999 = vunpack.c.h.b16 %v360
    %v2000 = vunpack.c.l.b16 %v361
    %v2001 = vunpack.c.h.b16 %v361
    %v2002 = vunpack.c.l.b16 %v362
    %v2003 = vunpack.c.h.b16 %v362
    %v2004 = vunpack.c.l.b16 %v363
    %v2005 = vunpack.c.h.b16 %v363
    %v2006 = vunpack.c.l.b16 %v364
    %v2007 = vunpack.c.h.b16 %v364
    %v2008 = vunpack.c.l.b16 %v365
    %v2009 = vunpack.c.h.b16 %v365
    %v2010 = vunpack.c.l.b16 %v366
    %v2011 = vunpack.c.h.b16 %v366
    %v2012 = vunpack.c.l.b16 %v367
    %v2013 = vunpack.c.h.b16 %v367
    %v2014 = vunpack.c.l.b16 %v368
    %v2015 = vunpack.c.h.b16 %v368
    %v2016 = vunpack.c.l.b16 %v369
    %v2017 = vunpack.c.h.b16 %v369
    %v2018 = vunpack.c.l.b16 %v370
    %v2019 = vunpack.c.h.b16 %v370
    %v2020 = vunpack.c.l.b16 %v371
    %v2021 = vunpack.c.h.b16 %v371
    %v2022 = vunpack.c.l.b16 %v372
    %v2023 = vunpack.c.h.b16 %v372
    %v2024 = vunpack.c.l.b16 %v373
    %v2025 = vunpack.c.h.b16 %v373
    %v2026 = vunpack.c.l.b16 %v374
    %v2027 = vunpack.c.h.b16 %v374
    %v2028 = vunpack.c.l.b16 %v375
    %v2029 = vunpack.c.h.b16 %v375
    %v2030 = vunpack.c.l.b16 %v376
    %v2031 = vunpack.c.h.b16 %v376
    %v2032 = vunpack.c.l.b16 %v377
    %v2033 = vunpack.c.h.b16 %v377
    %v2034 = vunpack.c.l.b16 %v378
    %v2035 = vunpack.c.h.b16 %v378
    %v2036 = vunpack.c.l.b16 %v379
    %v2037 = vunpack.c.h.b16 %v379
    %v2038 = vunpack.c.l.b16 %v380
    %v2039 = vunpack.c.h.b16 %v380
    %v2040 = vunpack.c.l.b16 %v381
    %v2041 = vunpack.c.h.b16 %v381
    %v2042 = vunpack.c.l.b16 %v382
    %v2043 = vunpack.c.h.b16 %v382
    %v2044 = vunpack.c.l.b16 %v383
    %v2045 = vunpack.c.h.b16 %v383
    %v2046 = vunpack.c.l.b16 %v384
    %v2047 = vunpack.c.h.b16 %v384
    %v2048 = vunpack.c.l.b16 %v385
    %v2049 = vunpack.c.h.b16 %v385
    %v2050 = vunpack.c.l.b16 %v386
    %v2051 = vunpack.c.h.b16 %v386
    %v2052 = vunpack.c.l.b16 %v387
    %v2053 = vunpack.c.h.b16 %v387
    %v2054 = vunpack.c.l.b16 %v388
    %v2055 = vunpack.c.h.b16 %v388
    %v2056 = vunpack.c.l.b16 %v389
    %v2057 = vunpack.c.h.b16 %v389
    %v2058 = vunpack.c.l.b16 %v390
    %v2059 = vunpack.c.h.b16 %v390
    %v2060 = vunpack.c.l.b16 %v391
    %v2061 = vunpack.c.h.b16 %v391
    %v2062 = vunpack.c.l.b16 %v392
    %v2063 = vunpack.c.h.b16 %v392
    %v2064 = vunpack.c.l.b16 %v393
    %v2065 = vunpack.c.h.b16 %v393
    %v2066 = vunpack.c.l.b16 %v394
    %v2067 = vunpack.c.h.b16 %v394
    %v2068 = vunpack.c.l.b16 %v395
    %v2069 = vunpack.c.h.b16 %v395
    %v2070 = vunpack.c.l.b16 %v396
    %v2071 = vunpack.c.h.b16 %v396
    %v2072 = vunpack.c.l.b16 %v397
    %v2073 = vunpack.c.h.b16 %v397
    %v2074 = vunpack.c.l.b16 %v398
    %v2075 = vunpack.c.h.b16 %v398
    %v2076 = vunpack.c.l.b16 %v399
    %v2077 = vunpack.c.h.b16 %v399
    %v2078 = vunpack.c.l.b16 %v400
    %v2079 = vunpack.c.h.b16 %v400
    %v2080 = vunpack.c.l.b16 %v401
    %v2081 = vunpack.c.h.b16 %v401
    %v2082 = vunpack.c.l.b16 %v402
    %v2083 = vunpack.c.h.b16 %v402
    %v2084 = vunpack.c.l.b16 %v403
    %v2085 = vunpack.c.h.b16 %v403
    %v2086 = vunpack.c.l.b16 %v404
    %v2087 = vunpack.c.h.b16 %v404
    %v2088 = vunpack.c.l.b16 %v405
    %v2089 = vunpack.c.h.b16 %v405
    %v2090 = vunpack.c.l.b16 %v406
    %v2091 = vunpack.c.h.b16 %v406
    %v2092 = vunpack.c.l.b16 %v407
    %v2093 = vunpack.c.h.b16 %v407
    %v2094 = vunpack.c.l.b16 %v408
    %v2095 = vunpack.c.h.b16 %v408
    %v2096 = vunpack.c.l.b16 %v409
    %v2097 = vunpack.c.h.b16 %v409
    %v2098 = vunpack.c.l.b16 %v410
    %v2099 = vunpack.c.h.b16 %v410
    %v2100 = vunpack.c.l.b16 %v411
    %v2101 = vunpack.c.h.b16 %v411
    %v2102 = vunpack.c.l.b16 %v412
    %v2103 = vunpack.c.h.b16 %v412
    %v2104 = vunpack.c.l.b16 %v413
    %v2105 = vunpack.c.h.b16 %v413
    %v2106 = vunpack.c.l.b16 %v414
    %v2107 = vunpack.c.h.b16 %v414
    %v2108 = vunpack.c.l.b16 %v415
    %v2109 = vunpack.c.h.b16 %v415
    %v2110 = vunpack.c.l.b16 %v416
    %v2111 = vunpack.c.h.b16 %v416
    %v2112 = vunpack.c.l.b16 %v417
    %v2113 = vunpack.c.h.b16 %v417
    %v2114 = vunpack.c.l.b16 %v418
    %v2115 = vunpack.c.h.b16 %v418
    %v2116 = vunpack.c.l.b16 %v419
    %v2117 = vunpack.c.h.b16 %v419
    %v2118 = vunpack.c.l.b16 %v420
    %v2119 = vunpack.c.h.b16 %v420
    %v2120 = vunpack.c.l.b16 %v421
    %v2121 = vunpack.c.h.b16 %v421
    %v2122 = vunpack.c.l.b16 %v422
    %v2123 = vunpack.c.h.b16 %v422
    %v2124 = vunpack.c.l.b16 %v423
    %v2125 = vunpack.c.h.b16 %v423
    %v2126 = vunpack.c.l.b16 %v424
    %v2127 = vunpack.c.h.b16 %v424
    %v2128 = vunpack.c.l.b16 %v425
    %v2129 = vunpack.c.h.b16 %v425
    %v2130 = vunpack.c.l.b16 %v426
    %v2131 = vunpack.c.h.b16 %v426
    %v2132 = vunpack.c.l.b16 %v427
    %v2133 = vunpack.c.h.b16 %v427
    %v2134 = vunpack.c.l.b16 %v428
    %v2135 = vunpack.c.h.b16 %v428
    %v2136 = vunpack.c.l.b16 %v429
    %v2137 = vunpack.c.h.b16 %v429
    %v2138 = vunpack.c.l.b16 %v430
    %v2139 = vunpack.c.h.b16 %v430
    %v2140 = vunpack.c.l.b16 %v431
    %v2141 = vunpack.c.h.b16 %v431
    %v2142 = vunpack.c.l.b16 %v432
    %v2143 = vunpack.c.h.b16 %v432
    %v2144 = vunpack.c.l.b16 %v433
    %v2145 = vunpack.c.h.b16 %v433
    %v2146 = vunpack.c.l.b16 %v434
    %v2147 = vunpack.c.h.b16 %v434
    %v2148 = vunpack.c.l.b16 %v435
    %v2149 = vunpack.c.h.b16 %v435
    %v2150 = vunpack.c.l.b16 %v436
    %v2151 = vunpack.c.h.b16 %v436
    %v2152 = vunpack.c.l.b16 %v437
    %v2153 = vunpack.c.h.b16 %v437
    %v2154 = vunpack.c.l.b16 %v438
    %v2155 = vunpack.c.h.b16 %v438
    %v2156 = vunpack.c.l.b16 %v439
    %v2157 = vunpack.c.h.b16 %v439
    %v2158 = vunpack.c.l.b16 %v440
    %v2159 = vunpack.c.h.b16 %v440
    %v2160 = vunpack.c.l.b16 %v441
    %v2161 = vunpack.c.h.b16 %v441
    %v2162 = vunpack.c.l.b16 %v442
    %v2163 = vunpack.c.h.b16 %v442
    %v2164 = vunpack.c.l.b16 %v443
    %v2165 = vunpack.c.h.b16 %v443
    %v2166 = vunpack.c.l.b16 %v444
    %v2167 = vunpack.c.h.b16 %v444
    %v2168 = vunpack.c.l.b16 %v445
    %v2169 = vunpack.c.h.b16 %v445
    %v2170 = vunpack.c.l.b16 %v446
    %v2171 = vunpack.c.h.b16 %v446
    %v2172 = vunpack.c.l.b16 %v447
    %v2173 = vunpack.c.h.b16 %v447
    %v2174 = vunpack.c.l.b16 %v448
    %v2175 = vunpack.c.h.b16 %v448
    %v2176 = vunpack.c.l.b16 %v449
    %v2177 = vunpack.c.h.b16 %v449
    %v2178 = vunpack.c.l.b16 %v450
    %v2179 = vunpack.c.h.b16 %v450
    %v2180 = vunpack.c.l.b16 %v451
    %v2181 = vunpack.c.h.b16 %v451
    %v2182 = vunpack.c.l.b16 %v452
    %v2183 = vunpack.c.h.b16 %v452
    %v2184 = vunpack.c.l.b16 %v453
    %v2185 = vunpack.c.h.b16 %v453
    %v2186 = vunpack.c.l.b16 %v454
    %v2187 = vunpack.c.h.b16 %v454
    %v2188 = vunpack.c.l.b16 %v455
    %v2189 = vunpack.c.h.b16 %v455
    %v2190 = vunpack.c.l.b16 %v456
    %v2191 = vunpack.c.h.b16 %v456
    %v2192 = vunpack.c.l.b16 %v457
    %v2193 = vunpack.c.h.b16 %v457
    %v2194 = vunpack.c.l.b16 %v458
    %v2195 = vunpack.c.h.b16 %v458
    %v2196 = vunpack.c.l.b16 %v459
    %v2197 = vunpack.c.h.b16 %v459
    %v2198 = vunpack.c.l.b16 %v460
    %v2199 = vunpack.c.h.b16 %v460
    %v2200 = vunpack.c.l.b16 %v461
    %v2201 = vunpack.c.h.b16 %v461
    %v2202 = vunpack.c.l.b16 %v462
    %v2203 = vunpack.c.h.b16 %v462
    %v2204 = vunpack.c.l.b16 %v463
    %v2205 = vunpack.c.h.b16 %v463
    %v2206 = vunpack.c.l.b16 %v464
    %v2207 = vunpack.c.h.b16 %v464
    %v2208 = vunpack.c.l.b16 %v465
    %v2209 = vunpack.c.h.b16 %v465
    %v2210 = vunpack.c.l.b16 %v466
    %v2211 = vunpack.c.h.b16 %v466
    %v2212 = vunpack.c.l.b16 %v467
    %v2213 = vunpack.c.h.b16 %v467
    %v2214 = vunpack.c.l.b16 %v468
    %v2215 = vunpack.c.h.b16 %v468
    %v2216 = vunpack.c.l.b16 %v469
    %v2217 = vunpack.c.h.b16 %v469
    %v2218 = vunpack.c.l.b16 %v470
    %v2219 = vunpack.c.h.b16 %v470
    %v2220 = vunpack.c.l.b16 %v471
    %v2221 = vunpack.c.h.b16 %v471
    %v2222 = vunpack.c.l.b16 %v472
    %v2223 = vunpack.c.h.b16 %v472
    %v2224 = vunpack.c.l.b16 %v473
    %v2225 = vunpack.c.h.b16 %v473
    %v2226 = vunpack.c.l.b16 %v474
    %v2227 = vunpack.c.h.b16 %v474
    %v2228 = vunpack.c.l.b16 %v475
    %v2229 = vunpack.c.h.b16 %v475
    %v2230 = vunpack.c.l.b16 %v476
    %v2231 = vunpack.c.h.b16 %v476
    %v2232 = vunpack.c.l.b16 %v477
    %v2233 = vunpack.c.h.b16 %v477
    %v2234 = vunpack.c.l.b16 %v478
    %v2235 = vunpack.c.h.b16 %v478
    %v2236 = vunpack.c.l.b16 %v479
    %v2237 = vunpack.c.h.b16 %v479
    %v2238 = vunpack.c.l.b16 %v480
    %v2239 = vunpack.c.h.b16 %v480
    %v2240 = vunpack.c.l.b16 %v481
    %v2241 = vunpack.c.h.b16 %v481
    %v2242 = vunpack.c.l.b16 %v482
    %v2243 = vunpack.c.h.b16 %v482
    %v2244 = vunpack.c.l.b16 %v483
    %v2245 = vunpack.c.h.b16 %v483
    %v2246 = vunpack.c.l.b16 %v484
    %v2247 = vunpack.c.h.b16 %v484
    %v2248 = vunpack.c.l.b16 %v485
    %v2249 = vunpack.c.h.b16 %v485
    %v2250 = vunpack.c.l.b16 %v486
    %v2251 = vunpack.c.h.b16 %v486
    %v2252 = vunpack.c.l.b16 %v487
    %v2253 = vunpack.c.h.b16 %v487
    %v2254 = vunpack.c.l.b16 %v488
    %v2255 = vunpack.c.h.b16 %v488
    %v2256 = vunpack.c.l.b16 %v489
    %v2257 = vunpack.c.h.b16 %v489
    %v2258 = vunpack.c.l.b16 %v490
    %v2259 = vunpack.c.h.b16 %v490
    %v2260 = vunpack.c.l.b16 %v491
    %v2261 = vunpack.c.h.b16 %v491
    %v2262 = vunpack.c.l.b16 %v492
    %v2263 = vunpack.c.h.b16 %v492
    %v2264 = vunpack.c.l.b16 %v493
    %v2265 = vunpack.c.h.b16 %v493
    %v2266 = vunpack.c.l.b16 %v494
    %v2267 = vunpack.c.h.b16 %v494
    %v2268 = vunpack.c.l.b16 %v495
    %v2269 = vunpack.c.h.b16 %v495
    %v2270 = vunpack.c.l.b16 %v496
    %v2271 = vunpack.c.h.b16 %v496
    %v2272 = vunpack.c.l.b16 %v497
    %v2273 = vunpack.c.h.b16 %v497
    %v2274 = vunpack.c.l.b16 %v498
    %v2275 = vunpack.c.h.b16 %v498
    %v2276 = vunpack.c.l.b16 %v499
    %v2277 = vunpack.c.h.b16 %v499
    %v2278 = vunpack.c.l.b16 %v500
    %v2279 = vunpack.c.h.b16 %v500
    %v2280 = vunpack.c.l.b16 %v501
    %v2281 = vunpack.c.h.b16 %v501
    %v2282 = vunpack.c.l.b16 %v502
    %v2283 = vunpack.c.h.b16 %v502
    %v2284 = vunpack.c.l.b16 %v503
    %v2285 = vunpack.c.h.b16 %v503
    %v2286 = vunpack.c.l.b16 %v504
    %v2287 = vunpack.c.h.b16 %v504
    %v2288 = vunpack.c.l.b16 %v505
    %v2289 = vunpack.c.h.b16 %v505
    %v2290 = vunpack.c.l.b16 %v506
    %v2291 = vunpack.c.h.b16 %v506
    %v2292 = vunpack.c.l.b16 %v507
    %v2293 = vunpack.c.h.b16 %v507
    %v2294 = vunpack.c.l.b16 %v508
    %v2295 = vunpack.c.h.b16 %v508
    %v2296 = vunpack.c.l.b16 %v509
    %v2297 = vunpack.c.h.b16 %v509
    %v2298 = vunpack.c.l.b16 %v510
    %v2299 = vunpack.c.h.b16 %v510
    %v2300 = vunpack.c.l.b16 %v511
    %v2301 = vunpack.c.h.b16 %v511
    %v2302 = vpack.c.b16 %v1792, %v1790
    %v2303 = vpack.c.b16 %v1793, %v1791
    %v2304 = vpack.c.b16 %v1796, %v1794
    %v2305 = vpack.c.b16 %v1797, %v1795
    %v2306 = vpack.c.b16 %v1800, %v1798
    %v2307 = vpack.c.b16 %v1801, %v1799
    %v2308 = vpack.c.b16 %v1804, %v1802
    %v2309 = vpack.c.b16 %v1805, %v1803
    %v2310 = vpack.c.b16 %v1808, %v1806
    %v2311 = vpack.c.b16 %v1809, %v1807
    %v2312 = vpack.c.b16 %v1812, %v1810
    %v2313 = vpack.c.b16 %v1813, %v1811
    %v2314 = vpack.c.b16 %v1816, %v1814
    %v2315 = vpack.c.b16 %v1817, %v1815
    %v2316 = vpack.c.b16 %v1820, %v1818
    %v2317 = vpack.c.b16 %v1821, %v1819
    %v2318 = vpack.c.b16 %v1824, %v1822
    %v2319 = vpack.c.b16 %v1825, %v1823
    %v2320 = vpack.c.b16 %v1828, %v1826
    %v2321 = vpack.c.b16 %v1829, %v1827
    %v2322 = vpack.c.b16 %v1832, %v1830
    %v2323 = vpack.c.b16 %v1833, %v1831
    %v2324 = vpack.c.b16 %v1836, %v1834
    %v2325 = vpack.c.b16 %v1837, %v1835
    %v2326 = vpack.c.b16 %v1840, %v1838
    %v2327 = vpack.c.b16 %v1841, %v1839
    %v2328 = vpack.c.b16 %v1844, %v1842
    %v2329 = vpack.c.b16 %v1845, %v1843
    %v2330 = vpack.c.b16 %v1848, %v1846
    %v2331 = vpack.c.b16 %v1849, %v1847
    %v2332 = vpack.c.b16 %v1852, %v1850
    %v2333 = vpack.c.b16 %v1853, %v1851
    %v2334 = vpack.c.b16 %v1856, %v1854
    %v2335 = vpack.c.b16 %v1857, %v1855
    %v2336 = vpack.c.b16 %v1860, %v1858
    %v2337 = vpack.c.b16 %v1861, %v1859
    %v2338 = vpack.c.b16 %v1864, %v1862
    %v2339 = vpack.c.b16 %v1865, %v1863
    %v2340 = vpack.c.b16 %v1868, %v1866
    %v2341 = vpack.c.b16 %v1869, %v1867
    %v2342 = vpack.c.b16 %v1872, %v1870
    %v2343 = vpack.c.b16 %v1873, %v1871
    %v2344 = vpack.c.b16 %v1876, %v1874
    %v2345 = vpack.c.b16 %v1877, %v1875
    %v2346 = vpack.c.b16 %v1880, %v1878
    %v2347 = vpack.c.b16 %v1881, %v1879
    %v2348 = vpack.c.b16 %v1884, %v1882
    %v2349 = vpack.c.b16 %v1885, %v1883
    %v2350 = vpack.c.b16 %v1888, %v1886
    %v2351 = vpack.c.b16 %v1889, %v1887
    %v2352 = vpack.c.b16 %v1892, %v1890
    %v2353 = vpack.c.b16 %v1893, %v1891
    %v2354 = vpack.c.b16 %v1896, %v1894
    %v2355 = vpack.c.b16 %v1897, %v1895
    %v2356 = vpack.c.b16 %v1900, %v1898
    %v2357 = vpack.c.b16 %v1901, %v1899
    %v2358 = vpack.c.b16 %v1904, %v1902
    %v2359 = vpack.c.b16 %v1905, %v1903
    %v2360 = vpack.c.b16 %v1908, %v1906
    %v2361 = vpack.c.b16 %v1909, %v1907
    %v2362 = vpack.c.b16 %v1912, %v1910
    %v2363 = vpack.c.b16 %v1913, %v1911
    %v2364 = vpack.c.b16 %v1916, %v1914
    %v2365 = vpack.c.b16 %v1917, %v1915
    %v2366 = vpack.c.b16 %v1920, %v1918
    %v2367 = vpack.c.b16 %v1921, %v1919
    %v2368 = vpack.c.b16 %v1924, %v1922
    %v2369 = vpack.c.b16 %v1925, %v1923
    %v2370 = vpack.c.b16 %v1928, %v1926
    %v2371 = vpack.c.b16 %v1929, %v1927
    %v2372 = vpack.c.b16 %v1932, %v1930
    %v2373 = vpack.c.b16 %v1933, %v1931
    %v2374 = vpack.c.b16 %v1936, %v1934
    %v2375 = vpack.c.b16 %v1937, %v1935
    %v2376 = vpack.c.b16 %v1940, %v1938
    %v2377 = vpack.c.b16 %v1941, %v1939
    %v2378 = vpack.c.b16 %v1944, %v1942
    %v2379 = vpack.c.b16 %v1945, %v1943
    %v2380 = vpack.c.b16 %v1948, %v1946
    %v2381 = vpack.c.b16 %v1949, %v1947
    %v2382 = vpack.c.b16 %v1952, %v1950
    %v2383 = vpack.c.b16 %v1953, %v1951
    %v2384 = vpack.c.b16 %v1956, %v1954
    %v2385 = vpack.c.b16 %v1957, %v1955
    %v2386 = vpack.c.b16 %v1960, %v1958
    %v2387 = vpack.c.b16 %v1961, %v1959
    %v2388 = vpack.c.b16 %v1964, %v1962
    %v2389 = vpack.c.b16 %v1965, %v1963
    %v2390 = vpack.c.b16 %v1968, %v1966
    %v2391 = vpack.c.b16 %v1969, %v1967
    %v2392 = vpack.c.b16 %v1972, %v1970
    %v2393 = vpack.c.b16 %v1973, %v1971
    %v2394 = vpack.c.b16 %v1976, %v1974
    %v2395 = vpack.c.b16 %v1977, %v1975
    %v2396 = vpack.c.b16 %v1980, %v1978
    %v2397 = vpack.c.b16 %v1981, %v1979
    %v2398 = vpack.c.b16 %v1984, %v1982
    %v2399 = vpack.c.b16 %v1985, %v1983
    %v2400 = vpack.c.b16 %v1988, %v1986
    %v2401 = vpack.c.b16 %v1989, %v1987
    %v2402 = vpack.c.b16 %v1992, %v1990
    %v2403 = vpack.c.b16 %v1993, %v1991
    %v2404 = vpack.c.b16 %v1996, %v1994
    %v2405 = vpack.c.b16 %v1997, %v1995
    %v2406 = vpack.c.b16 %v2000, %v1998
    %v2407 = vpack.c.b16 %v2001, %v1999
    %v2408 = vpack.c.b16 %v2004, %v2002
    %v2409 = vpack.c.b16 %v2005, %v2003
    %v2410 = vpack.c.b16 %v2008, %v2006
    %v2411 = vpack.c.b16 %v2009, %v2007
    %v2412 = vpack.c.b16 %v2012, %v2010
    %v2413 = vpack.c.b16 %v2013, %v2011
    %v2414 = vpack.c.b16 %v2016, %v2014
    %v2415 = vpack.c.b16 %v2017, %v2015
    %v2416 = vpack.c.b16 %v2020, %v2018
    %v2417 = vpack.c.b16 %v2021, %v2019
    %v2418 = vpack.c.b16 %v2024, %v2022
    %v2419 = vpack.c.b16 %v2025, %v2023
    %v2420 = vpack.c.b16 %v2028, %v2026
    %v2421 = vpack.c.b16 %v2029, %v2027
    %v2422 = vpack.c.b16 %v2032, %v2030
    %v2423 = vpack.c.b16 %v2033, %v2031
    %v2424 = vpack.c.b16 %v2036, %v2034
    %v2425 = vpack.c.b16 %v2037, %v2035
    %v2426 = vpack.c.b16 %v2040, %v2038
    %v2427 = vpack.c.b16 %v2041, %v2039
    %v2428 = vpack.c.b16 %v2044, %v2042
    %v2429 = vpack.c.b16 %v2045, %v2043
    %v2430 = vpack.c.b16 %v2048, %v2046
    %v2431 = vpack.c.b16 %v2049, %v2047
    %v2432 = vpack.c.b16 %v2052, %v2050
    %v2433 = vpack.c.b16 %v2053, %v2051
    %v2434 = vpack.c.b16 %v2056, %v2054
    %v2435 = vpack.c.b16 %v2057, %v2055
    %v2436 = vpack.c.b16 %v2060, %v2058
    %v2437 = vpack.c.b16 %v2061, %v2059
    %v2438 = vpack.c.b16 %v2064, %v2062
    %v2439 = vpack.c.b16 %v2065, %v2063
    %v2440 = vpack.c.b16 %v2068, %v2066
    %v2441 = vpack.c.b16 %v2069, %v2067
    %v2442 = vpack.c.b16 %v2072, %v2070
    %v2443 = vpack.c.b16 %v2073, %v2071
    %v2444 = vpack.c.b16 %v2076, %v2074
    %v2445 = vpack.c.b16 %v2077, %v2075
    %v2446 = vpack.c.b16 %v2080, %v2078
    %v2447 = vpack.c.b16 %v2081, %v2079
    %v2448 = vpack.c.b16 %v2084, %v2082
    %v2449 = vpack.c.b16 %v2085, %v2083
    %v2450 = vpack.c.b16 %v2088, %v2086
    %v2451 = vpack.c.b16 %v2089, %v2087
    %v2452 = vpack.c.b16 %v2092, %v2090
    %v2453 = vpack.c.b16 %v2093, %v2091
    %v2454 = vpack.c.b16 %v2096, %v2094
    %v2455 = vpack.c.b16 %v2097, %v2095
    %v2456 = vpack.c.b16 %v2100, %v2098
    %v2457 = vpack.c.b16 %v2101, %v2099
    %v2458 = vpack.c.b16 %v2104, %v2102
    %v2459 = vpack.c.b16 %v2105, %v2103
    %v2460 = vpack.c.b16 %v2108, %v2106
    %v2461 = vpack.c.b16 %v2109, %v2107
    %v2462 = vpack.c.b16 %v2112, %v2110
    %v2463 = vpack.c.b16 %v2113, %v2111
    %v2464 = vpack.c.b16 %v2116, %v2114
    %v2465 = vpack.c.b16 %v2117, %v2115
    %v2466 = vpack.c.b16 %v2120, %v2118
    %v2467 = vpack.c.b16 %v2121, %v2119
    %v2468 = vpack.c.b16 %v2124, %v2122
    %v2469 = vpack.c.b16 %v2125, %v2123
    %v2470 = vpack.c.b16 %v2128, %v2126
    %v2471 = vpack.c.b16 %v2129, %v2127
    %v2472 = vpack.c.b16 %v2132, %v2130
    %v2473 = vpack.c.b16 %v2133, %v2131
    %v2474 = vpack.c.b16 %v2136, %v2134
    %v2475 = vpack.c.b16 %v2137, %v2135
    %v2476 = vpack.c.b16 %v2140, %v2138
    %v2477 = vpack.c.b16 %v2141, %v2139
    %v2478 = vpack.c.b16 %v2144, %v2142
    %v2479 = vpack.c.b16 %v2145, %v2143
    %v2480 = vpack.c.b16 %v2148, %v2146
    %v2481 = vpack.c.b16 %v2149, %v2147
    %v2482 = vpack.c.b16 %v2152, %v2150
    %v2483 = vpack.c.b16 %v2153, %v2151
    %v2484 = vpack.c.b16 %v2156, %v2154
    %v2485 = vpack.c.b16 %v2157, %v2155
    %v2486 = vpack.c.b16 %v2160, %v2158
    %v2487 = vpack.c.b16 %v2161, %v2159
    %v2488 = vpack.c.b16 %v2164, %v2162
    %v2489 = vpack.c.b16 %v2165, %v2163
    %v2490 = vpack.c.b16 %v2168, %v2166
    %v2491 = vpack.c.b16 %v2169, %v2167
    %v2492 = vpack.c.b16 %v2172, %v2170
    %v2493 = vpack.c.b16 %v2173, %v2171
    %v2494 = vpack.c.b16 %v2176, %v2174
    %v2495 = vpack.c.b16 %v2177, %v2175
    %v2496 = vpack.c.b16 %v2180, %v2178
    %v2497 = vpack.c.b16 %v2181, %v2179
    %v2498 = vpack.c.b16 %v2184, %v2182
    %v2499 = vpack.c.b16 %v2185, %v2183
    %v2500 = vpack.c.b16 %v2188, %v2186
    %v2501 = vpack.c.b16 %v2189, %v2187
    %v2502 = vpack.c.b16 %v2192, %v2190
    %v2503 = vpack.c.b16 %v2193, %v2191
    %v2504 = vpack.c.b16 %v2196, %v2194
    %v2505 = vpack.c.b16 %v2197, %v2195
    %v2506 = vpack.c.b16 %v2200, %v2198
    %v2507 = vpack.c.b16 %v2201, %v2199
    %v2508 = vpack.c.b16 %v2204, %v2202
    %v2509 = vpack.c.b16 %v2205, %v2203
    %v2510 = vpack.c.b16 %v2208, %v2206
    %v2511 = vpack.c.b16 %v2209, %v2207
    %v2512 = vpack.c.b16 %v2212, %v2210
    %v2513 = vpack.c.b16 %v2213, %v2211
    %v2514 = vpack.c.b16 %v2216, %v2214
    %v2515 = vpack.c.b16 %v2217, %v2215
    %v2516 = vpack.c.b16 %v2220, %v2218
    %v2517 = vpack.c.b16 %v2221, %v2219
    %v2518 = vpack.c.b16 %v2224, %v2222
    %v2519 = vpack.c.b16 %v2225, %v2223
    %v2520 = vpack.c.b16 %v2228, %v2226
    %v2521 = vpack.c.b16 %v2229, %v2227
    %v2522 = vpack.c.b16 %v2232, %v2230
    %v2523 = vpack.c.b16 %v2233, %v2231
    %v2524 = vpack.c.b16 %v2236, %v2234
    %v2525 = vpack.c.b16 %v2237, %v2235
    %v2526 = vpack.c.b16 %v2240, %v2238
    %v2527 = vpack.c.b16 %v2241, %v2239
    %v2528 = vpack.c.b16 %v2244, %v2242
    %v2529 = vpack.c.b16 %v2245, %v2243
    %v2530 = vpack.c.b16 %v2248, %v2246
    %v2531 = vpack.c.b16 %v2249, %v2247
    %v2532 = vpack.c.b16 %v2252, %v2250
    %v2533 = vpack.c.b16 %v2253, %v2251
    %v2534 = vpack.c.b16 %v2256, %v2254
    %v2535 = vpack.c.b16 %v2257, %v2255
    %v2536 = vpack.c.b16 %v2260, %v2258
    %v2537 = vpack.c.b16 %v2261, %v2259
    %v2538 = vpack.c.b16 %v2264, %v2262
    %v2539 = vpack.c.b16 %v2265, %v2263
    %v2540 = vpack.c.b16 %v2268, %v2266
    %v2541 = vpack.c.b16 %v2269, %v2267
    %v2542 = vpack.c.b16 %v2272, %v2270
    %v2543 = vpack.c.b16 %v2273, %v2271
    %v2544 = vpack.c.b16 %v2276, %v2274
    %v2545 = vpack.c.b16 %v2277, %v2275
    %v2546 = vpack.c.b16 %v2280, %v2278
    %v2547 = vpack.c.b16 %v2281, %v2279
    %v2548 = vpack.c.b16 %v2284, %v2282
    %v2549 = vpack.c.b16 %v2285, %v2283
    %v2550 = vpack.c.b16 %v2288, %v2286
    %v2551 = vpack.c.b16 %v2289, %v2287
    %v2552 = vpack.c.b16 %v2292, %v2290
    %v2553 = vpack.c.b16 %v2293, %v2291
    %v2554 = vpack.c.b16 %v2296, %v2294
    %v2555 = vpack.c.b16 %v2297, %v2295
    %v2556 = vpack.c.b16 %v2300, %v2298
    %v2557 = vpack.c.b16 %v2301, %v2299
    %2814 = vmatpush.bf16.msra.mxu0 %v2316
    %2815 = vmatpush.bf16.msra.mxu0 %v2314
    %2816 = vmatpush.bf16.msra.mxu0 %v2312
    %2817 = vmatpush.bf16.msra.mxu0 %v2310
    %2818 = vmatpush.bf16.msra.mxu0 %v2308
    %2819 = vmatpush.bf16.msra.mxu0 %v2306
    %2820 = vmatpush.bf16.msra.mxu0 %v2304
    %2821 = vmatpush.bf16.msra.mxu0 %v2302
    %2822 = vmatmul.bf16.gmra.mxu0 %v1118
    %v2823 = vpop.f32.mrf.mxu0
    %v2824 = vadd.f32 %v514, %v2823
    %v2825 = vpop.f32.mrf.mxu0
    %v2826 = vadd.f32 %v514, %v2825
    %2827 = vmatmul.bf16.gmra.mxu0 %v1134
    %v2828 = vpop.f32.mrf.mxu0
    %v2829 = vadd.f32 %v514, %v2828
    %v2830 = vpop.f32.mrf.mxu0
    %v2831 = vadd.f32 %v514, %v2830
    %2832 = vmatmul.bf16.gmra.mxu0 %v1150
    %v2833 = vpop.f32.mrf.mxu0
    %v2834 = vadd.f32 %v514, %v2833
    %v2835 = vpop.f32.mrf.mxu0
    %v2836 = vadd.f32 %v514, %v2835
    %2837 = vmatmul.bf16.gmra.mxu0 %v1166
    %v2838 = vpop.f32.mrf.mxu0
    %v2839 = vadd.f32 %v514, %v2838
    %v2840 = vpop.f32.mrf.mxu0
    %v2841 = vadd.f32 %v514, %v2840
    %2842 = vmatmul.bf16.gmra.mxu0 %v1182
    %v2843 = vpop.f32.mrf.mxu0
    %v2844 = vadd.f32 %v514, %v2843
    %v2845 = vpop.f32.mrf.mxu0
    %v2846 = vadd.f32 %v514, %v2845
    %2847 = vmatmul.bf16.gmra.mxu0 %v1198
    %v2848 = vpop.f32.mrf.mxu0
    %v2849 = vadd.f32 %v514, %v2848
    %v2850 = vpop.f32.mrf.mxu0
    %v2851 = vadd.f32 %v514, %v2850
    %2852 = vmatmul.bf16.gmra.mxu0 %v1214
    %v2853 = vpop.f32.mrf.mxu0
    %v2854 = vadd.f32 %v514, %v2853
    %v2855 = vpop.f32.mrf.mxu0
    %v2856 = vadd.f32 %v514, %v2855
    %2857 = vmatmul.bf16.gmra.mxu0 %v1230
    %v2858 = vpop.f32.mrf.mxu0
    %v2859 = vadd.f32 %v514, %v2858
    %v2860 = vpop.f32.mrf.mxu0
    %v2861 = vadd.f32 %v514, %v2860
    %2862 = vmatmul.bf16.gmra.mxu0 %v1246
    %v2863 = vpop.f32.mrf.mxu0
    %v2864 = vadd.f32 %v514, %v2863
    %v2865 = vpop.f32.mrf.mxu0
    %v2866 = vadd.f32 %v514, %v2865
    %2867 = vmatmul.bf16.gmra.mxu0 %v1262
    %v2868 = vpop.f32.mrf.mxu0
    %v2869 = vadd.f32 %v514, %v2868
    %v2870 = vpop.f32.mrf.mxu0
    %v2871 = vadd.f32 %v514, %v2870
    %2872 = vmatmul.bf16.gmra.mxu0 %v1278
    %v2873 = vpop.f32.mrf.mxu0
    %v2874 = vadd.f32 %v514, %v2873
    %v2875 = vpop.f32.mrf.mxu0
    %v2876 = vadd.f32 %v514, %v2875
    %2877 = vmatmul.bf16.gmra.mxu0 %v1294
    %v2878 = vpop.f32.mrf.mxu0
    %v2879 = vadd.f32 %v514, %v2878
    %v2880 = vpop.f32.mrf.mxu0
    %v2881 = vadd.f32 %v514, %v2880
    %2882 = vmatmul.bf16.gmra.mxu0 %v1310
    %v2883 = vpop.f32.mrf.mxu0
    %v2884 = vadd.f32 %v514, %v2883
    %v2885 = vpop.f32.mrf.mxu0
    %2886 = vdwg.mxu0
    %2887 = vmatpush.bf16.msra.mxu0 %v2332
    %2888 = vmatpush.bf16.msra.mxu0 %v2330
    %2889 = vmatpush.bf16.msra.mxu0 %v2328
    %2890 = vmatpush.bf16.msra.mxu0 %v2326
    %2891 = vmatpush.bf16.msra.mxu0 %v2324
    %2892 = vmatpush.bf16.msra.mxu0 %v2322
    %2893 = vmatpush.bf16.msra.mxu0 %v2320
    %2894 = vmatpush.bf16.msra.mxu0 %v2318
    %2895 = vmatmul.bf16.gmra.mxu0 %v1119
    %v2896 = vpop.f32.mrf.mxu0
    %v2897 = vadd.f32 %v2824, %v2896
    %v2898 = vpop.f32.mrf.mxu0
    %v2899 = vadd.f32 %v2826, %v2898
    %2900 = vmatmul.bf16.gmra.mxu0 %v1135
    %v2901 = vpop.f32.mrf.mxu0
    %v2902 = vadd.f32 %v2829, %v2901
    %v2903 = vpop.f32.mrf.mxu0
    %v2904 = vadd.f32 %v2831, %v2903
    %2905 = vmatmul.bf16.gmra.mxu0 %v1151
    %v2906 = vpop.f32.mrf.mxu0
    %v2907 = vadd.f32 %v2834, %v2906
    %v2908 = vpop.f32.mrf.mxu0
    %v2909 = vadd.f32 %v2836, %v2908
    %2910 = vmatmul.bf16.gmra.mxu0 %v1167
    %v2911 = vpop.f32.mrf.mxu0
    %v2912 = vadd.f32 %v2839, %v2911
    %v2913 = vpop.f32.mrf.mxu0
    %v2914 = vadd.f32 %v2841, %v2913
    %2915 = vmatmul.bf16.gmra.mxu0 %v1183
    %v2916 = vpop.f32.mrf.mxu0
    %v2917 = vadd.f32 %v2844, %v2916
    %v2918 = vpop.f32.mrf.mxu0
    %v2919 = vadd.f32 %v2846, %v2918
    %2920 = vmatmul.bf16.gmra.mxu0 %v1199
    %v2921 = vpop.f32.mrf.mxu0
    %v2922 = vadd.f32 %v2849, %v2921
    %v2923 = vpop.f32.mrf.mxu0
    %v2924 = vadd.f32 %v2851, %v2923
    %2925 = vmatmul.bf16.gmra.mxu0 %v1215
    %v2926 = vpop.f32.mrf.mxu0
    %v2927 = vadd.f32 %v2854, %v2926
    %v2928 = vpop.f32.mrf.mxu0
    %v2929 = vadd.f32 %v2856, %v2928
    %2930 = vmatmul.bf16.gmra.mxu0 %v1231
    %v2931 = vpop.f32.mrf.mxu0
    %v2932 = vadd.f32 %v2859, %v2931
    %v2933 = vpop.f32.mrf.mxu0
    %v2934 = vadd.f32 %v2861, %v2933
    %2935 = vmatmul.bf16.gmra.mxu0 %v1247
    %v2936 = vpop.f32.mrf.mxu0
    %v2937 = vadd.f32 %v2864, %v2936
    %v2938 = vpop.f32.mrf.mxu0
    %v2939 = vadd.f32 %v2866, %v2938
    %2940 = vmatmul.bf16.gmra.mxu0 %v1263
    %v2941 = vpop.f32.mrf.mxu0
    %v2942 = vadd.f32 %v2869, %v2941
    %v2943 = vpop.f32.mrf.mxu0
    %v2944 = vadd.f32 %v2871, %v2943
    %2945 = vmatmul.bf16.gmra.mxu0 %v1279
    %v2946 = vpop.f32.mrf.mxu0
    %v2947 = vadd.f32 %v2874, %v2946
    %v2948 = vpop.f32.mrf.mxu0
    %v2949 = vadd.f32 %v2876, %v2948
    %2950 = vmatmul.bf16.gmra.mxu0 %v1295
    %v2951 = vpop.f32.mrf.mxu0
    %v2952 = vadd.f32 %v2879, %v2951
    %v2953 = vpop.f32.mrf.mxu0
    %v2954 = vadd.f32 %v2881, %v2953
    %2955 = vmatmul.bf16.gmra.mxu0 %v1311
    %v2956 = vpop.f32.mrf.mxu0
    %v2957 = vadd.f32 %v2884, %v2956
    %v2958 = vpop.f32.mrf.mxu0
    %2959 = vdwg.mxu0
    %2960 = vmatpush.bf16.msra.mxu0 %v2348
    %2961 = vmatpush.bf16.msra.mxu0 %v2346
    %2962 = vmatpush.bf16.msra.mxu0 %v2344
    %2963 = vmatpush.bf16.msra.mxu0 %v2342
    %2964 = vmatpush.bf16.msra.mxu0 %v2340
    %2965 = vmatpush.bf16.msra.mxu0 %v2338
    %2966 = vmatpush.bf16.msra.mxu0 %v2336
    %2967 = vmatpush.bf16.msra.mxu0 %v2334
    %2968 = vmatmul.bf16.gmra.mxu0 %v1120
    %v2969 = vpop.f32.mrf.mxu0
    %v2970 = vadd.f32 %v2897, %v2969
    %v2971 = vpop.f32.mrf.mxu0
    %v2972 = vadd.f32 %v2899, %v2971
    %2973 = vmatmul.bf16.gmra.mxu0 %v1136
    %v2974 = vpop.f32.mrf.mxu0
    %v2975 = vadd.f32 %v2902, %v2974
    %v2976 = vpop.f32.mrf.mxu0
    %v2977 = vadd.f32 %v2904, %v2976
    %2978 = vmatmul.bf16.gmra.mxu0 %v1152
    %v2979 = vpop.f32.mrf.mxu0
    %v2980 = vadd.f32 %v2907, %v2979
    %v2981 = vpop.f32.mrf.mxu0
    %v2982 = vadd.f32 %v2909, %v2981
    %2983 = vmatmul.bf16.gmra.mxu0 %v1168
    %v2984 = vpop.f32.mrf.mxu0
    %v2985 = vadd.f32 %v2912, %v2984
    %v2986 = vpop.f32.mrf.mxu0
    %v2987 = vadd.f32 %v2914, %v2986
    %2988 = vmatmul.bf16.gmra.mxu0 %v1184
    %v2989 = vpop.f32.mrf.mxu0
    %v2990 = vadd.f32 %v2917, %v2989
    %v2991 = vpop.f32.mrf.mxu0
    %v2992 = vadd.f32 %v2919, %v2991
    %2993 = vmatmul.bf16.gmra.mxu0 %v1200
    %v2994 = vpop.f32.mrf.mxu0
    %v2995 = vadd.f32 %v2922, %v2994
    %v2996 = vpop.f32.mrf.mxu0
    %v2997 = vadd.f32 %v2924, %v2996
    %2998 = vmatmul.bf16.gmra.mxu0 %v1216
    %v2999 = vpop.f32.mrf.mxu0
    %v3000 = vadd.f32 %v2927, %v2999
    %v3001 = vpop.f32.mrf.mxu0
    %v3002 = vadd.f32 %v2929, %v3001
    %3003 = vmatmul.bf16.gmra.mxu0 %v1232
    %v3004 = vpop.f32.mrf.mxu0
    %v3005 = vadd.f32 %v2932, %v3004
    %v3006 = vpop.f32.mrf.mxu0
    %v3007 = vadd.f32 %v2934, %v3006
    %3008 = vmatmul.bf16.gmra.mxu0 %v1248
    %v3009 = vpop.f32.mrf.mxu0
    %v3010 = vadd.f32 %v2937, %v3009
    %v3011 = vpop.f32.mrf.mxu0
    %v3012 = vadd.f32 %v2939, %v3011
    %3013 = vmatmul.bf16.gmra.mxu0 %v1264
    %v3014 = vpop.f32.mrf.mxu0
    %v3015 = vadd.f32 %v2942, %v3014
    %v3016 = vpop.f32.mrf.mxu0
    %v3017 = vadd.f32 %v2944, %v3016
    %3018 = vmatmul.bf16.gmra.mxu0 %v1280
    %v3019 = vpop.f32.mrf.mxu0
    %v3020 = vadd.f32 %v2947, %v3019
    %v3021 = vpop.f32.mrf.mxu0
    %v3022 = vadd.f32 %v2949, %v3021
    %3023 = vmatmul.bf16.gmra.mxu0 %v1296
    %v3024 = vpop.f32.mrf.mxu0
    %v3025 = vadd.f32 %v2952, %v3024
    %v3026 = vpop.f32.mrf.mxu0
    %v3027 = vadd.f32 %v2954, %v3026
    %3028 = vmatmul.bf16.gmra.mxu0 %v1312
    %v3029 = vpop.f32.mrf.mxu0
    %v3030 = vadd.f32 %v2957, %v3029
    %v3031 = vpop.f32.mrf.mxu0
    %3032 = vdwg.mxu0
    %3033 = vmatpush.bf16.msra.mxu0 %v2364
    %3034 = vmatpush.bf16.msra.mxu0 %v2362
    %3035 = vmatpush.bf16.msra.mxu0 %v2360
    %3036 = vmatpush.bf16.msra.mxu0 %v2358
    %3037 = vmatpush.bf16.msra.mxu0 %v2356
    %3038 = vmatpush.bf16.msra.mxu0 %v2354
    %3039 = vmatpush.bf16.msra.mxu0 %v2352
    %3040 = vmatpush.bf16.msra.mxu0 %v2350
    %3041 = vmatmul.bf16.gmra.mxu0 %v1121
    %v3042 = vpop.f32.mrf.mxu0
    %v3043 = vadd.f32 %v2970, %v3042
    %v3044 = vpop.f32.mrf.mxu0
    %v3045 = vadd.f32 %v2972, %v3044
    %3046 = vmatmul.bf16.gmra.mxu0 %v1137
    %v3047 = vpop.f32.mrf.mxu0
    %v3048 = vadd.f32 %v2975, %v3047
    %v3049 = vpop.f32.mrf.mxu0
    %v3050 = vadd.f32 %v2977, %v3049
    %3051 = vmatmul.bf16.gmra.mxu0 %v1153
    %v3052 = vpop.f32.mrf.mxu0
    %v3053 = vadd.f32 %v2980, %v3052
    %v3054 = vpop.f32.mrf.mxu0
    %v3055 = vadd.f32 %v2982, %v3054
    %3056 = vmatmul.bf16.gmra.mxu0 %v1169
    %v3057 = vpop.f32.mrf.mxu0
    %v3058 = vadd.f32 %v2985, %v3057
    %v3059 = vpop.f32.mrf.mxu0
    %v3060 = vadd.f32 %v2987, %v3059
    %3061 = vmatmul.bf16.gmra.mxu0 %v1185
    %v3062 = vpop.f32.mrf.mxu0
    %v3063 = vadd.f32 %v2990, %v3062
    %v3064 = vpop.f32.mrf.mxu0
    %v3065 = vadd.f32 %v2992, %v3064
    %3066 = vmatmul.bf16.gmra.mxu0 %v1201
    %v3067 = vpop.f32.mrf.mxu0
    %v3068 = vadd.f32 %v2995, %v3067
    %v3069 = vpop.f32.mrf.mxu0
    %v3070 = vadd.f32 %v2997, %v3069
    %3071 = vmatmul.bf16.gmra.mxu0 %v1217
    %v3072 = vpop.f32.mrf.mxu0
    %v3073 = vadd.f32 %v3000, %v3072
    %v3074 = vpop.f32.mrf.mxu0
    %v3075 = vadd.f32 %v3002, %v3074
    %3076 = vmatmul.bf16.gmra.mxu0 %v1233
    %v3077 = vpop.f32.mrf.mxu0
    %v3078 = vadd.f32 %v3005, %v3077
    %v3079 = vpop.f32.mrf.mxu0
    %v3080 = vadd.f32 %v3007, %v3079
    %3081 = vmatmul.bf16.gmra.mxu0 %v1249
    %v3082 = vpop.f32.mrf.mxu0
    %v3083 = vadd.f32 %v3010, %v3082
    %v3084 = vpop.f32.mrf.mxu0
    %v3085 = vadd.f32 %v3012, %v3084
    %3086 = vmatmul.bf16.gmra.mxu0 %v1265
    %v3087 = vpop.f32.mrf.mxu0
    %v3088 = vadd.f32 %v3015, %v3087
    %v3089 = vpop.f32.mrf.mxu0
    %v3090 = vadd.f32 %v3017, %v3089
    %3091 = vmatmul.bf16.gmra.mxu0 %v1281
    %v3092 = vpop.f32.mrf.mxu0
    %v3093 = vadd.f32 %v3020, %v3092
    %v3094 = vpop.f32.mrf.mxu0
    %v3095 = vadd.f32 %v3022, %v3094
    %3096 = vmatmul.bf16.gmra.mxu0 %v1297
    %v3097 = vpop.f32.mrf.mxu0
    %v3098 = vadd.f32 %v3025, %v3097
    %v3099 = vpop.f32.mrf.mxu0
    %v3100 = vadd.f32 %v3027, %v3099
    %3101 = vmatmul.bf16.gmra.mxu0 %v1313
    %v3102 = vpop.f32.mrf.mxu0
    %v3103 = vadd.f32 %v3030, %v3102
    %v3104 = vpop.f32.mrf.mxu0
    %3105 = vdwg.mxu0
    %3106 = vmatpush.bf16.msra.mxu0 %v2380
    %3107 = vmatpush.bf16.msra.mxu0 %v2378
    %3108 = vmatpush.bf16.msra.mxu0 %v2376
    %3109 = vmatpush.bf16.msra.mxu0 %v2374
    %3110 = vmatpush.bf16.msra.mxu0 %v2372
    %3111 = vmatpush.bf16.msra.mxu0 %v2370
    %3112 = vmatpush.bf16.msra.mxu0 %v2368
    %3113 = vmatpush.bf16.msra.mxu0 %v2366
    %3114 = vmatmul.bf16.gmra.mxu0 %v1122
    %v3115 = vpop.f32.mrf.mxu0
    %v3116 = vadd.f32 %v3043, %v3115
    %v3117 = vpop.f32.mrf.mxu0
    %v3118 = vadd.f32 %v3045, %v3117
    %3119 = vmatmul.bf16.gmra.mxu0 %v1138
    %v3120 = vpop.f32.mrf.mxu0
    %v3121 = vadd.f32 %v3048, %v3120
    %v3122 = vpop.f32.mrf.mxu0
    %v3123 = vadd.f32 %v3050, %v3122
    %3124 = vmatmul.bf16.gmra.mxu0 %v1154
    %v3125 = vpop.f32.mrf.mxu0
    %v3126 = vadd.f32 %v3053, %v3125
    %v3127 = vpop.f32.mrf.mxu0
    %v3128 = vadd.f32 %v3055, %v3127
    %3129 = vmatmul.bf16.gmra.mxu0 %v1170
    %v3130 = vpop.f32.mrf.mxu0
    %v3131 = vadd.f32 %v3058, %v3130
    %v3132 = vpop.f32.mrf.mxu0
    %v3133 = vadd.f32 %v3060, %v3132
    %3134 = vmatmul.bf16.gmra.mxu0 %v1186
    %v3135 = vpop.f32.mrf.mxu0
    %v3136 = vadd.f32 %v3063, %v3135
    %v3137 = vpop.f32.mrf.mxu0
    %v3138 = vadd.f32 %v3065, %v3137
    %3139 = vmatmul.bf16.gmra.mxu0 %v1202
    %v3140 = vpop.f32.mrf.mxu0
    %v3141 = vadd.f32 %v3068, %v3140
    %v3142 = vpop.f32.mrf.mxu0
    %v3143 = vadd.f32 %v3070, %v3142
    %3144 = vmatmul.bf16.gmra.mxu0 %v1218
    %v3145 = vpop.f32.mrf.mxu0
    %v3146 = vadd.f32 %v3073, %v3145
    %v3147 = vpop.f32.mrf.mxu0
    %v3148 = vadd.f32 %v3075, %v3147
    %3149 = vmatmul.bf16.gmra.mxu0 %v1234
    %v3150 = vpop.f32.mrf.mxu0
    %v3151 = vadd.f32 %v3078, %v3150
    %v3152 = vpop.f32.mrf.mxu0
    %v3153 = vadd.f32 %v3080, %v3152
    %3154 = vmatmul.bf16.gmra.mxu0 %v1250
    %v3155 = vpop.f32.mrf.mxu0
    %v3156 = vadd.f32 %v3083, %v3155
    %v3157 = vpop.f32.mrf.mxu0
    %v3158 = vadd.f32 %v3085, %v3157
    %3159 = vmatmul.bf16.gmra.mxu0 %v1266
    %v3160 = vpop.f32.mrf.mxu0
    %v3161 = vadd.f32 %v3088, %v3160
    %v3162 = vpop.f32.mrf.mxu0
    %v3163 = vadd.f32 %v3090, %v3162
    %3164 = vmatmul.bf16.gmra.mxu0 %v1282
    %v3165 = vpop.f32.mrf.mxu0
    %v3166 = vadd.f32 %v3093, %v3165
    %v3167 = vpop.f32.mrf.mxu0
    %v3168 = vadd.f32 %v3095, %v3167
    %3169 = vmatmul.bf16.gmra.mxu0 %v1298
    %v3170 = vpop.f32.mrf.mxu0
    %v3171 = vadd.f32 %v3098, %v3170
    %v3172 = vpop.f32.mrf.mxu0
    %v3173 = vadd.f32 %v3100, %v3172
    %3174 = vmatmul.bf16.gmra.mxu0 %v1314
    %v3175 = vpop.f32.mrf.mxu0
    %v3176 = vadd.f32 %v3103, %v3175
    %v3177 = vpop.f32.mrf.mxu0
    %3178 = vdwg.mxu0
    %3179 = vmatpush.bf16.msra.mxu0 %v2396
    %3180 = vmatpush.bf16.msra.mxu0 %v2394
    %3181 = vmatpush.bf16.msra.mxu0 %v2392
    %3182 = vmatpush.bf16.msra.mxu0 %v2390
    %3183 = vmatpush.bf16.msra.mxu0 %v2388
    %3184 = vmatpush.bf16.msra.mxu0 %v2386
    %3185 = vmatpush.bf16.msra.mxu0 %v2384
    %3186 = vmatpush.bf16.msra.mxu0 %v2382
    %3187 = vmatmul.bf16.gmra.mxu0 %v1123
    %v3188 = vpop.f32.mrf.mxu0
    %v3189 = vadd.f32 %v3116, %v3188
    %v3190 = vpop.f32.mrf.mxu0
    %v3191 = vadd.f32 %v3118, %v3190
    %3192 = vmatmul.bf16.gmra.mxu0 %v1139
    %v3193 = vpop.f32.mrf.mxu0
    %v3194 = vadd.f32 %v3121, %v3193
    %v3195 = vpop.f32.mrf.mxu0
    %v3196 = vadd.f32 %v3123, %v3195
    %3197 = vmatmul.bf16.gmra.mxu0 %v1155
    %v3198 = vpop.f32.mrf.mxu0
    %v3199 = vadd.f32 %v3126, %v3198
    %v3200 = vpop.f32.mrf.mxu0
    %v3201 = vadd.f32 %v3128, %v3200
    %3202 = vmatmul.bf16.gmra.mxu0 %v1171
    %v3203 = vpop.f32.mrf.mxu0
    %v3204 = vadd.f32 %v3131, %v3203
    %v3205 = vpop.f32.mrf.mxu0
    %v3206 = vadd.f32 %v3133, %v3205
    %3207 = vmatmul.bf16.gmra.mxu0 %v1187
    %v3208 = vpop.f32.mrf.mxu0
    %v3209 = vadd.f32 %v3136, %v3208
    %v3210 = vpop.f32.mrf.mxu0
    %v3211 = vadd.f32 %v3138, %v3210
    %3212 = vmatmul.bf16.gmra.mxu0 %v1203
    %v3213 = vpop.f32.mrf.mxu0
    %v3214 = vadd.f32 %v3141, %v3213
    %v3215 = vpop.f32.mrf.mxu0
    %v3216 = vadd.f32 %v3143, %v3215
    %3217 = vmatmul.bf16.gmra.mxu0 %v1219
    %v3218 = vpop.f32.mrf.mxu0
    %v3219 = vadd.f32 %v3146, %v3218
    %v3220 = vpop.f32.mrf.mxu0
    %v3221 = vadd.f32 %v3148, %v3220
    %3222 = vmatmul.bf16.gmra.mxu0 %v1235
    %v3223 = vpop.f32.mrf.mxu0
    %v3224 = vadd.f32 %v3151, %v3223
    %v3225 = vpop.f32.mrf.mxu0
    %v3226 = vadd.f32 %v3153, %v3225
    %3227 = vmatmul.bf16.gmra.mxu0 %v1251
    %v3228 = vpop.f32.mrf.mxu0
    %v3229 = vadd.f32 %v3156, %v3228
    %v3230 = vpop.f32.mrf.mxu0
    %v3231 = vadd.f32 %v3158, %v3230
    %3232 = vmatmul.bf16.gmra.mxu0 %v1267
    %v3233 = vpop.f32.mrf.mxu0
    %v3234 = vadd.f32 %v3161, %v3233
    %v3235 = vpop.f32.mrf.mxu0
    %v3236 = vadd.f32 %v3163, %v3235
    %3237 = vmatmul.bf16.gmra.mxu0 %v1283
    %v3238 = vpop.f32.mrf.mxu0
    %v3239 = vadd.f32 %v3166, %v3238
    %v3240 = vpop.f32.mrf.mxu0
    %v3241 = vadd.f32 %v3168, %v3240
    %3242 = vmatmul.bf16.gmra.mxu0 %v1299
    %v3243 = vpop.f32.mrf.mxu0
    %v3244 = vadd.f32 %v3171, %v3243
    %v3245 = vpop.f32.mrf.mxu0
    %v3246 = vadd.f32 %v3173, %v3245
    %3247 = vmatmul.bf16.gmra.mxu0 %v1315
    %v3248 = vpop.f32.mrf.mxu0
    %v3249 = vadd.f32 %v3176, %v3248
    %v3250 = vpop.f32.mrf.mxu0
    %3251 = vdwg.mxu0
    %3252 = vmatpush.bf16.msra.mxu0 %v2412
    %3253 = vmatpush.bf16.msra.mxu0 %v2410
    %3254 = vmatpush.bf16.msra.mxu0 %v2408
    %3255 = vmatpush.bf16.msra.mxu0 %v2406
    %3256 = vmatpush.bf16.msra.mxu0 %v2404
    %3257 = vmatpush.bf16.msra.mxu0 %v2402
    %3258 = vmatpush.bf16.msra.mxu0 %v2400
    %3259 = vmatpush.bf16.msra.mxu0 %v2398
    %3260 = vmatmul.bf16.gmra.mxu0 %v1124
    %v3261 = vpop.f32.mrf.mxu0
    %v3262 = vadd.f32 %v3189, %v3261
    %v3263 = vpop.f32.mrf.mxu0
    %v3264 = vadd.f32 %v3191, %v3263
    %3265 = vmatmul.bf16.gmra.mxu0 %v1140
    %v3266 = vpop.f32.mrf.mxu0
    %v3267 = vadd.f32 %v3194, %v3266
    %v3268 = vpop.f32.mrf.mxu0
    %v3269 = vadd.f32 %v3196, %v3268
    %3270 = vmatmul.bf16.gmra.mxu0 %v1156
    %v3271 = vpop.f32.mrf.mxu0
    %v3272 = vadd.f32 %v3199, %v3271
    %v3273 = vpop.f32.mrf.mxu0
    %v3274 = vadd.f32 %v3201, %v3273
    %3275 = vmatmul.bf16.gmra.mxu0 %v1172
    %v3276 = vpop.f32.mrf.mxu0
    %v3277 = vadd.f32 %v3204, %v3276
    %v3278 = vpop.f32.mrf.mxu0
    %v3279 = vadd.f32 %v3206, %v3278
    %3280 = vmatmul.bf16.gmra.mxu0 %v1188
    %v3281 = vpop.f32.mrf.mxu0
    %v3282 = vadd.f32 %v3209, %v3281
    %v3283 = vpop.f32.mrf.mxu0
    %v3284 = vadd.f32 %v3211, %v3283
    %3285 = vmatmul.bf16.gmra.mxu0 %v1204
    %v3286 = vpop.f32.mrf.mxu0
    %v3287 = vadd.f32 %v3214, %v3286
    %v3288 = vpop.f32.mrf.mxu0
    %v3289 = vadd.f32 %v3216, %v3288
    %3290 = vmatmul.bf16.gmra.mxu0 %v1220
    %v3291 = vpop.f32.mrf.mxu0
    %v3292 = vadd.f32 %v3219, %v3291
    %v3293 = vpop.f32.mrf.mxu0
    %v3294 = vadd.f32 %v3221, %v3293
    %3295 = vmatmul.bf16.gmra.mxu0 %v1236
    %v3296 = vpop.f32.mrf.mxu0
    %v3297 = vadd.f32 %v3224, %v3296
    %v3298 = vpop.f32.mrf.mxu0
    %v3299 = vadd.f32 %v3226, %v3298
    %3300 = vmatmul.bf16.gmra.mxu0 %v1252
    %v3301 = vpop.f32.mrf.mxu0
    %v3302 = vadd.f32 %v3229, %v3301
    %v3303 = vpop.f32.mrf.mxu0
    %v3304 = vadd.f32 %v3231, %v3303
    %3305 = vmatmul.bf16.gmra.mxu0 %v1268
    %v3306 = vpop.f32.mrf.mxu0
    %v3307 = vadd.f32 %v3234, %v3306
    %v3308 = vpop.f32.mrf.mxu0
    %v3309 = vadd.f32 %v3236, %v3308
    %3310 = vmatmul.bf16.gmra.mxu0 %v1284
    %v3311 = vpop.f32.mrf.mxu0
    %v3312 = vadd.f32 %v3239, %v3311
    %v3313 = vpop.f32.mrf.mxu0
    %v3314 = vadd.f32 %v3241, %v3313
    %3315 = vmatmul.bf16.gmra.mxu0 %v1300
    %v3316 = vpop.f32.mrf.mxu0
    %v3317 = vadd.f32 %v3244, %v3316
    %v3318 = vpop.f32.mrf.mxu0
    %v3319 = vadd.f32 %v3246, %v3318
    %3320 = vmatmul.bf16.gmra.mxu0 %v1316
    %v3321 = vpop.f32.mrf.mxu0
    %v3322 = vadd.f32 %v3249, %v3321
    %v3323 = vpop.f32.mrf.mxu0
    %3324 = vdwg.mxu0
    %3325 = vmatpush.bf16.msra.mxu0 %v2428
    %3326 = vmatpush.bf16.msra.mxu0 %v2426
    %3327 = vmatpush.bf16.msra.mxu0 %v2424
    %3328 = vmatpush.bf16.msra.mxu0 %v2422
    %3329 = vmatpush.bf16.msra.mxu0 %v2420
    %3330 = vmatpush.bf16.msra.mxu0 %v2418
    %3331 = vmatpush.bf16.msra.mxu0 %v2416
    %3332 = vmatpush.bf16.msra.mxu0 %v2414
    %3333 = vmatmul.bf16.gmra.mxu0 %v1125
    %v3334 = vpop.f32.mrf.mxu0
    %v3335 = vadd.f32 %v3262, %v3334
    %v3336 = vpop.f32.mrf.mxu0
    %v3337 = vadd.f32 %v3264, %v3336
    %3338 = vmatmul.bf16.gmra.mxu0 %v1141
    %v3339 = vpop.f32.mrf.mxu0
    %v3340 = vadd.f32 %v3267, %v3339
    %v3341 = vpop.f32.mrf.mxu0
    %v3342 = vadd.f32 %v3269, %v3341
    %3343 = vmatmul.bf16.gmra.mxu0 %v1157
    %v3344 = vpop.f32.mrf.mxu0
    %v3345 = vadd.f32 %v3272, %v3344
    %v3346 = vpop.f32.mrf.mxu0
    %v3347 = vadd.f32 %v3274, %v3346
    %3348 = vmatmul.bf16.gmra.mxu0 %v1173
    %v3349 = vpop.f32.mrf.mxu0
    %v3350 = vadd.f32 %v3277, %v3349
    %v3351 = vpop.f32.mrf.mxu0
    %v3352 = vadd.f32 %v3279, %v3351
    %3353 = vmatmul.bf16.gmra.mxu0 %v1189
    %v3354 = vpop.f32.mrf.mxu0
    %v3355 = vadd.f32 %v3282, %v3354
    %v3356 = vpop.f32.mrf.mxu0
    %v3357 = vadd.f32 %v3284, %v3356
    %3358 = vmatmul.bf16.gmra.mxu0 %v1205
    %v3359 = vpop.f32.mrf.mxu0
    %v3360 = vadd.f32 %v3287, %v3359
    %v3361 = vpop.f32.mrf.mxu0
    %v3362 = vadd.f32 %v3289, %v3361
    %3363 = vmatmul.bf16.gmra.mxu0 %v1221
    %v3364 = vpop.f32.mrf.mxu0
    %v3365 = vadd.f32 %v3292, %v3364
    %v3366 = vpop.f32.mrf.mxu0
    %v3367 = vadd.f32 %v3294, %v3366
    %3368 = vmatmul.bf16.gmra.mxu0 %v1237
    %v3369 = vpop.f32.mrf.mxu0
    %v3370 = vadd.f32 %v3297, %v3369
    %v3371 = vpop.f32.mrf.mxu0
    %v3372 = vadd.f32 %v3299, %v3371
    %3373 = vmatmul.bf16.gmra.mxu0 %v1253
    %v3374 = vpop.f32.mrf.mxu0
    %v3375 = vadd.f32 %v3302, %v3374
    %v3376 = vpop.f32.mrf.mxu0
    %v3377 = vadd.f32 %v3304, %v3376
    %3378 = vmatmul.bf16.gmra.mxu0 %v1269
    %v3379 = vpop.f32.mrf.mxu0
    %v3380 = vadd.f32 %v3307, %v3379
    %v3381 = vpop.f32.mrf.mxu0
    %v3382 = vadd.f32 %v3309, %v3381
    %3383 = vmatmul.bf16.gmra.mxu0 %v1285
    %v3384 = vpop.f32.mrf.mxu0
    %v3385 = vadd.f32 %v3312, %v3384
    %v3386 = vpop.f32.mrf.mxu0
    %v3387 = vadd.f32 %v3314, %v3386
    %3388 = vmatmul.bf16.gmra.mxu0 %v1301
    %v3389 = vpop.f32.mrf.mxu0
    %v3390 = vadd.f32 %v3317, %v3389
    %v3391 = vpop.f32.mrf.mxu0
    %v3392 = vadd.f32 %v3319, %v3391
    %3393 = vmatmul.bf16.gmra.mxu0 %v1317
    %v3394 = vpop.f32.mrf.mxu0
    %v3395 = vadd.f32 %v3322, %v3394
    %v3396 = vpop.f32.mrf.mxu0
    %3397 = vdwg.mxu0
    %3398 = vmatpush.bf16.msra.mxu0 %v2444
    %3399 = vmatpush.bf16.msra.mxu0 %v2442
    %3400 = vmatpush.bf16.msra.mxu0 %v2440
    %3401 = vmatpush.bf16.msra.mxu0 %v2438
    %3402 = vmatpush.bf16.msra.mxu0 %v2436
    %3403 = vmatpush.bf16.msra.mxu0 %v2434
    %3404 = vmatpush.bf16.msra.mxu0 %v2432
    %3405 = vmatpush.bf16.msra.mxu0 %v2430
    %3406 = vmatmul.bf16.gmra.mxu0 %v1126
    %v3407 = vpop.f32.mrf.mxu0
    %v3408 = vadd.f32 %v3335, %v3407
    %v3409 = vpop.f32.mrf.mxu0
    %v3410 = vadd.f32 %v3337, %v3409
    %3411 = vmatmul.bf16.gmra.mxu0 %v1142
    %v3412 = vpop.f32.mrf.mxu0
    %v3413 = vadd.f32 %v3340, %v3412
    %v3414 = vpop.f32.mrf.mxu0
    %v3415 = vadd.f32 %v3342, %v3414
    %3416 = vmatmul.bf16.gmra.mxu0 %v1158
    %v3417 = vpop.f32.mrf.mxu0
    %v3418 = vadd.f32 %v3345, %v3417
    %v3419 = vpop.f32.mrf.mxu0
    %v3420 = vadd.f32 %v3347, %v3419
    %3421 = vmatmul.bf16.gmra.mxu0 %v1174
    %v3422 = vpop.f32.mrf.mxu0
    %v3423 = vadd.f32 %v3350, %v3422
    %v3424 = vpop.f32.mrf.mxu0
    %v3425 = vadd.f32 %v3352, %v3424
    %3426 = vmatmul.bf16.gmra.mxu0 %v1190
    %v3427 = vpop.f32.mrf.mxu0
    %v3428 = vadd.f32 %v3355, %v3427
    %v3429 = vpop.f32.mrf.mxu0
    %v3430 = vadd.f32 %v3357, %v3429
    %3431 = vmatmul.bf16.gmra.mxu0 %v1206
    %v3432 = vpop.f32.mrf.mxu0
    %v3433 = vadd.f32 %v3360, %v3432
    %v3434 = vpop.f32.mrf.mxu0
    %v3435 = vadd.f32 %v3362, %v3434
    %3436 = vmatmul.bf16.gmra.mxu0 %v1222
    %v3437 = vpop.f32.mrf.mxu0
    %v3438 = vadd.f32 %v3365, %v3437
    %v3439 = vpop.f32.mrf.mxu0
    %v3440 = vadd.f32 %v3367, %v3439
    %3441 = vmatmul.bf16.gmra.mxu0 %v1238
    %v3442 = vpop.f32.mrf.mxu0
    %v3443 = vadd.f32 %v3370, %v3442
    %v3444 = vpop.f32.mrf.mxu0
    %v3445 = vadd.f32 %v3372, %v3444
    %3446 = vmatmul.bf16.gmra.mxu0 %v1254
    %v3447 = vpop.f32.mrf.mxu0
    %v3448 = vadd.f32 %v3375, %v3447
    %v3449 = vpop.f32.mrf.mxu0
    %v3450 = vadd.f32 %v3377, %v3449
    %3451 = vmatmul.bf16.gmra.mxu0 %v1270
    %v3452 = vpop.f32.mrf.mxu0
    %v3453 = vadd.f32 %v3380, %v3452
    %v3454 = vpop.f32.mrf.mxu0
    %v3455 = vadd.f32 %v3382, %v3454
    %3456 = vmatmul.bf16.gmra.mxu0 %v1286
    %v3457 = vpop.f32.mrf.mxu0
    %v3458 = vadd.f32 %v3385, %v3457
    %v3459 = vpop.f32.mrf.mxu0
    %v3460 = vadd.f32 %v3387, %v3459
    %3461 = vmatmul.bf16.gmra.mxu0 %v1302
    %v3462 = vpop.f32.mrf.mxu0
    %v3463 = vadd.f32 %v3390, %v3462
    %v3464 = vpop.f32.mrf.mxu0
    %v3465 = vadd.f32 %v3392, %v3464
    %3466 = vmatmul.bf16.gmra.mxu0 %v1318
    %v3467 = vpop.f32.mrf.mxu0
    %v3468 = vadd.f32 %v3395, %v3467
    %v3469 = vpop.f32.mrf.mxu0
    %3470 = vdwg.mxu0
    %3471 = vmatpush.bf16.msra.mxu0 %v2460
    %3472 = vmatpush.bf16.msra.mxu0 %v2458
    %3473 = vmatpush.bf16.msra.mxu0 %v2456
    %3474 = vmatpush.bf16.msra.mxu0 %v2454
    %3475 = vmatpush.bf16.msra.mxu0 %v2452
    %3476 = vmatpush.bf16.msra.mxu0 %v2450
    %3477 = vmatpush.bf16.msra.mxu0 %v2448
    %3478 = vmatpush.bf16.msra.mxu0 %v2446
    %3479 = vmatmul.bf16.gmra.mxu0 %v1127
    %v3480 = vpop.f32.mrf.mxu0
    %v3481 = vadd.f32 %v3408, %v3480
    %v3482 = vpop.f32.mrf.mxu0
    %v3483 = vadd.f32 %v3410, %v3482
    %3484 = vmatmul.bf16.gmra.mxu0 %v1143
    %v3485 = vpop.f32.mrf.mxu0
    %v3486 = vadd.f32 %v3413, %v3485
    %v3487 = vpop.f32.mrf.mxu0
    %v3488 = vadd.f32 %v3415, %v3487
    %3489 = vmatmul.bf16.gmra.mxu0 %v1159
    %v3490 = vpop.f32.mrf.mxu0
    %v3491 = vadd.f32 %v3418, %v3490
    %v3492 = vpop.f32.mrf.mxu0
    %v3493 = vadd.f32 %v3420, %v3492
    %3494 = vmatmul.bf16.gmra.mxu0 %v1175
    %v3495 = vpop.f32.mrf.mxu0
    %v3496 = vadd.f32 %v3423, %v3495
    %v3497 = vpop.f32.mrf.mxu0
    %v3498 = vadd.f32 %v3425, %v3497
    %3499 = vmatmul.bf16.gmra.mxu0 %v1191
    %v3500 = vpop.f32.mrf.mxu0
    %v3501 = vadd.f32 %v3428, %v3500
    %v3502 = vpop.f32.mrf.mxu0
    %v3503 = vadd.f32 %v3430, %v3502
    %3504 = vmatmul.bf16.gmra.mxu0 %v1207
    %v3505 = vpop.f32.mrf.mxu0
    %v3506 = vadd.f32 %v3433, %v3505
    %v3507 = vpop.f32.mrf.mxu0
    %v3508 = vadd.f32 %v3435, %v3507
    %3509 = vmatmul.bf16.gmra.mxu0 %v1223
    %v3510 = vpop.f32.mrf.mxu0
    %v3511 = vadd.f32 %v3438, %v3510
    %v3512 = vpop.f32.mrf.mxu0
    %v3513 = vadd.f32 %v3440, %v3512
    %3514 = vmatmul.bf16.gmra.mxu0 %v1239
    %v3515 = vpop.f32.mrf.mxu0
    %v3516 = vadd.f32 %v3443, %v3515
    %v3517 = vpop.f32.mrf.mxu0
    %v3518 = vadd.f32 %v3445, %v3517
    %3519 = vmatmul.bf16.gmra.mxu0 %v1255
    %v3520 = vpop.f32.mrf.mxu0
    %v3521 = vadd.f32 %v3448, %v3520
    %v3522 = vpop.f32.mrf.mxu0
    %v3523 = vadd.f32 %v3450, %v3522
    %3524 = vmatmul.bf16.gmra.mxu0 %v1271
    %v3525 = vpop.f32.mrf.mxu0
    %v3526 = vadd.f32 %v3453, %v3525
    %v3527 = vpop.f32.mrf.mxu0
    %v3528 = vadd.f32 %v3455, %v3527
    %3529 = vmatmul.bf16.gmra.mxu0 %v1287
    %v3530 = vpop.f32.mrf.mxu0
    %v3531 = vadd.f32 %v3458, %v3530
    %v3532 = vpop.f32.mrf.mxu0
    %v3533 = vadd.f32 %v3460, %v3532
    %3534 = vmatmul.bf16.gmra.mxu0 %v1303
    %v3535 = vpop.f32.mrf.mxu0
    %v3536 = vadd.f32 %v3463, %v3535
    %v3537 = vpop.f32.mrf.mxu0
    %v3538 = vadd.f32 %v3465, %v3537
    %3539 = vmatmul.bf16.gmra.mxu0 %v1319
    %v3540 = vpop.f32.mrf.mxu0
    %v3541 = vadd.f32 %v3468, %v3540
    %v3542 = vpop.f32.mrf.mxu0
    %3543 = vdwg.mxu0
    %3544 = vmatpush.bf16.msra.mxu0 %v2476
    %3545 = vmatpush.bf16.msra.mxu0 %v2474
    %3546 = vmatpush.bf16.msra.mxu0 %v2472
    %3547 = vmatpush.bf16.msra.mxu0 %v2470
    %3548 = vmatpush.bf16.msra.mxu0 %v2468
    %3549 = vmatpush.bf16.msra.mxu0 %v2466
    %3550 = vmatpush.bf16.msra.mxu0 %v2464
    %3551 = vmatpush.bf16.msra.mxu0 %v2462
    %3552 = vmatmul.bf16.gmra.mxu0 %v1128
    %v3553 = vpop.f32.mrf.mxu0
    %v3554 = vadd.f32 %v3481, %v3553
    %v3555 = vpop.f32.mrf.mxu0
    %v3556 = vadd.f32 %v3483, %v3555
    %3557 = vmatmul.bf16.gmra.mxu0 %v1144
    %v3558 = vpop.f32.mrf.mxu0
    %v3559 = vadd.f32 %v3486, %v3558
    %v3560 = vpop.f32.mrf.mxu0
    %v3561 = vadd.f32 %v3488, %v3560
    %3562 = vmatmul.bf16.gmra.mxu0 %v1160
    %v3563 = vpop.f32.mrf.mxu0
    %v3564 = vadd.f32 %v3491, %v3563
    %v3565 = vpop.f32.mrf.mxu0
    %v3566 = vadd.f32 %v3493, %v3565
    %3567 = vmatmul.bf16.gmra.mxu0 %v1176
    %v3568 = vpop.f32.mrf.mxu0
    %v3569 = vadd.f32 %v3496, %v3568
    %v3570 = vpop.f32.mrf.mxu0
    %v3571 = vadd.f32 %v3498, %v3570
    %3572 = vmatmul.bf16.gmra.mxu0 %v1192
    %v3573 = vpop.f32.mrf.mxu0
    %v3574 = vadd.f32 %v3501, %v3573
    %v3575 = vpop.f32.mrf.mxu0
    %v3576 = vadd.f32 %v3503, %v3575
    %3577 = vmatmul.bf16.gmra.mxu0 %v1208
    %v3578 = vpop.f32.mrf.mxu0
    %v3579 = vadd.f32 %v3506, %v3578
    %v3580 = vpop.f32.mrf.mxu0
    %v3581 = vadd.f32 %v3508, %v3580
    %3582 = vmatmul.bf16.gmra.mxu0 %v1224
    %v3583 = vpop.f32.mrf.mxu0
    %v3584 = vadd.f32 %v3511, %v3583
    %v3585 = vpop.f32.mrf.mxu0
    %v3586 = vadd.f32 %v3513, %v3585
    %3587 = vmatmul.bf16.gmra.mxu0 %v1240
    %v3588 = vpop.f32.mrf.mxu0
    %v3589 = vadd.f32 %v3516, %v3588
    %v3590 = vpop.f32.mrf.mxu0
    %v3591 = vadd.f32 %v3518, %v3590
    %3592 = vmatmul.bf16.gmra.mxu0 %v1256
    %v3593 = vpop.f32.mrf.mxu0
    %v3594 = vadd.f32 %v3521, %v3593
    %v3595 = vpop.f32.mrf.mxu0
    %v3596 = vadd.f32 %v3523, %v3595
    %3597 = vmatmul.bf16.gmra.mxu0 %v1272
    %v3598 = vpop.f32.mrf.mxu0
    %v3599 = vadd.f32 %v3526, %v3598
    %v3600 = vpop.f32.mrf.mxu0
    %v3601 = vadd.f32 %v3528, %v3600
    %3602 = vmatmul.bf16.gmra.mxu0 %v1288
    %v3603 = vpop.f32.mrf.mxu0
    %v3604 = vadd.f32 %v3531, %v3603
    %v3605 = vpop.f32.mrf.mxu0
    %v3606 = vadd.f32 %v3533, %v3605
    %3607 = vmatmul.bf16.gmra.mxu0 %v1304
    %v3608 = vpop.f32.mrf.mxu0
    %v3609 = vadd.f32 %v3536, %v3608
    %v3610 = vpop.f32.mrf.mxu0
    %v3611 = vadd.f32 %v3538, %v3610
    %3612 = vmatmul.bf16.gmra.mxu0 %v1320
    %v3613 = vpop.f32.mrf.mxu0
    %v3614 = vadd.f32 %v3541, %v3613
    %v3615 = vpop.f32.mrf.mxu0
    %3616 = vdwg.mxu0
    %3617 = vmatpush.bf16.msra.mxu0 %v2492
    %3618 = vmatpush.bf16.msra.mxu0 %v2490
    %3619 = vmatpush.bf16.msra.mxu0 %v2488
    %3620 = vmatpush.bf16.msra.mxu0 %v2486
    %3621 = vmatpush.bf16.msra.mxu0 %v2484
    %3622 = vmatpush.bf16.msra.mxu0 %v2482
    %3623 = vmatpush.bf16.msra.mxu0 %v2480
    %3624 = vmatpush.bf16.msra.mxu0 %v2478
    %3625 = vmatmul.bf16.gmra.mxu0 %v1129
    %v3626 = vpop.f32.mrf.mxu0
    %v3627 = vadd.f32 %v3554, %v3626
    %v3628 = vpop.f32.mrf.mxu0
    %v3629 = vadd.f32 %v3556, %v3628
    %3630 = vmatmul.bf16.gmra.mxu0 %v1145
    %v3631 = vpop.f32.mrf.mxu0
    %v3632 = vadd.f32 %v3559, %v3631
    %v3633 = vpop.f32.mrf.mxu0
    %v3634 = vadd.f32 %v3561, %v3633
    %3635 = vmatmul.bf16.gmra.mxu0 %v1161
    %v3636 = vpop.f32.mrf.mxu0
    %v3637 = vadd.f32 %v3564, %v3636
    %v3638 = vpop.f32.mrf.mxu0
    %v3639 = vadd.f32 %v3566, %v3638
    %3640 = vmatmul.bf16.gmra.mxu0 %v1177
    %v3641 = vpop.f32.mrf.mxu0
    %v3642 = vadd.f32 %v3569, %v3641
    %v3643 = vpop.f32.mrf.mxu0
    %v3644 = vadd.f32 %v3571, %v3643
    %3645 = vmatmul.bf16.gmra.mxu0 %v1193
    %v3646 = vpop.f32.mrf.mxu0
    %v3647 = vadd.f32 %v3574, %v3646
    %v3648 = vpop.f32.mrf.mxu0
    %v3649 = vadd.f32 %v3576, %v3648
    %3650 = vmatmul.bf16.gmra.mxu0 %v1209
    %v3651 = vpop.f32.mrf.mxu0
    %v3652 = vadd.f32 %v3579, %v3651
    %v3653 = vpop.f32.mrf.mxu0
    %v3654 = vadd.f32 %v3581, %v3653
    %3655 = vmatmul.bf16.gmra.mxu0 %v1225
    %v3656 = vpop.f32.mrf.mxu0
    %v3657 = vadd.f32 %v3584, %v3656
    %v3658 = vpop.f32.mrf.mxu0
    %v3659 = vadd.f32 %v3586, %v3658
    %3660 = vmatmul.bf16.gmra.mxu0 %v1241
    %v3661 = vpop.f32.mrf.mxu0
    %v3662 = vadd.f32 %v3589, %v3661
    %v3663 = vpop.f32.mrf.mxu0
    %v3664 = vadd.f32 %v3591, %v3663
    %3665 = vmatmul.bf16.gmra.mxu0 %v1257
    %v3666 = vpop.f32.mrf.mxu0
    %v3667 = vadd.f32 %v3594, %v3666
    %v3668 = vpop.f32.mrf.mxu0
    %v3669 = vadd.f32 %v3596, %v3668
    %3670 = vmatmul.bf16.gmra.mxu0 %v1273
    %v3671 = vpop.f32.mrf.mxu0
    %v3672 = vadd.f32 %v3599, %v3671
    %v3673 = vpop.f32.mrf.mxu0
    %v3674 = vadd.f32 %v3601, %v3673
    %3675 = vmatmul.bf16.gmra.mxu0 %v1289
    %v3676 = vpop.f32.mrf.mxu0
    %v3677 = vadd.f32 %v3604, %v3676
    %v3678 = vpop.f32.mrf.mxu0
    %v3679 = vadd.f32 %v3606, %v3678
    %3680 = vmatmul.bf16.gmra.mxu0 %v1305
    %v3681 = vpop.f32.mrf.mxu0
    %v3682 = vadd.f32 %v3609, %v3681
    %v3683 = vpop.f32.mrf.mxu0
    %v3684 = vadd.f32 %v3611, %v3683
    %3685 = vmatmul.bf16.gmra.mxu0 %v1321
    %v3686 = vpop.f32.mrf.mxu0
    %v3687 = vadd.f32 %v3614, %v3686
    %v3688 = vpop.f32.mrf.mxu0
    %3689 = vdwg.mxu0
    %3690 = vmatpush.bf16.msra.mxu0 %v2508
    %3691 = vmatpush.bf16.msra.mxu0 %v2506
    %3692 = vmatpush.bf16.msra.mxu0 %v2504
    %3693 = vmatpush.bf16.msra.mxu0 %v2502
    %3694 = vmatpush.bf16.msra.mxu0 %v2500
    %3695 = vmatpush.bf16.msra.mxu0 %v2498
    %3696 = vmatpush.bf16.msra.mxu0 %v2496
    %3697 = vmatpush.bf16.msra.mxu0 %v2494
    %3698 = vmatmul.bf16.gmra.mxu0 %v1130
    %v3699 = vpop.f32.mrf.mxu0
    %v3700 = vadd.f32 %v3627, %v3699
    %v3701 = vpop.f32.mrf.mxu0
    %v3702 = vadd.f32 %v3629, %v3701
    %3703 = vmatmul.bf16.gmra.mxu0 %v1146
    %v3704 = vpop.f32.mrf.mxu0
    %v3705 = vadd.f32 %v3632, %v3704
    %v3706 = vpop.f32.mrf.mxu0
    %v3707 = vadd.f32 %v3634, %v3706
    %3708 = vmatmul.bf16.gmra.mxu0 %v1162
    %v3709 = vpop.f32.mrf.mxu0
    %v3710 = vadd.f32 %v3637, %v3709
    %v3711 = vpop.f32.mrf.mxu0
    %v3712 = vadd.f32 %v3639, %v3711
    %3713 = vmatmul.bf16.gmra.mxu0 %v1178
    %v3714 = vpop.f32.mrf.mxu0
    %v3715 = vadd.f32 %v3642, %v3714
    %v3716 = vpop.f32.mrf.mxu0
    %v3717 = vadd.f32 %v3644, %v3716
    %3718 = vmatmul.bf16.gmra.mxu0 %v1194
    %v3719 = vpop.f32.mrf.mxu0
    %v3720 = vadd.f32 %v3647, %v3719
    %v3721 = vpop.f32.mrf.mxu0
    %v3722 = vadd.f32 %v3649, %v3721
    %3723 = vmatmul.bf16.gmra.mxu0 %v1210
    %v3724 = vpop.f32.mrf.mxu0
    %v3725 = vadd.f32 %v3652, %v3724
    %v3726 = vpop.f32.mrf.mxu0
    %v3727 = vadd.f32 %v3654, %v3726
    %3728 = vmatmul.bf16.gmra.mxu0 %v1226
    %v3729 = vpop.f32.mrf.mxu0
    %v3730 = vadd.f32 %v3657, %v3729
    %v3731 = vpop.f32.mrf.mxu0
    %v3732 = vadd.f32 %v3659, %v3731
    %3733 = vmatmul.bf16.gmra.mxu0 %v1242
    %v3734 = vpop.f32.mrf.mxu0
    %v3735 = vadd.f32 %v3662, %v3734
    %v3736 = vpop.f32.mrf.mxu0
    %v3737 = vadd.f32 %v3664, %v3736
    %3738 = vmatmul.bf16.gmra.mxu0 %v1258
    %v3739 = vpop.f32.mrf.mxu0
    %v3740 = vadd.f32 %v3667, %v3739
    %v3741 = vpop.f32.mrf.mxu0
    %v3742 = vadd.f32 %v3669, %v3741
    %3743 = vmatmul.bf16.gmra.mxu0 %v1274
    %v3744 = vpop.f32.mrf.mxu0
    %v3745 = vadd.f32 %v3672, %v3744
    %v3746 = vpop.f32.mrf.mxu0
    %v3747 = vadd.f32 %v3674, %v3746
    %3748 = vmatmul.bf16.gmra.mxu0 %v1290
    %v3749 = vpop.f32.mrf.mxu0
    %v3750 = vadd.f32 %v3677, %v3749
    %v3751 = vpop.f32.mrf.mxu0
    %v3752 = vadd.f32 %v3679, %v3751
    %3753 = vmatmul.bf16.gmra.mxu0 %v1306
    %v3754 = vpop.f32.mrf.mxu0
    %v3755 = vadd.f32 %v3682, %v3754
    %v3756 = vpop.f32.mrf.mxu0
    %v3757 = vadd.f32 %v3684, %v3756
    %3758 = vmatmul.bf16.gmra.mxu0 %v1322
    %v3759 = vpop.f32.mrf.mxu0
    %v3760 = vadd.f32 %v3687, %v3759
    %v3761 = vpop.f32.mrf.mxu0
    %3762 = vdwg.mxu0
    %3763 = vmatpush.bf16.msra.mxu0 %v2524
    %3764 = vmatpush.bf16.msra.mxu0 %v2522
    %3765 = vmatpush.bf16.msra.mxu0 %v2520
    %3766 = vmatpush.bf16.msra.mxu0 %v2518
    %3767 = vmatpush.bf16.msra.mxu0 %v2516
    %3768 = vmatpush.bf16.msra.mxu0 %v2514
    %3769 = vmatpush.bf16.msra.mxu0 %v2512
    %3770 = vmatpush.bf16.msra.mxu0 %v2510
    %3771 = vmatmul.bf16.gmra.mxu0 %v1131
    %v3772 = vpop.f32.mrf.mxu0
    %v3773 = vadd.f32 %v3700, %v3772
    %v3774 = vpop.f32.mrf.mxu0
    %v3775 = vadd.f32 %v3702, %v3774
    %3776 = vmatmul.bf16.gmra.mxu0 %v1147
    %v3777 = vpop.f32.mrf.mxu0
    %v3778 = vadd.f32 %v3705, %v3777
    %v3779 = vpop.f32.mrf.mxu0
    %v3780 = vadd.f32 %v3707, %v3779
    %3781 = vmatmul.bf16.gmra.mxu0 %v1163
    %v3782 = vpop.f32.mrf.mxu0
    %v3783 = vadd.f32 %v3710, %v3782
    %v3784 = vpop.f32.mrf.mxu0
    %v3785 = vadd.f32 %v3712, %v3784
    %3786 = vmatmul.bf16.gmra.mxu0 %v1179
    %v3787 = vpop.f32.mrf.mxu0
    %v3788 = vadd.f32 %v3715, %v3787
    %v3789 = vpop.f32.mrf.mxu0
    %v3790 = vadd.f32 %v3717, %v3789
    %3791 = vmatmul.bf16.gmra.mxu0 %v1195
    %v3792 = vpop.f32.mrf.mxu0
    %v3793 = vadd.f32 %v3720, %v3792
    %v3794 = vpop.f32.mrf.mxu0
    %v3795 = vadd.f32 %v3722, %v3794
    %3796 = vmatmul.bf16.gmra.mxu0 %v1211
    %v3797 = vpop.f32.mrf.mxu0
    %v3798 = vadd.f32 %v3725, %v3797
    %v3799 = vpop.f32.mrf.mxu0
    %v3800 = vadd.f32 %v3727, %v3799
    %3801 = vmatmul.bf16.gmra.mxu0 %v1227
    %v3802 = vpop.f32.mrf.mxu0
    %v3803 = vadd.f32 %v3730, %v3802
    %v3804 = vpop.f32.mrf.mxu0
    %v3805 = vadd.f32 %v3732, %v3804
    %3806 = vmatmul.bf16.gmra.mxu0 %v1243
    %v3807 = vpop.f32.mrf.mxu0
    %v3808 = vadd.f32 %v3735, %v3807
    %v3809 = vpop.f32.mrf.mxu0
    %v3810 = vadd.f32 %v3737, %v3809
    %3811 = vmatmul.bf16.gmra.mxu0 %v1259
    %v3812 = vpop.f32.mrf.mxu0
    %v3813 = vadd.f32 %v3740, %v3812
    %v3814 = vpop.f32.mrf.mxu0
    %v3815 = vadd.f32 %v3742, %v3814
    %3816 = vmatmul.bf16.gmra.mxu0 %v1275
    %v3817 = vpop.f32.mrf.mxu0
    %v3818 = vadd.f32 %v3745, %v3817
    %v3819 = vpop.f32.mrf.mxu0
    %v3820 = vadd.f32 %v3747, %v3819
    %3821 = vmatmul.bf16.gmra.mxu0 %v1291
    %v3822 = vpop.f32.mrf.mxu0
    %v3823 = vadd.f32 %v3750, %v3822
    %v3824 = vpop.f32.mrf.mxu0
    %v3825 = vadd.f32 %v3752, %v3824
    %3826 = vmatmul.bf16.gmra.mxu0 %v1307
    %v3827 = vpop.f32.mrf.mxu0
    %v3828 = vadd.f32 %v3755, %v3827
    %v3829 = vpop.f32.mrf.mxu0
    %v3830 = vadd.f32 %v3757, %v3829
    %3831 = vmatmul.bf16.gmra.mxu0 %v1323
    %v3832 = vpop.f32.mrf.mxu0
    %v3833 = vadd.f32 %v3760, %v3832
    %v3834 = vpop.f32.mrf.mxu0
    %3835 = vdwg.mxu0
    %3836 = vmatpush.bf16.msra.mxu0 %v2540
    %3837 = vmatpush.bf16.msra.mxu0 %v2538
    %3838 = vmatpush.bf16.msra.mxu0 %v2536
    %3839 = vmatpush.bf16.msra.mxu0 %v2534
    %3840 = vmatpush.bf16.msra.mxu0 %v2532
    %3841 = vmatpush.bf16.msra.mxu0 %v2530
    %3842 = vmatpush.bf16.msra.mxu0 %v2528
    %3843 = vmatpush.bf16.msra.mxu0 %v2526
    %3844 = vmatmul.bf16.gmra.mxu0 %v1132
    %v3845 = vpop.f32.mrf.mxu0
    %v3846 = vadd.f32 %v3773, %v3845
    %v3847 = vpop.f32.mrf.mxu0
    %v3848 = vadd.f32 %v3775, %v3847
    %3849 = vmatmul.bf16.gmra.mxu0 %v1148
    %v3850 = vpop.f32.mrf.mxu0
    %v3851 = vadd.f32 %v3778, %v3850
    %v3852 = vpop.f32.mrf.mxu0
    %v3853 = vadd.f32 %v3780, %v3852
    %3854 = vmatmul.bf16.gmra.mxu0 %v1164
    %v3855 = vpop.f32.mrf.mxu0
    %v3856 = vadd.f32 %v3783, %v3855
    %v3857 = vpop.f32.mrf.mxu0
    %v3858 = vadd.f32 %v3785, %v3857
    %3859 = vmatmul.bf16.gmra.mxu0 %v1180
    %v3860 = vpop.f32.mrf.mxu0
    %v3861 = vadd.f32 %v3788, %v3860
    %v3862 = vpop.f32.mrf.mxu0
    %v3863 = vadd.f32 %v3790, %v3862
    %3864 = vmatmul.bf16.gmra.mxu0 %v1196
    %v3865 = vpop.f32.mrf.mxu0
    %v3866 = vadd.f32 %v3793, %v3865
    %v3867 = vpop.f32.mrf.mxu0
    %v3868 = vadd.f32 %v3795, %v3867
    %3869 = vmatmul.bf16.gmra.mxu0 %v1212
    %v3870 = vpop.f32.mrf.mxu0
    %v3871 = vadd.f32 %v3798, %v3870
    %v3872 = vpop.f32.mrf.mxu0
    %v3873 = vadd.f32 %v3800, %v3872
    %3874 = vmatmul.bf16.gmra.mxu0 %v1228
    %v3875 = vpop.f32.mrf.mxu0
    %v3876 = vadd.f32 %v3803, %v3875
    %v3877 = vpop.f32.mrf.mxu0
    %v3878 = vadd.f32 %v3805, %v3877
    %3879 = vmatmul.bf16.gmra.mxu0 %v1244
    %v3880 = vpop.f32.mrf.mxu0
    %v3881 = vadd.f32 %v3808, %v3880
    %v3882 = vpop.f32.mrf.mxu0
    %v3883 = vadd.f32 %v3810, %v3882
    %3884 = vmatmul.bf16.gmra.mxu0 %v1260
    %v3885 = vpop.f32.mrf.mxu0
    %v3886 = vadd.f32 %v3813, %v3885
    %v3887 = vpop.f32.mrf.mxu0
    %v3888 = vadd.f32 %v3815, %v3887
    %3889 = vmatmul.bf16.gmra.mxu0 %v1276
    %v3890 = vpop.f32.mrf.mxu0
    %v3891 = vadd.f32 %v3818, %v3890
    %v3892 = vpop.f32.mrf.mxu0
    %v3893 = vadd.f32 %v3820, %v3892
    %3894 = vmatmul.bf16.gmra.mxu0 %v1292
    %v3895 = vpop.f32.mrf.mxu0
    %v3896 = vadd.f32 %v3823, %v3895
    %v3897 = vpop.f32.mrf.mxu0
    %v3898 = vadd.f32 %v3825, %v3897
    %3899 = vmatmul.bf16.gmra.mxu0 %v1308
    %v3900 = vpop.f32.mrf.mxu0
    %v3901 = vadd.f32 %v3828, %v3900
    %v3902 = vpop.f32.mrf.mxu0
    %v3903 = vadd.f32 %v3830, %v3902
    %3904 = vmatmul.bf16.gmra.mxu0 %v1324
    %v3905 = vpop.f32.mrf.mxu0
    %v3906 = vadd.f32 %v3833, %v3905
    %v3907 = vpop.f32.mrf.mxu0
    %3908 = vdwg.mxu0
    %3909 = vmatpush.bf16.msra.mxu0 %v2556
    %3910 = vmatpush.bf16.msra.mxu0 %v2554
    %3911 = vmatpush.bf16.msra.mxu0 %v2552
    %3912 = vmatpush.bf16.msra.mxu0 %v2550
    %3913 = vmatpush.bf16.msra.mxu0 %v2548
    %3914 = vmatpush.bf16.msra.mxu0 %v2546
    %3915 = vmatpush.bf16.msra.mxu0 %v2544
    %3916 = vmatpush.bf16.msra.mxu0 %v2542
    %3917 = vmatmul.bf16.gmra.mxu0 %v1133
    %v3918 = vpop.f32.mrf.mxu0
    %v3919 = vadd.f32 %v3846, %v3918
    %v3920 = vpop.f32.mrf.mxu0
    %v3921 = vadd.f32 %v3848, %v3920
    %3922 = vmatmul.bf16.gmra.mxu0 %v1149
    %v3923 = vpop.f32.mrf.mxu0
    %v3924 = vadd.f32 %v3851, %v3923
    %v3925 = vpop.f32.mrf.mxu0
    %v3926 = vadd.f32 %v3853, %v3925
    %3927 = vmatmul.bf16.gmra.mxu0 %v1165
    %v3928 = vpop.f32.mrf.mxu0
    %v3929 = vadd.f32 %v3856, %v3928
    %v3930 = vpop.f32.mrf.mxu0
    %v3931 = vadd.f32 %v3858, %v3930
    %3932 = vmatmul.bf16.gmra.mxu0 %v1181
    %v3933 = vpop.f32.mrf.mxu0
    %v3934 = vadd.f32 %v3861, %v3933
    %v3935 = vpop.f32.mrf.mxu0
    %v3936 = vadd.f32 %v3863, %v3935
    %3937 = vmatmul.bf16.gmra.mxu0 %v1197
    %v3938 = vpop.f32.mrf.mxu0
    %v3939 = vadd.f32 %v3866, %v3938
    %v3940 = vpop.f32.mrf.mxu0
    %v3941 = vadd.f32 %v3868, %v3940
    %3942 = vmatmul.bf16.gmra.mxu0 %v1213
    %v3943 = vpop.f32.mrf.mxu0
    %v3944 = vadd.f32 %v3871, %v3943
    %v3945 = vpop.f32.mrf.mxu0
    %v3946 = vadd.f32 %v3873, %v3945
    %3947 = vmatmul.bf16.gmra.mxu0 %v1229
    %v3948 = vpop.f32.mrf.mxu0
    %v3949 = vadd.f32 %v3876, %v3948
    %v3950 = vpop.f32.mrf.mxu0
    %v3951 = vadd.f32 %v3878, %v3950
    %3952 = vmatmul.bf16.gmra.mxu0 %v1245
    %v3953 = vpop.f32.mrf.mxu0
    %v3954 = vadd.f32 %v3881, %v3953
    %v3955 = vpop.f32.mrf.mxu0
    %v3956 = vadd.f32 %v3883, %v3955
    %3957 = vmatmul.bf16.gmra.mxu0 %v1261
    %v3958 = vpop.f32.mrf.mxu0
    %v3959 = vadd.f32 %v3886, %v3958
    %v3960 = vpop.f32.mrf.mxu0
    %v3961 = vadd.f32 %v3888, %v3960
    %3962 = vmatmul.bf16.gmra.mxu0 %v1277
    %v3963 = vpop.f32.mrf.mxu0
    %v3964 = vadd.f32 %v3891, %v3963
    %v3965 = vpop.f32.mrf.mxu0
    %v3966 = vadd.f32 %v3893, %v3965
    %3967 = vmatmul.bf16.gmra.mxu0 %v1293
    %v3968 = vpop.f32.mrf.mxu0
    %v3969 = vadd.f32 %v3896, %v3968
    %v3970 = vpop.f32.mrf.mxu0
    %v3971 = vadd.f32 %v3898, %v3970
    %3972 = vmatmul.bf16.gmra.mxu0 %v1309
    %v3973 = vpop.f32.mrf.mxu0
    %v3974 = vadd.f32 %v3901, %v3973
    %v3975 = vpop.f32.mrf.mxu0
    %v3976 = vadd.f32 %v3903, %v3975
    %3977 = vmatmul.bf16.gmra.mxu0 %v1325
    %v3978 = vpop.f32.mrf.mxu0
    %v3979 = vadd.f32 %v3906, %v3978
    %v3980 = vpop.f32.mrf.mxu0
    %3981 = vdwg.mxu0
    %3982 = vmatpush.bf16.msra.mxu0 %v2317
    %3983 = vmatpush.bf16.msra.mxu0 %v2315
    %3984 = vmatpush.bf16.msra.mxu0 %v2313
    %3985 = vmatpush.bf16.msra.mxu0 %v2311
    %3986 = vmatpush.bf16.msra.mxu0 %v2309
    %3987 = vmatpush.bf16.msra.mxu0 %v2307
    %3988 = vmatpush.bf16.msra.mxu0 %v2305
    %3989 = vmatpush.bf16.msra.mxu0 %v2303
    %3990 = vmatmul.bf16.gmra.mxu0 %v1118
    %v3991 = vpop.f32.mrf.mxu0
    %v3992 = vadd.f32 %v515, %v3991
    %v3993 = vpop.f32.mrf.mxu0
    %v3994 = vadd.f32 %v515, %v3993
    %3995 = vmatmul.bf16.gmra.mxu0 %v1134
    %v3996 = vpop.f32.mrf.mxu0
    %v3997 = vadd.f32 %v515, %v3996
    %v3998 = vpop.f32.mrf.mxu0
    %v3999 = vadd.f32 %v515, %v3998
    %4000 = vmatmul.bf16.gmra.mxu0 %v1150
    %v4001 = vpop.f32.mrf.mxu0
    %v4002 = vadd.f32 %v515, %v4001
    %v4003 = vpop.f32.mrf.mxu0
    %v4004 = vadd.f32 %v515, %v4003
    %4005 = vmatmul.bf16.gmra.mxu0 %v1166
    %v4006 = vpop.f32.mrf.mxu0
    %v4007 = vadd.f32 %v515, %v4006
    %v4008 = vpop.f32.mrf.mxu0
    %v4009 = vadd.f32 %v515, %v4008
    %4010 = vmatmul.bf16.gmra.mxu0 %v1182
    %v4011 = vpop.f32.mrf.mxu0
    %v4012 = vadd.f32 %v515, %v4011
    %v4013 = vpop.f32.mrf.mxu0
    %v4014 = vadd.f32 %v515, %v4013
    %4015 = vmatmul.bf16.gmra.mxu0 %v1198
    %v4016 = vpop.f32.mrf.mxu0
    %v4017 = vadd.f32 %v515, %v4016
    %v4018 = vpop.f32.mrf.mxu0
    %v4019 = vadd.f32 %v515, %v4018
    %4020 = vmatmul.bf16.gmra.mxu0 %v1214
    %v4021 = vpop.f32.mrf.mxu0
    %v4022 = vadd.f32 %v515, %v4021
    %v4023 = vpop.f32.mrf.mxu0
    %v4024 = vadd.f32 %v515, %v4023
    %4025 = vmatmul.bf16.gmra.mxu0 %v1230
    %v4026 = vpop.f32.mrf.mxu0
    %v4027 = vadd.f32 %v515, %v4026
    %v4028 = vpop.f32.mrf.mxu0
    %v4029 = vadd.f32 %v515, %v4028
    %4030 = vmatmul.bf16.gmra.mxu0 %v1246
    %v4031 = vpop.f32.mrf.mxu0
    %v4032 = vadd.f32 %v515, %v4031
    %v4033 = vpop.f32.mrf.mxu0
    %v4034 = vadd.f32 %v515, %v4033
    %4035 = vmatmul.bf16.gmra.mxu0 %v1262
    %v4036 = vpop.f32.mrf.mxu0
    %v4037 = vadd.f32 %v515, %v4036
    %v4038 = vpop.f32.mrf.mxu0
    %v4039 = vadd.f32 %v515, %v4038
    %4040 = vmatmul.bf16.gmra.mxu0 %v1278
    %v4041 = vpop.f32.mrf.mxu0
    %v4042 = vadd.f32 %v515, %v4041
    %v4043 = vpop.f32.mrf.mxu0
    %v4044 = vadd.f32 %v515, %v4043
    %4045 = vmatmul.bf16.gmra.mxu0 %v1294
    %v4046 = vpop.f32.mrf.mxu0
    %v4047 = vadd.f32 %v515, %v4046
    %v4048 = vpop.f32.mrf.mxu0
    %v4049 = vadd.f32 %v515, %v4048
    %4050 = vmatmul.bf16.gmra.mxu0 %v1310
    %v4051 = vpop.f32.mrf.mxu0
    %v4052 = vadd.f32 %v515, %v4051
    %v4053 = vpop.f32.mrf.mxu0
    %4054 = vdwg.mxu0
    %4055 = vmatpush.bf16.msra.mxu0 %v2333
    %4056 = vmatpush.bf16.msra.mxu0 %v2331
    %4057 = vmatpush.bf16.msra.mxu0 %v2329
    %4058 = vmatpush.bf16.msra.mxu0 %v2327
    %4059 = vmatpush.bf16.msra.mxu0 %v2325
    %4060 = vmatpush.bf16.msra.mxu0 %v2323
    %4061 = vmatpush.bf16.msra.mxu0 %v2321
    %4062 = vmatpush.bf16.msra.mxu0 %v2319
    %4063 = vmatmul.bf16.gmra.mxu0 %v1119
    %v4064 = vpop.f32.mrf.mxu0
    %v4065 = vadd.f32 %v3992, %v4064
    %v4066 = vpop.f32.mrf.mxu0
    %v4067 = vadd.f32 %v3994, %v4066
    %4068 = vmatmul.bf16.gmra.mxu0 %v1135
    %v4069 = vpop.f32.mrf.mxu0
    %v4070 = vadd.f32 %v3997, %v4069
    %v4071 = vpop.f32.mrf.mxu0
    %v4072 = vadd.f32 %v3999, %v4071
    %4073 = vmatmul.bf16.gmra.mxu0 %v1151
    %v4074 = vpop.f32.mrf.mxu0
    %v4075 = vadd.f32 %v4002, %v4074
    %v4076 = vpop.f32.mrf.mxu0
    %v4077 = vadd.f32 %v4004, %v4076
    %4078 = vmatmul.bf16.gmra.mxu0 %v1167
    %v4079 = vpop.f32.mrf.mxu0
    %v4080 = vadd.f32 %v4007, %v4079
    %v4081 = vpop.f32.mrf.mxu0
    %v4082 = vadd.f32 %v4009, %v4081
    %4083 = vmatmul.bf16.gmra.mxu0 %v1183
    %v4084 = vpop.f32.mrf.mxu0
    %v4085 = vadd.f32 %v4012, %v4084
    %v4086 = vpop.f32.mrf.mxu0
    %v4087 = vadd.f32 %v4014, %v4086
    %4088 = vmatmul.bf16.gmra.mxu0 %v1199
    %v4089 = vpop.f32.mrf.mxu0
    %v4090 = vadd.f32 %v4017, %v4089
    %v4091 = vpop.f32.mrf.mxu0
    %v4092 = vadd.f32 %v4019, %v4091
    %4093 = vmatmul.bf16.gmra.mxu0 %v1215
    %v4094 = vpop.f32.mrf.mxu0
    %v4095 = vadd.f32 %v4022, %v4094
    %v4096 = vpop.f32.mrf.mxu0
    %v4097 = vadd.f32 %v4024, %v4096
    %4098 = vmatmul.bf16.gmra.mxu0 %v1231
    %v4099 = vpop.f32.mrf.mxu0
    %v4100 = vadd.f32 %v4027, %v4099
    %v4101 = vpop.f32.mrf.mxu0
    %v4102 = vadd.f32 %v4029, %v4101
    %4103 = vmatmul.bf16.gmra.mxu0 %v1247
    %v4104 = vpop.f32.mrf.mxu0
    %v4105 = vadd.f32 %v4032, %v4104
    %v4106 = vpop.f32.mrf.mxu0
    %v4107 = vadd.f32 %v4034, %v4106
    %4108 = vmatmul.bf16.gmra.mxu0 %v1263
    %v4109 = vpop.f32.mrf.mxu0
    %v4110 = vadd.f32 %v4037, %v4109
    %v4111 = vpop.f32.mrf.mxu0
    %v4112 = vadd.f32 %v4039, %v4111
    %4113 = vmatmul.bf16.gmra.mxu0 %v1279
    %v4114 = vpop.f32.mrf.mxu0
    %v4115 = vadd.f32 %v4042, %v4114
    %v4116 = vpop.f32.mrf.mxu0
    %v4117 = vadd.f32 %v4044, %v4116
    %4118 = vmatmul.bf16.gmra.mxu0 %v1295
    %v4119 = vpop.f32.mrf.mxu0
    %v4120 = vadd.f32 %v4047, %v4119
    %v4121 = vpop.f32.mrf.mxu0
    %v4122 = vadd.f32 %v4049, %v4121
    %4123 = vmatmul.bf16.gmra.mxu0 %v1311
    %v4124 = vpop.f32.mrf.mxu0
    %v4125 = vadd.f32 %v4052, %v4124
    %v4126 = vpop.f32.mrf.mxu0
    %4127 = vdwg.mxu0
    %4128 = vmatpush.bf16.msra.mxu0 %v2349
    %4129 = vmatpush.bf16.msra.mxu0 %v2347
    %4130 = vmatpush.bf16.msra.mxu0 %v2345
    %4131 = vmatpush.bf16.msra.mxu0 %v2343
    %4132 = vmatpush.bf16.msra.mxu0 %v2341
    %4133 = vmatpush.bf16.msra.mxu0 %v2339
    %4134 = vmatpush.bf16.msra.mxu0 %v2337
    %4135 = vmatpush.bf16.msra.mxu0 %v2335
    %4136 = vmatmul.bf16.gmra.mxu0 %v1120
    %v4137 = vpop.f32.mrf.mxu0
    %v4138 = vadd.f32 %v4065, %v4137
    %v4139 = vpop.f32.mrf.mxu0
    %v4140 = vadd.f32 %v4067, %v4139
    %4141 = vmatmul.bf16.gmra.mxu0 %v1136
    %v4142 = vpop.f32.mrf.mxu0
    %v4143 = vadd.f32 %v4070, %v4142
    %v4144 = vpop.f32.mrf.mxu0
    %v4145 = vadd.f32 %v4072, %v4144
    %4146 = vmatmul.bf16.gmra.mxu0 %v1152
    %v4147 = vpop.f32.mrf.mxu0
    %v4148 = vadd.f32 %v4075, %v4147
    %v4149 = vpop.f32.mrf.mxu0
    %v4150 = vadd.f32 %v4077, %v4149
    %4151 = vmatmul.bf16.gmra.mxu0 %v1168
    %v4152 = vpop.f32.mrf.mxu0
    %v4153 = vadd.f32 %v4080, %v4152
    %v4154 = vpop.f32.mrf.mxu0
    %v4155 = vadd.f32 %v4082, %v4154
    %4156 = vmatmul.bf16.gmra.mxu0 %v1184
    %v4157 = vpop.f32.mrf.mxu0
    %v4158 = vadd.f32 %v4085, %v4157
    %v4159 = vpop.f32.mrf.mxu0
    %v4160 = vadd.f32 %v4087, %v4159
    %4161 = vmatmul.bf16.gmra.mxu0 %v1200
    %v4162 = vpop.f32.mrf.mxu0
    %v4163 = vadd.f32 %v4090, %v4162
    %v4164 = vpop.f32.mrf.mxu0
    %v4165 = vadd.f32 %v4092, %v4164
    %4166 = vmatmul.bf16.gmra.mxu0 %v1216
    %v4167 = vpop.f32.mrf.mxu0
    %v4168 = vadd.f32 %v4095, %v4167
    %v4169 = vpop.f32.mrf.mxu0
    %v4170 = vadd.f32 %v4097, %v4169
    %4171 = vmatmul.bf16.gmra.mxu0 %v1232
    %v4172 = vpop.f32.mrf.mxu0
    %v4173 = vadd.f32 %v4100, %v4172
    %v4174 = vpop.f32.mrf.mxu0
    %v4175 = vadd.f32 %v4102, %v4174
    %4176 = vmatmul.bf16.gmra.mxu0 %v1248
    %v4177 = vpop.f32.mrf.mxu0
    %v4178 = vadd.f32 %v4105, %v4177
    %v4179 = vpop.f32.mrf.mxu0
    %v4180 = vadd.f32 %v4107, %v4179
    %4181 = vmatmul.bf16.gmra.mxu0 %v1264
    %v4182 = vpop.f32.mrf.mxu0
    %v4183 = vadd.f32 %v4110, %v4182
    %v4184 = vpop.f32.mrf.mxu0
    %v4185 = vadd.f32 %v4112, %v4184
    %4186 = vmatmul.bf16.gmra.mxu0 %v1280
    %v4187 = vpop.f32.mrf.mxu0
    %v4188 = vadd.f32 %v4115, %v4187
    %v4189 = vpop.f32.mrf.mxu0
    %v4190 = vadd.f32 %v4117, %v4189
    %4191 = vmatmul.bf16.gmra.mxu0 %v1296
    %v4192 = vpop.f32.mrf.mxu0
    %v4193 = vadd.f32 %v4120, %v4192
    %v4194 = vpop.f32.mrf.mxu0
    %v4195 = vadd.f32 %v4122, %v4194
    %4196 = vmatmul.bf16.gmra.mxu0 %v1312
    %v4197 = vpop.f32.mrf.mxu0
    %v4198 = vadd.f32 %v4125, %v4197
    %v4199 = vpop.f32.mrf.mxu0
    %4200 = vdwg.mxu0
    %4201 = vmatpush.bf16.msra.mxu0 %v2365
    %4202 = vmatpush.bf16.msra.mxu0 %v2363
    %4203 = vmatpush.bf16.msra.mxu0 %v2361
    %4204 = vmatpush.bf16.msra.mxu0 %v2359
    %4205 = vmatpush.bf16.msra.mxu0 %v2357
    %4206 = vmatpush.bf16.msra.mxu0 %v2355
    %4207 = vmatpush.bf16.msra.mxu0 %v2353
    %4208 = vmatpush.bf16.msra.mxu0 %v2351
    %4209 = vmatmul.bf16.gmra.mxu0 %v1121
    %v4210 = vpop.f32.mrf.mxu0
    %v4211 = vadd.f32 %v4138, %v4210
    %v4212 = vpop.f32.mrf.mxu0
    %v4213 = vadd.f32 %v4140, %v4212
    %4214 = vmatmul.bf16.gmra.mxu0 %v1137
    %v4215 = vpop.f32.mrf.mxu0
    %v4216 = vadd.f32 %v4143, %v4215
    %v4217 = vpop.f32.mrf.mxu0
    %v4218 = vadd.f32 %v4145, %v4217
    %4219 = vmatmul.bf16.gmra.mxu0 %v1153
    %v4220 = vpop.f32.mrf.mxu0
    %v4221 = vadd.f32 %v4148, %v4220
    %v4222 = vpop.f32.mrf.mxu0
    %v4223 = vadd.f32 %v4150, %v4222
    %4224 = vmatmul.bf16.gmra.mxu0 %v1169
    %v4225 = vpop.f32.mrf.mxu0
    %v4226 = vadd.f32 %v4153, %v4225
    %v4227 = vpop.f32.mrf.mxu0
    %v4228 = vadd.f32 %v4155, %v4227
    %4229 = vmatmul.bf16.gmra.mxu0 %v1185
    %v4230 = vpop.f32.mrf.mxu0
    %v4231 = vadd.f32 %v4158, %v4230
    %v4232 = vpop.f32.mrf.mxu0
    %v4233 = vadd.f32 %v4160, %v4232
    %4234 = vmatmul.bf16.gmra.mxu0 %v1201
    %v4235 = vpop.f32.mrf.mxu0
    %v4236 = vadd.f32 %v4163, %v4235
    %v4237 = vpop.f32.mrf.mxu0
    %v4238 = vadd.f32 %v4165, %v4237
    %4239 = vmatmul.bf16.gmra.mxu0 %v1217
    %v4240 = vpop.f32.mrf.mxu0
    %v4241 = vadd.f32 %v4168, %v4240
    %v4242 = vpop.f32.mrf.mxu0
    %v4243 = vadd.f32 %v4170, %v4242
    %4244 = vmatmul.bf16.gmra.mxu0 %v1233
    %v4245 = vpop.f32.mrf.mxu0
    %v4246 = vadd.f32 %v4173, %v4245
    %v4247 = vpop.f32.mrf.mxu0
    %v4248 = vadd.f32 %v4175, %v4247
    %4249 = vmatmul.bf16.gmra.mxu0 %v1249
    %v4250 = vpop.f32.mrf.mxu0
    %v4251 = vadd.f32 %v4178, %v4250
    %v4252 = vpop.f32.mrf.mxu0
    %v4253 = vadd.f32 %v4180, %v4252
    %4254 = vmatmul.bf16.gmra.mxu0 %v1265
    %v4255 = vpop.f32.mrf.mxu0
    %v4256 = vadd.f32 %v4183, %v4255
    %v4257 = vpop.f32.mrf.mxu0
    %v4258 = vadd.f32 %v4185, %v4257
    %4259 = vmatmul.bf16.gmra.mxu0 %v1281
    %v4260 = vpop.f32.mrf.mxu0
    %v4261 = vadd.f32 %v4188, %v4260
    %v4262 = vpop.f32.mrf.mxu0
    %v4263 = vadd.f32 %v4190, %v4262
    %4264 = vmatmul.bf16.gmra.mxu0 %v1297
    %v4265 = vpop.f32.mrf.mxu0
    %v4266 = vadd.f32 %v4193, %v4265
    %v4267 = vpop.f32.mrf.mxu0
    %v4268 = vadd.f32 %v4195, %v4267
    %4269 = vmatmul.bf16.gmra.mxu0 %v1313
    %v4270 = vpop.f32.mrf.mxu0
    %v4271 = vadd.f32 %v4198, %v4270
    %v4272 = vpop.f32.mrf.mxu0
    %4273 = vdwg.mxu0
    %4274 = vmatpush.bf16.msra.mxu0 %v2381
    %4275 = vmatpush.bf16.msra.mxu0 %v2379
    %4276 = vmatpush.bf16.msra.mxu0 %v2377
    %4277 = vmatpush.bf16.msra.mxu0 %v2375
    %4278 = vmatpush.bf16.msra.mxu0 %v2373
    %4279 = vmatpush.bf16.msra.mxu0 %v2371
    %4280 = vmatpush.bf16.msra.mxu0 %v2369
    %4281 = vmatpush.bf16.msra.mxu0 %v2367
    %4282 = vmatmul.bf16.gmra.mxu0 %v1122
    %v4283 = vpop.f32.mrf.mxu0
    %v4284 = vadd.f32 %v4211, %v4283
    %v4285 = vpop.f32.mrf.mxu0
    %v4286 = vadd.f32 %v4213, %v4285
    %4287 = vmatmul.bf16.gmra.mxu0 %v1138
    %v4288 = vpop.f32.mrf.mxu0
    %v4289 = vadd.f32 %v4216, %v4288
    %v4290 = vpop.f32.mrf.mxu0
    %v4291 = vadd.f32 %v4218, %v4290
    %4292 = vmatmul.bf16.gmra.mxu0 %v1154
    %v4293 = vpop.f32.mrf.mxu0
    %v4294 = vadd.f32 %v4221, %v4293
    %v4295 = vpop.f32.mrf.mxu0
    %v4296 = vadd.f32 %v4223, %v4295
    %4297 = vmatmul.bf16.gmra.mxu0 %v1170
    %v4298 = vpop.f32.mrf.mxu0
    %v4299 = vadd.f32 %v4226, %v4298
    %v4300 = vpop.f32.mrf.mxu0
    %v4301 = vadd.f32 %v4228, %v4300
    %4302 = vmatmul.bf16.gmra.mxu0 %v1186
    %v4303 = vpop.f32.mrf.mxu0
    %v4304 = vadd.f32 %v4231, %v4303
    %v4305 = vpop.f32.mrf.mxu0
    %v4306 = vadd.f32 %v4233, %v4305
    %4307 = vmatmul.bf16.gmra.mxu0 %v1202
    %v4308 = vpop.f32.mrf.mxu0
    %v4309 = vadd.f32 %v4236, %v4308
    %v4310 = vpop.f32.mrf.mxu0
    %v4311 = vadd.f32 %v4238, %v4310
    %4312 = vmatmul.bf16.gmra.mxu0 %v1218
    %v4313 = vpop.f32.mrf.mxu0
    %v4314 = vadd.f32 %v4241, %v4313
    %v4315 = vpop.f32.mrf.mxu0
    %v4316 = vadd.f32 %v4243, %v4315
    %4317 = vmatmul.bf16.gmra.mxu0 %v1234
    %v4318 = vpop.f32.mrf.mxu0
    %v4319 = vadd.f32 %v4246, %v4318
    %v4320 = vpop.f32.mrf.mxu0
    %v4321 = vadd.f32 %v4248, %v4320
    %4322 = vmatmul.bf16.gmra.mxu0 %v1250
    %v4323 = vpop.f32.mrf.mxu0
    %v4324 = vadd.f32 %v4251, %v4323
    %v4325 = vpop.f32.mrf.mxu0
    %v4326 = vadd.f32 %v4253, %v4325
    %4327 = vmatmul.bf16.gmra.mxu0 %v1266
    %v4328 = vpop.f32.mrf.mxu0
    %v4329 = vadd.f32 %v4256, %v4328
    %v4330 = vpop.f32.mrf.mxu0
    %v4331 = vadd.f32 %v4258, %v4330
    %4332 = vmatmul.bf16.gmra.mxu0 %v1282
    %v4333 = vpop.f32.mrf.mxu0
    %v4334 = vadd.f32 %v4261, %v4333
    %v4335 = vpop.f32.mrf.mxu0
    %v4336 = vadd.f32 %v4263, %v4335
    %4337 = vmatmul.bf16.gmra.mxu0 %v1298
    %v4338 = vpop.f32.mrf.mxu0
    %v4339 = vadd.f32 %v4266, %v4338
    %v4340 = vpop.f32.mrf.mxu0
    %v4341 = vadd.f32 %v4268, %v4340
    %4342 = vmatmul.bf16.gmra.mxu0 %v1314
    %v4343 = vpop.f32.mrf.mxu0
    %v4344 = vadd.f32 %v4271, %v4343
    %v4345 = vpop.f32.mrf.mxu0
    %4346 = vdwg.mxu0
    %4347 = vmatpush.bf16.msra.mxu0 %v2397
    %4348 = vmatpush.bf16.msra.mxu0 %v2395
    %4349 = vmatpush.bf16.msra.mxu0 %v2393
    %4350 = vmatpush.bf16.msra.mxu0 %v2391
    %4351 = vmatpush.bf16.msra.mxu0 %v2389
    %4352 = vmatpush.bf16.msra.mxu0 %v2387
    %4353 = vmatpush.bf16.msra.mxu0 %v2385
    %4354 = vmatpush.bf16.msra.mxu0 %v2383
    %4355 = vmatmul.bf16.gmra.mxu0 %v1123
    %v4356 = vpop.f32.mrf.mxu0
    %v4357 = vadd.f32 %v4284, %v4356
    %v4358 = vpop.f32.mrf.mxu0
    %v4359 = vadd.f32 %v4286, %v4358
    %4360 = vmatmul.bf16.gmra.mxu0 %v1139
    %v4361 = vpop.f32.mrf.mxu0
    %v4362 = vadd.f32 %v4289, %v4361
    %v4363 = vpop.f32.mrf.mxu0
    %v4364 = vadd.f32 %v4291, %v4363
    %4365 = vmatmul.bf16.gmra.mxu0 %v1155
    %v4366 = vpop.f32.mrf.mxu0
    %v4367 = vadd.f32 %v4294, %v4366
    %v4368 = vpop.f32.mrf.mxu0
    %v4369 = vadd.f32 %v4296, %v4368
    %4370 = vmatmul.bf16.gmra.mxu0 %v1171
    %v4371 = vpop.f32.mrf.mxu0
    %v4372 = vadd.f32 %v4299, %v4371
    %v4373 = vpop.f32.mrf.mxu0
    %v4374 = vadd.f32 %v4301, %v4373
    %4375 = vmatmul.bf16.gmra.mxu0 %v1187
    %v4376 = vpop.f32.mrf.mxu0
    %v4377 = vadd.f32 %v4304, %v4376
    %v4378 = vpop.f32.mrf.mxu0
    %v4379 = vadd.f32 %v4306, %v4378
    %4380 = vmatmul.bf16.gmra.mxu0 %v1203
    %v4381 = vpop.f32.mrf.mxu0
    %v4382 = vadd.f32 %v4309, %v4381
    %v4383 = vpop.f32.mrf.mxu0
    %v4384 = vadd.f32 %v4311, %v4383
    %4385 = vmatmul.bf16.gmra.mxu0 %v1219
    %v4386 = vpop.f32.mrf.mxu0
    %v4387 = vadd.f32 %v4314, %v4386
    %v4388 = vpop.f32.mrf.mxu0
    %v4389 = vadd.f32 %v4316, %v4388
    %4390 = vmatmul.bf16.gmra.mxu0 %v1235
    %v4391 = vpop.f32.mrf.mxu0
    %v4392 = vadd.f32 %v4319, %v4391
    %v4393 = vpop.f32.mrf.mxu0
    %v4394 = vadd.f32 %v4321, %v4393
    %4395 = vmatmul.bf16.gmra.mxu0 %v1251
    %v4396 = vpop.f32.mrf.mxu0
    %v4397 = vadd.f32 %v4324, %v4396
    %v4398 = vpop.f32.mrf.mxu0
    %v4399 = vadd.f32 %v4326, %v4398
    %4400 = vmatmul.bf16.gmra.mxu0 %v1267
    %v4401 = vpop.f32.mrf.mxu0
    %v4402 = vadd.f32 %v4329, %v4401
    %v4403 = vpop.f32.mrf.mxu0
    %v4404 = vadd.f32 %v4331, %v4403
    %4405 = vmatmul.bf16.gmra.mxu0 %v1283
    %v4406 = vpop.f32.mrf.mxu0
    %v4407 = vadd.f32 %v4334, %v4406
    %v4408 = vpop.f32.mrf.mxu0
    %v4409 = vadd.f32 %v4336, %v4408
    %4410 = vmatmul.bf16.gmra.mxu0 %v1299
    %v4411 = vpop.f32.mrf.mxu0
    %v4412 = vadd.f32 %v4339, %v4411
    %v4413 = vpop.f32.mrf.mxu0
    %v4414 = vadd.f32 %v4341, %v4413
    %4415 = vmatmul.bf16.gmra.mxu0 %v1315
    %v4416 = vpop.f32.mrf.mxu0
    %v4417 = vadd.f32 %v4344, %v4416
    %v4418 = vpop.f32.mrf.mxu0
    %4419 = vdwg.mxu0
    %4420 = vmatpush.bf16.msra.mxu0 %v2413
    %4421 = vmatpush.bf16.msra.mxu0 %v2411
    %4422 = vmatpush.bf16.msra.mxu0 %v2409
    %4423 = vmatpush.bf16.msra.mxu0 %v2407
    %4424 = vmatpush.bf16.msra.mxu0 %v2405
    %4425 = vmatpush.bf16.msra.mxu0 %v2403
    %4426 = vmatpush.bf16.msra.mxu0 %v2401
    %4427 = vmatpush.bf16.msra.mxu0 %v2399
    %4428 = vmatmul.bf16.gmra.mxu0 %v1124
    %v4429 = vpop.f32.mrf.mxu0
    %v4430 = vadd.f32 %v4357, %v4429
    %v4431 = vpop.f32.mrf.mxu0
    %v4432 = vadd.f32 %v4359, %v4431
    %4433 = vmatmul.bf16.gmra.mxu0 %v1140
    %v4434 = vpop.f32.mrf.mxu0
    %v4435 = vadd.f32 %v4362, %v4434
    %v4436 = vpop.f32.mrf.mxu0
    %v4437 = vadd.f32 %v4364, %v4436
    %4438 = vmatmul.bf16.gmra.mxu0 %v1156
    %v4439 = vpop.f32.mrf.mxu0
    %v4440 = vadd.f32 %v4367, %v4439
    %v4441 = vpop.f32.mrf.mxu0
    %v4442 = vadd.f32 %v4369, %v4441
    %4443 = vmatmul.bf16.gmra.mxu0 %v1172
    %v4444 = vpop.f32.mrf.mxu0
    %v4445 = vadd.f32 %v4372, %v4444
    %v4446 = vpop.f32.mrf.mxu0
    %v4447 = vadd.f32 %v4374, %v4446
    %4448 = vmatmul.bf16.gmra.mxu0 %v1188
    %v4449 = vpop.f32.mrf.mxu0
    %v4450 = vadd.f32 %v4377, %v4449
    %v4451 = vpop.f32.mrf.mxu0
    %v4452 = vadd.f32 %v4379, %v4451
    %4453 = vmatmul.bf16.gmra.mxu0 %v1204
    %v4454 = vpop.f32.mrf.mxu0
    %v4455 = vadd.f32 %v4382, %v4454
    %v4456 = vpop.f32.mrf.mxu0
    %v4457 = vadd.f32 %v4384, %v4456
    %4458 = vmatmul.bf16.gmra.mxu0 %v1220
    %v4459 = vpop.f32.mrf.mxu0
    %v4460 = vadd.f32 %v4387, %v4459
    %v4461 = vpop.f32.mrf.mxu0
    %v4462 = vadd.f32 %v4389, %v4461
    %4463 = vmatmul.bf16.gmra.mxu0 %v1236
    %v4464 = vpop.f32.mrf.mxu0
    %v4465 = vadd.f32 %v4392, %v4464
    %v4466 = vpop.f32.mrf.mxu0
    %v4467 = vadd.f32 %v4394, %v4466
    %4468 = vmatmul.bf16.gmra.mxu0 %v1252
    %v4469 = vpop.f32.mrf.mxu0
    %v4470 = vadd.f32 %v4397, %v4469
    %v4471 = vpop.f32.mrf.mxu0
    %v4472 = vadd.f32 %v4399, %v4471
    %4473 = vmatmul.bf16.gmra.mxu0 %v1268
    %v4474 = vpop.f32.mrf.mxu0
    %v4475 = vadd.f32 %v4402, %v4474
    %v4476 = vpop.f32.mrf.mxu0
    %v4477 = vadd.f32 %v4404, %v4476
    %4478 = vmatmul.bf16.gmra.mxu0 %v1284
    %v4479 = vpop.f32.mrf.mxu0
    %v4480 = vadd.f32 %v4407, %v4479
    %v4481 = vpop.f32.mrf.mxu0
    %v4482 = vadd.f32 %v4409, %v4481
    %4483 = vmatmul.bf16.gmra.mxu0 %v1300
    %v4484 = vpop.f32.mrf.mxu0
    %v4485 = vadd.f32 %v4412, %v4484
    %v4486 = vpop.f32.mrf.mxu0
    %v4487 = vadd.f32 %v4414, %v4486
    %4488 = vmatmul.bf16.gmra.mxu0 %v1316
    %v4489 = vpop.f32.mrf.mxu0
    %v4490 = vadd.f32 %v4417, %v4489
    %v4491 = vpop.f32.mrf.mxu0
    %4492 = vdwg.mxu0
    %4493 = vmatpush.bf16.msra.mxu0 %v2429
    %4494 = vmatpush.bf16.msra.mxu0 %v2427
    %4495 = vmatpush.bf16.msra.mxu0 %v2425
    %4496 = vmatpush.bf16.msra.mxu0 %v2423
    %4497 = vmatpush.bf16.msra.mxu0 %v2421
    %4498 = vmatpush.bf16.msra.mxu0 %v2419
    %4499 = vmatpush.bf16.msra.mxu0 %v2417
    %4500 = vmatpush.bf16.msra.mxu0 %v2415
    %4501 = vmatmul.bf16.gmra.mxu0 %v1125
    %v4502 = vpop.f32.mrf.mxu0
    %v4503 = vadd.f32 %v4430, %v4502
    %v4504 = vpop.f32.mrf.mxu0
    %v4505 = vadd.f32 %v4432, %v4504
    %4506 = vmatmul.bf16.gmra.mxu0 %v1141
    %v4507 = vpop.f32.mrf.mxu0
    %v4508 = vadd.f32 %v4435, %v4507
    %v4509 = vpop.f32.mrf.mxu0
    %v4510 = vadd.f32 %v4437, %v4509
    %4511 = vmatmul.bf16.gmra.mxu0 %v1157
    %v4512 = vpop.f32.mrf.mxu0
    %v4513 = vadd.f32 %v4440, %v4512
    %v4514 = vpop.f32.mrf.mxu0
    %v4515 = vadd.f32 %v4442, %v4514
    %4516 = vmatmul.bf16.gmra.mxu0 %v1173
    %v4517 = vpop.f32.mrf.mxu0
    %v4518 = vadd.f32 %v4445, %v4517
    %v4519 = vpop.f32.mrf.mxu0
    %v4520 = vadd.f32 %v4447, %v4519
    %4521 = vmatmul.bf16.gmra.mxu0 %v1189
    %v4522 = vpop.f32.mrf.mxu0
    %v4523 = vadd.f32 %v4450, %v4522
    %v4524 = vpop.f32.mrf.mxu0
    %v4525 = vadd.f32 %v4452, %v4524
    %4526 = vmatmul.bf16.gmra.mxu0 %v1205
    %v4527 = vpop.f32.mrf.mxu0
    %v4528 = vadd.f32 %v4455, %v4527
    %v4529 = vpop.f32.mrf.mxu0
    %v4530 = vadd.f32 %v4457, %v4529
    %4531 = vmatmul.bf16.gmra.mxu0 %v1221
    %v4532 = vpop.f32.mrf.mxu0
    %v4533 = vadd.f32 %v4460, %v4532
    %v4534 = vpop.f32.mrf.mxu0
    %v4535 = vadd.f32 %v4462, %v4534
    %4536 = vmatmul.bf16.gmra.mxu0 %v1237
    %v4537 = vpop.f32.mrf.mxu0
    %v4538 = vadd.f32 %v4465, %v4537
    %v4539 = vpop.f32.mrf.mxu0
    %v4540 = vadd.f32 %v4467, %v4539
    %4541 = vmatmul.bf16.gmra.mxu0 %v1253
    %v4542 = vpop.f32.mrf.mxu0
    %v4543 = vadd.f32 %v4470, %v4542
    %v4544 = vpop.f32.mrf.mxu0
    %v4545 = vadd.f32 %v4472, %v4544
    %4546 = vmatmul.bf16.gmra.mxu0 %v1269
    %v4547 = vpop.f32.mrf.mxu0
    %v4548 = vadd.f32 %v4475, %v4547
    %v4549 = vpop.f32.mrf.mxu0
    %v4550 = vadd.f32 %v4477, %v4549
    %4551 = vmatmul.bf16.gmra.mxu0 %v1285
    %v4552 = vpop.f32.mrf.mxu0
    %v4553 = vadd.f32 %v4480, %v4552
    %v4554 = vpop.f32.mrf.mxu0
    %v4555 = vadd.f32 %v4482, %v4554
    %4556 = vmatmul.bf16.gmra.mxu0 %v1301
    %v4557 = vpop.f32.mrf.mxu0
    %v4558 = vadd.f32 %v4485, %v4557
    %v4559 = vpop.f32.mrf.mxu0
    %v4560 = vadd.f32 %v4487, %v4559
    %4561 = vmatmul.bf16.gmra.mxu0 %v1317
    %v4562 = vpop.f32.mrf.mxu0
    %v4563 = vadd.f32 %v4490, %v4562
    %v4564 = vpop.f32.mrf.mxu0
    %4565 = vdwg.mxu0
    %4566 = vmatpush.bf16.msra.mxu0 %v2445
    %4567 = vmatpush.bf16.msra.mxu0 %v2443
    %4568 = vmatpush.bf16.msra.mxu0 %v2441
    %4569 = vmatpush.bf16.msra.mxu0 %v2439
    %4570 = vmatpush.bf16.msra.mxu0 %v2437
    %4571 = vmatpush.bf16.msra.mxu0 %v2435
    %4572 = vmatpush.bf16.msra.mxu0 %v2433
    %4573 = vmatpush.bf16.msra.mxu0 %v2431
    %4574 = vmatmul.bf16.gmra.mxu0 %v1126
    %v4575 = vpop.f32.mrf.mxu0
    %v4576 = vadd.f32 %v4503, %v4575
    %v4577 = vpop.f32.mrf.mxu0
    %v4578 = vadd.f32 %v4505, %v4577
    %4579 = vmatmul.bf16.gmra.mxu0 %v1142
    %v4580 = vpop.f32.mrf.mxu0
    %v4581 = vadd.f32 %v4508, %v4580
    %v4582 = vpop.f32.mrf.mxu0
    %v4583 = vadd.f32 %v4510, %v4582
    %4584 = vmatmul.bf16.gmra.mxu0 %v1158
    %v4585 = vpop.f32.mrf.mxu0
    %v4586 = vadd.f32 %v4513, %v4585
    %v4587 = vpop.f32.mrf.mxu0
    %v4588 = vadd.f32 %v4515, %v4587
    %4589 = vmatmul.bf16.gmra.mxu0 %v1174
    %v4590 = vpop.f32.mrf.mxu0
    %v4591 = vadd.f32 %v4518, %v4590
    %v4592 = vpop.f32.mrf.mxu0
    %v4593 = vadd.f32 %v4520, %v4592
    %4594 = vmatmul.bf16.gmra.mxu0 %v1190
    %v4595 = vpop.f32.mrf.mxu0
    %v4596 = vadd.f32 %v4523, %v4595
    %v4597 = vpop.f32.mrf.mxu0
    %v4598 = vadd.f32 %v4525, %v4597
    %4599 = vmatmul.bf16.gmra.mxu0 %v1206
    %v4600 = vpop.f32.mrf.mxu0
    %v4601 = vadd.f32 %v4528, %v4600
    %v4602 = vpop.f32.mrf.mxu0
    %v4603 = vadd.f32 %v4530, %v4602
    %4604 = vmatmul.bf16.gmra.mxu0 %v1222
    %v4605 = vpop.f32.mrf.mxu0
    %v4606 = vadd.f32 %v4533, %v4605
    %v4607 = vpop.f32.mrf.mxu0
    %v4608 = vadd.f32 %v4535, %v4607
    %4609 = vmatmul.bf16.gmra.mxu0 %v1238
    %v4610 = vpop.f32.mrf.mxu0
    %v4611 = vadd.f32 %v4538, %v4610
    %v4612 = vpop.f32.mrf.mxu0
    %v4613 = vadd.f32 %v4540, %v4612
    %4614 = vmatmul.bf16.gmra.mxu0 %v1254
    %v4615 = vpop.f32.mrf.mxu0
    %v4616 = vadd.f32 %v4543, %v4615
    %v4617 = vpop.f32.mrf.mxu0
    %v4618 = vadd.f32 %v4545, %v4617
    %4619 = vmatmul.bf16.gmra.mxu0 %v1270
    %v4620 = vpop.f32.mrf.mxu0
    %v4621 = vadd.f32 %v4548, %v4620
    %v4622 = vpop.f32.mrf.mxu0
    %v4623 = vadd.f32 %v4550, %v4622
    %4624 = vmatmul.bf16.gmra.mxu0 %v1286
    %v4625 = vpop.f32.mrf.mxu0
    %v4626 = vadd.f32 %v4553, %v4625
    %v4627 = vpop.f32.mrf.mxu0
    %v4628 = vadd.f32 %v4555, %v4627
    %4629 = vmatmul.bf16.gmra.mxu0 %v1302
    %v4630 = vpop.f32.mrf.mxu0
    %v4631 = vadd.f32 %v4558, %v4630
    %v4632 = vpop.f32.mrf.mxu0
    %v4633 = vadd.f32 %v4560, %v4632
    %4634 = vmatmul.bf16.gmra.mxu0 %v1318
    %v4635 = vpop.f32.mrf.mxu0
    %v4636 = vadd.f32 %v4563, %v4635
    %v4637 = vpop.f32.mrf.mxu0
    %4638 = vdwg.mxu0
    %4639 = vmatpush.bf16.msra.mxu0 %v2461
    %4640 = vmatpush.bf16.msra.mxu0 %v2459
    %4641 = vmatpush.bf16.msra.mxu0 %v2457
    %4642 = vmatpush.bf16.msra.mxu0 %v2455
    %4643 = vmatpush.bf16.msra.mxu0 %v2453
    %4644 = vmatpush.bf16.msra.mxu0 %v2451
    %4645 = vmatpush.bf16.msra.mxu0 %v2449
    %4646 = vmatpush.bf16.msra.mxu0 %v2447
    %4647 = vmatmul.bf16.gmra.mxu0 %v1127
    %v4648 = vpop.f32.mrf.mxu0
    %v4649 = vadd.f32 %v4576, %v4648
    %v4650 = vpop.f32.mrf.mxu0
    %v4651 = vadd.f32 %v4578, %v4650
    %4652 = vmatmul.bf16.gmra.mxu0 %v1143
    %v4653 = vpop.f32.mrf.mxu0
    %v4654 = vadd.f32 %v4581, %v4653
    %v4655 = vpop.f32.mrf.mxu0
    %v4656 = vadd.f32 %v4583, %v4655
    %4657 = vmatmul.bf16.gmra.mxu0 %v1159
    %v4658 = vpop.f32.mrf.mxu0
    %v4659 = vadd.f32 %v4586, %v4658
    %v4660 = vpop.f32.mrf.mxu0
    %v4661 = vadd.f32 %v4588, %v4660
    %4662 = vmatmul.bf16.gmra.mxu0 %v1175
    %v4663 = vpop.f32.mrf.mxu0
    %v4664 = vadd.f32 %v4591, %v4663
    %v4665 = vpop.f32.mrf.mxu0
    %v4666 = vadd.f32 %v4593, %v4665
    %4667 = vmatmul.bf16.gmra.mxu0 %v1191
    %v4668 = vpop.f32.mrf.mxu0
    %v4669 = vadd.f32 %v4596, %v4668
    %v4670 = vpop.f32.mrf.mxu0
    %v4671 = vadd.f32 %v4598, %v4670
    %4672 = vmatmul.bf16.gmra.mxu0 %v1207
    %v4673 = vpop.f32.mrf.mxu0
    %v4674 = vadd.f32 %v4601, %v4673
    %v4675 = vpop.f32.mrf.mxu0
    %v4676 = vadd.f32 %v4603, %v4675
    %4677 = vmatmul.bf16.gmra.mxu0 %v1223
    %v4678 = vpop.f32.mrf.mxu0
    %v4679 = vadd.f32 %v4606, %v4678
    %v4680 = vpop.f32.mrf.mxu0
    %v4681 = vadd.f32 %v4608, %v4680
    %4682 = vmatmul.bf16.gmra.mxu0 %v1239
    %v4683 = vpop.f32.mrf.mxu0
    %v4684 = vadd.f32 %v4611, %v4683
    %v4685 = vpop.f32.mrf.mxu0
    %v4686 = vadd.f32 %v4613, %v4685
    %4687 = vmatmul.bf16.gmra.mxu0 %v1255
    %v4688 = vpop.f32.mrf.mxu0
    %v4689 = vadd.f32 %v4616, %v4688
    %v4690 = vpop.f32.mrf.mxu0
    %v4691 = vadd.f32 %v4618, %v4690
    %4692 = vmatmul.bf16.gmra.mxu0 %v1271
    %v4693 = vpop.f32.mrf.mxu0
    %v4694 = vadd.f32 %v4621, %v4693
    %v4695 = vpop.f32.mrf.mxu0
    %v4696 = vadd.f32 %v4623, %v4695
    %4697 = vmatmul.bf16.gmra.mxu0 %v1287
    %v4698 = vpop.f32.mrf.mxu0
    %v4699 = vadd.f32 %v4626, %v4698
    %v4700 = vpop.f32.mrf.mxu0
    %v4701 = vadd.f32 %v4628, %v4700
    %4702 = vmatmul.bf16.gmra.mxu0 %v1303
    %v4703 = vpop.f32.mrf.mxu0
    %v4704 = vadd.f32 %v4631, %v4703
    %v4705 = vpop.f32.mrf.mxu0
    %v4706 = vadd.f32 %v4633, %v4705
    %4707 = vmatmul.bf16.gmra.mxu0 %v1319
    %v4708 = vpop.f32.mrf.mxu0
    %v4709 = vadd.f32 %v4636, %v4708
    %v4710 = vpop.f32.mrf.mxu0
    %4711 = vdwg.mxu0
    %4712 = vmatpush.bf16.msra.mxu0 %v2477
    %4713 = vmatpush.bf16.msra.mxu0 %v2475
    %4714 = vmatpush.bf16.msra.mxu0 %v2473
    %4715 = vmatpush.bf16.msra.mxu0 %v2471
    %4716 = vmatpush.bf16.msra.mxu0 %v2469
    %4717 = vmatpush.bf16.msra.mxu0 %v2467
    %4718 = vmatpush.bf16.msra.mxu0 %v2465
    %4719 = vmatpush.bf16.msra.mxu0 %v2463
    %4720 = vmatmul.bf16.gmra.mxu0 %v1128
    %v4721 = vpop.f32.mrf.mxu0
    %v4722 = vadd.f32 %v4649, %v4721
    %v4723 = vpop.f32.mrf.mxu0
    %v4724 = vadd.f32 %v4651, %v4723
    %4725 = vmatmul.bf16.gmra.mxu0 %v1144
    %v4726 = vpop.f32.mrf.mxu0
    %v4727 = vadd.f32 %v4654, %v4726
    %v4728 = vpop.f32.mrf.mxu0
    %v4729 = vadd.f32 %v4656, %v4728
    %4730 = vmatmul.bf16.gmra.mxu0 %v1160
    %v4731 = vpop.f32.mrf.mxu0
    %v4732 = vadd.f32 %v4659, %v4731
    %v4733 = vpop.f32.mrf.mxu0
    %v4734 = vadd.f32 %v4661, %v4733
    %4735 = vmatmul.bf16.gmra.mxu0 %v1176
    %v4736 = vpop.f32.mrf.mxu0
    %v4737 = vadd.f32 %v4664, %v4736
    %v4738 = vpop.f32.mrf.mxu0
    %v4739 = vadd.f32 %v4666, %v4738
    %4740 = vmatmul.bf16.gmra.mxu0 %v1192
    %v4741 = vpop.f32.mrf.mxu0
    %v4742 = vadd.f32 %v4669, %v4741
    %v4743 = vpop.f32.mrf.mxu0
    %v4744 = vadd.f32 %v4671, %v4743
    %4745 = vmatmul.bf16.gmra.mxu0 %v1208
    %v4746 = vpop.f32.mrf.mxu0
    %v4747 = vadd.f32 %v4674, %v4746
    %v4748 = vpop.f32.mrf.mxu0
    %v4749 = vadd.f32 %v4676, %v4748
    %4750 = vmatmul.bf16.gmra.mxu0 %v1224
    %v4751 = vpop.f32.mrf.mxu0
    %v4752 = vadd.f32 %v4679, %v4751
    %v4753 = vpop.f32.mrf.mxu0
    %v4754 = vadd.f32 %v4681, %v4753
    %4755 = vmatmul.bf16.gmra.mxu0 %v1240
    %v4756 = vpop.f32.mrf.mxu0
    %v4757 = vadd.f32 %v4684, %v4756
    %v4758 = vpop.f32.mrf.mxu0
    %v4759 = vadd.f32 %v4686, %v4758
    %4760 = vmatmul.bf16.gmra.mxu0 %v1256
    %v4761 = vpop.f32.mrf.mxu0
    %v4762 = vadd.f32 %v4689, %v4761
    %v4763 = vpop.f32.mrf.mxu0
    %v4764 = vadd.f32 %v4691, %v4763
    %4765 = vmatmul.bf16.gmra.mxu0 %v1272
    %v4766 = vpop.f32.mrf.mxu0
    %v4767 = vadd.f32 %v4694, %v4766
    %v4768 = vpop.f32.mrf.mxu0
    %v4769 = vadd.f32 %v4696, %v4768
    %4770 = vmatmul.bf16.gmra.mxu0 %v1288
    %v4771 = vpop.f32.mrf.mxu0
    %v4772 = vadd.f32 %v4699, %v4771
    %v4773 = vpop.f32.mrf.mxu0
    %v4774 = vadd.f32 %v4701, %v4773
    %4775 = vmatmul.bf16.gmra.mxu0 %v1304
    %v4776 = vpop.f32.mrf.mxu0
    %v4777 = vadd.f32 %v4704, %v4776
    %v4778 = vpop.f32.mrf.mxu0
    %v4779 = vadd.f32 %v4706, %v4778
    %4780 = vmatmul.bf16.gmra.mxu0 %v1320
    %v4781 = vpop.f32.mrf.mxu0
    %v4782 = vadd.f32 %v4709, %v4781
    %v4783 = vpop.f32.mrf.mxu0
    %4784 = vdwg.mxu0
    %4785 = vmatpush.bf16.msra.mxu0 %v2493
    %4786 = vmatpush.bf16.msra.mxu0 %v2491
    %4787 = vmatpush.bf16.msra.mxu0 %v2489
    %4788 = vmatpush.bf16.msra.mxu0 %v2487
    %4789 = vmatpush.bf16.msra.mxu0 %v2485
    %4790 = vmatpush.bf16.msra.mxu0 %v2483
    %4791 = vmatpush.bf16.msra.mxu0 %v2481
    %4792 = vmatpush.bf16.msra.mxu0 %v2479
    %4793 = vmatmul.bf16.gmra.mxu0 %v1129
    %v4794 = vpop.f32.mrf.mxu0
    %v4795 = vadd.f32 %v4722, %v4794
    %v4796 = vpop.f32.mrf.mxu0
    %v4797 = vadd.f32 %v4724, %v4796
    %4798 = vmatmul.bf16.gmra.mxu0 %v1145
    %v4799 = vpop.f32.mrf.mxu0
    %v4800 = vadd.f32 %v4727, %v4799
    %v4801 = vpop.f32.mrf.mxu0
    %v4802 = vadd.f32 %v4729, %v4801
    %4803 = vmatmul.bf16.gmra.mxu0 %v1161
    %v4804 = vpop.f32.mrf.mxu0
    %v4805 = vadd.f32 %v4732, %v4804
    %v4806 = vpop.f32.mrf.mxu0
    %v4807 = vadd.f32 %v4734, %v4806
    %4808 = vmatmul.bf16.gmra.mxu0 %v1177
    %v4809 = vpop.f32.mrf.mxu0
    %v4810 = vadd.f32 %v4737, %v4809
    %v4811 = vpop.f32.mrf.mxu0
    %v4812 = vadd.f32 %v4739, %v4811
    %4813 = vmatmul.bf16.gmra.mxu0 %v1193
    %v4814 = vpop.f32.mrf.mxu0
    %v4815 = vadd.f32 %v4742, %v4814
    %v4816 = vpop.f32.mrf.mxu0
    %v4817 = vadd.f32 %v4744, %v4816
    %4818 = vmatmul.bf16.gmra.mxu0 %v1209
    %v4819 = vpop.f32.mrf.mxu0
    %v4820 = vadd.f32 %v4747, %v4819
    %v4821 = vpop.f32.mrf.mxu0
    %v4822 = vadd.f32 %v4749, %v4821
    %4823 = vmatmul.bf16.gmra.mxu0 %v1225
    %v4824 = vpop.f32.mrf.mxu0
    %v4825 = vadd.f32 %v4752, %v4824
    %v4826 = vpop.f32.mrf.mxu0
    %v4827 = vadd.f32 %v4754, %v4826
    %4828 = vmatmul.bf16.gmra.mxu0 %v1241
    %v4829 = vpop.f32.mrf.mxu0
    %v4830 = vadd.f32 %v4757, %v4829
    %v4831 = vpop.f32.mrf.mxu0
    %v4832 = vadd.f32 %v4759, %v4831
    %4833 = vmatmul.bf16.gmra.mxu0 %v1257
    %v4834 = vpop.f32.mrf.mxu0
    %v4835 = vadd.f32 %v4762, %v4834
    %v4836 = vpop.f32.mrf.mxu0
    %v4837 = vadd.f32 %v4764, %v4836
    %4838 = vmatmul.bf16.gmra.mxu0 %v1273
    %v4839 = vpop.f32.mrf.mxu0
    %v4840 = vadd.f32 %v4767, %v4839
    %v4841 = vpop.f32.mrf.mxu0
    %v4842 = vadd.f32 %v4769, %v4841
    %4843 = vmatmul.bf16.gmra.mxu0 %v1289
    %v4844 = vpop.f32.mrf.mxu0
    %v4845 = vadd.f32 %v4772, %v4844
    %v4846 = vpop.f32.mrf.mxu0
    %v4847 = vadd.f32 %v4774, %v4846
    %4848 = vmatmul.bf16.gmra.mxu0 %v1305
    %v4849 = vpop.f32.mrf.mxu0
    %v4850 = vadd.f32 %v4777, %v4849
    %v4851 = vpop.f32.mrf.mxu0
    %v4852 = vadd.f32 %v4779, %v4851
    %4853 = vmatmul.bf16.gmra.mxu0 %v1321
    %v4854 = vpop.f32.mrf.mxu0
    %v4855 = vadd.f32 %v4782, %v4854
    %v4856 = vpop.f32.mrf.mxu0
    %4857 = vdwg.mxu0
    %4858 = vmatpush.bf16.msra.mxu0 %v2509
    %4859 = vmatpush.bf16.msra.mxu0 %v2507
    %4860 = vmatpush.bf16.msra.mxu0 %v2505
    %4861 = vmatpush.bf16.msra.mxu0 %v2503
    %4862 = vmatpush.bf16.msra.mxu0 %v2501
    %4863 = vmatpush.bf16.msra.mxu0 %v2499
    %4864 = vmatpush.bf16.msra.mxu0 %v2497
    %4865 = vmatpush.bf16.msra.mxu0 %v2495
    %4866 = vmatmul.bf16.gmra.mxu0 %v1130
    %v4867 = vpop.f32.mrf.mxu0
    %v4868 = vadd.f32 %v4795, %v4867
    %v4869 = vpop.f32.mrf.mxu0
    %v4870 = vadd.f32 %v4797, %v4869
    %4871 = vmatmul.bf16.gmra.mxu0 %v1146
    %v4872 = vpop.f32.mrf.mxu0
    %v4873 = vadd.f32 %v4800, %v4872
    %v4874 = vpop.f32.mrf.mxu0
    %v4875 = vadd.f32 %v4802, %v4874
    %4876 = vmatmul.bf16.gmra.mxu0 %v1162
    %v4877 = vpop.f32.mrf.mxu0
    %v4878 = vadd.f32 %v4805, %v4877
    %v4879 = vpop.f32.mrf.mxu0
    %v4880 = vadd.f32 %v4807, %v4879
    %4881 = vmatmul.bf16.gmra.mxu0 %v1178
    %v4882 = vpop.f32.mrf.mxu0
    %v4883 = vadd.f32 %v4810, %v4882
    %v4884 = vpop.f32.mrf.mxu0
    %v4885 = vadd.f32 %v4812, %v4884
    %4886 = vmatmul.bf16.gmra.mxu0 %v1194
    %v4887 = vpop.f32.mrf.mxu0
    %v4888 = vadd.f32 %v4815, %v4887
    %v4889 = vpop.f32.mrf.mxu0
    %v4890 = vadd.f32 %v4817, %v4889
    %4891 = vmatmul.bf16.gmra.mxu0 %v1210
    %v4892 = vpop.f32.mrf.mxu0
    %v4893 = vadd.f32 %v4820, %v4892
    %v4894 = vpop.f32.mrf.mxu0
    %v4895 = vadd.f32 %v4822, %v4894
    %4896 = vmatmul.bf16.gmra.mxu0 %v1226
    %v4897 = vpop.f32.mrf.mxu0
    %v4898 = vadd.f32 %v4825, %v4897
    %v4899 = vpop.f32.mrf.mxu0
    %v4900 = vadd.f32 %v4827, %v4899
    %4901 = vmatmul.bf16.gmra.mxu0 %v1242
    %v4902 = vpop.f32.mrf.mxu0
    %v4903 = vadd.f32 %v4830, %v4902
    %v4904 = vpop.f32.mrf.mxu0
    %v4905 = vadd.f32 %v4832, %v4904
    %4906 = vmatmul.bf16.gmra.mxu0 %v1258
    %v4907 = vpop.f32.mrf.mxu0
    %v4908 = vadd.f32 %v4835, %v4907
    %v4909 = vpop.f32.mrf.mxu0
    %v4910 = vadd.f32 %v4837, %v4909
    %4911 = vmatmul.bf16.gmra.mxu0 %v1274
    %v4912 = vpop.f32.mrf.mxu0
    %v4913 = vadd.f32 %v4840, %v4912
    %v4914 = vpop.f32.mrf.mxu0
    %v4915 = vadd.f32 %v4842, %v4914
    %4916 = vmatmul.bf16.gmra.mxu0 %v1290
    %v4917 = vpop.f32.mrf.mxu0
    %v4918 = vadd.f32 %v4845, %v4917
    %v4919 = vpop.f32.mrf.mxu0
    %v4920 = vadd.f32 %v4847, %v4919
    %4921 = vmatmul.bf16.gmra.mxu0 %v1306
    %v4922 = vpop.f32.mrf.mxu0
    %v4923 = vadd.f32 %v4850, %v4922
    %v4924 = vpop.f32.mrf.mxu0
    %v4925 = vadd.f32 %v4852, %v4924
    %4926 = vmatmul.bf16.gmra.mxu0 %v1322
    %v4927 = vpop.f32.mrf.mxu0
    %v4928 = vadd.f32 %v4855, %v4927
    %v4929 = vpop.f32.mrf.mxu0
    %4930 = vdwg.mxu0
    %4931 = vmatpush.bf16.msra.mxu0 %v2525
    %4932 = vmatpush.bf16.msra.mxu0 %v2523
    %4933 = vmatpush.bf16.msra.mxu0 %v2521
    %4934 = vmatpush.bf16.msra.mxu0 %v2519
    %4935 = vmatpush.bf16.msra.mxu0 %v2517
    %4936 = vmatpush.bf16.msra.mxu0 %v2515
    %4937 = vmatpush.bf16.msra.mxu0 %v2513
    %4938 = vmatpush.bf16.msra.mxu0 %v2511
    %4939 = vmatmul.bf16.gmra.mxu0 %v1131
    %v4940 = vpop.f32.mrf.mxu0
    %v4941 = vadd.f32 %v4868, %v4940
    %v4942 = vpop.f32.mrf.mxu0
    %v4943 = vadd.f32 %v4870, %v4942
    %4944 = vmatmul.bf16.gmra.mxu0 %v1147
    %v4945 = vpop.f32.mrf.mxu0
    %v4946 = vadd.f32 %v4873, %v4945
    %v4947 = vpop.f32.mrf.mxu0
    %v4948 = vadd.f32 %v4875, %v4947
    %4949 = vmatmul.bf16.gmra.mxu0 %v1163
    %v4950 = vpop.f32.mrf.mxu0
    %v4951 = vadd.f32 %v4878, %v4950
    %v4952 = vpop.f32.mrf.mxu0
    %v4953 = vadd.f32 %v4880, %v4952
    %4954 = vmatmul.bf16.gmra.mxu0 %v1179
    %v4955 = vpop.f32.mrf.mxu0
    %v4956 = vadd.f32 %v4883, %v4955
    %v4957 = vpop.f32.mrf.mxu0
    %v4958 = vadd.f32 %v4885, %v4957
    %4959 = vmatmul.bf16.gmra.mxu0 %v1195
    %v4960 = vpop.f32.mrf.mxu0
    %v4961 = vadd.f32 %v4888, %v4960
    %v4962 = vpop.f32.mrf.mxu0
    %v4963 = vadd.f32 %v4890, %v4962
    %4964 = vmatmul.bf16.gmra.mxu0 %v1211
    %v4965 = vpop.f32.mrf.mxu0
    %v4966 = vadd.f32 %v4893, %v4965
    %v4967 = vpop.f32.mrf.mxu0
    %v4968 = vadd.f32 %v4895, %v4967
    %4969 = vmatmul.bf16.gmra.mxu0 %v1227
    %v4970 = vpop.f32.mrf.mxu0
    %v4971 = vadd.f32 %v4898, %v4970
    %v4972 = vpop.f32.mrf.mxu0
    %v4973 = vadd.f32 %v4900, %v4972
    %4974 = vmatmul.bf16.gmra.mxu0 %v1243
    %v4975 = vpop.f32.mrf.mxu0
    %v4976 = vadd.f32 %v4903, %v4975
    %v4977 = vpop.f32.mrf.mxu0
    %v4978 = vadd.f32 %v4905, %v4977
    %4979 = vmatmul.bf16.gmra.mxu0 %v1259
    %v4980 = vpop.f32.mrf.mxu0
    %v4981 = vadd.f32 %v4908, %v4980
    %v4982 = vpop.f32.mrf.mxu0
    %v4983 = vadd.f32 %v4910, %v4982
    %4984 = vmatmul.bf16.gmra.mxu0 %v1275
    %v4985 = vpop.f32.mrf.mxu0
    %v4986 = vadd.f32 %v4913, %v4985
    %v4987 = vpop.f32.mrf.mxu0
    %v4988 = vadd.f32 %v4915, %v4987
    %4989 = vmatmul.bf16.gmra.mxu0 %v1291
    %v4990 = vpop.f32.mrf.mxu0
    %v4991 = vadd.f32 %v4918, %v4990
    %v4992 = vpop.f32.mrf.mxu0
    %v4993 = vadd.f32 %v4920, %v4992
    %4994 = vmatmul.bf16.gmra.mxu0 %v1307
    %v4995 = vpop.f32.mrf.mxu0
    %v4996 = vadd.f32 %v4923, %v4995
    %v4997 = vpop.f32.mrf.mxu0
    %v4998 = vadd.f32 %v4925, %v4997
    %4999 = vmatmul.bf16.gmra.mxu0 %v1323
    %v5000 = vpop.f32.mrf.mxu0
    %v5001 = vadd.f32 %v4928, %v5000
    %v5002 = vpop.f32.mrf.mxu0
    %5003 = vdwg.mxu0
    %5004 = vmatpush.bf16.msra.mxu0 %v2541
    %5005 = vmatpush.bf16.msra.mxu0 %v2539
    %5006 = vmatpush.bf16.msra.mxu0 %v2537
    %5007 = vmatpush.bf16.msra.mxu0 %v2535
    %5008 = vmatpush.bf16.msra.mxu0 %v2533
    %5009 = vmatpush.bf16.msra.mxu0 %v2531
    %5010 = vmatpush.bf16.msra.mxu0 %v2529
    %5011 = vmatpush.bf16.msra.mxu0 %v2527
    %5012 = vmatmul.bf16.gmra.mxu0 %v1132
    %v5013 = vpop.f32.mrf.mxu0
    %v5014 = vadd.f32 %v4941, %v5013
    %v5015 = vpop.f32.mrf.mxu0
    %v5016 = vadd.f32 %v4943, %v5015
    %5017 = vmatmul.bf16.gmra.mxu0 %v1148
    %v5018 = vpop.f32.mrf.mxu0
    %v5019 = vadd.f32 %v4946, %v5018
    %v5020 = vpop.f32.mrf.mxu0
    %v5021 = vadd.f32 %v4948, %v5020
    %5022 = vmatmul.bf16.gmra.mxu0 %v1164
    %v5023 = vpop.f32.mrf.mxu0
    %v5024 = vadd.f32 %v4951, %v5023
    %v5025 = vpop.f32.mrf.mxu0
    %v5026 = vadd.f32 %v4953, %v5025
    %5027 = vmatmul.bf16.gmra.mxu0 %v1180
    %v5028 = vpop.f32.mrf.mxu0
    %v5029 = vadd.f32 %v4956, %v5028
    %v5030 = vpop.f32.mrf.mxu0
    %v5031 = vadd.f32 %v4958, %v5030
    %5032 = vmatmul.bf16.gmra.mxu0 %v1196
    %v5033 = vpop.f32.mrf.mxu0
    %v5034 = vadd.f32 %v4961, %v5033
    %v5035 = vpop.f32.mrf.mxu0
    %v5036 = vadd.f32 %v4963, %v5035
    %5037 = vmatmul.bf16.gmra.mxu0 %v1212
    %v5038 = vpop.f32.mrf.mxu0
    %v5039 = vadd.f32 %v4966, %v5038
    %v5040 = vpop.f32.mrf.mxu0
    %v5041 = vadd.f32 %v4968, %v5040
    %5042 = vmatmul.bf16.gmra.mxu0 %v1228
    %v5043 = vpop.f32.mrf.mxu0
    %v5044 = vadd.f32 %v4971, %v5043
    %v5045 = vpop.f32.mrf.mxu0
    %v5046 = vadd.f32 %v4973, %v5045
    %5047 = vmatmul.bf16.gmra.mxu0 %v1244
    %v5048 = vpop.f32.mrf.mxu0
    %v5049 = vadd.f32 %v4976, %v5048
    %v5050 = vpop.f32.mrf.mxu0
    %v5051 = vadd.f32 %v4978, %v5050
    %5052 = vmatmul.bf16.gmra.mxu0 %v1260
    %v5053 = vpop.f32.mrf.mxu0
    %v5054 = vadd.f32 %v4981, %v5053
    %v5055 = vpop.f32.mrf.mxu0
    %v5056 = vadd.f32 %v4983, %v5055
    %5057 = vmatmul.bf16.gmra.mxu0 %v1276
    %v5058 = vpop.f32.mrf.mxu0
    %v5059 = vadd.f32 %v4986, %v5058
    %v5060 = vpop.f32.mrf.mxu0
    %v5061 = vadd.f32 %v4988, %v5060
    %5062 = vmatmul.bf16.gmra.mxu0 %v1292
    %v5063 = vpop.f32.mrf.mxu0
    %v5064 = vadd.f32 %v4991, %v5063
    %v5065 = vpop.f32.mrf.mxu0
    %v5066 = vadd.f32 %v4993, %v5065
    %5067 = vmatmul.bf16.gmra.mxu0 %v1308
    %v5068 = vpop.f32.mrf.mxu0
    %v5069 = vadd.f32 %v4996, %v5068
    %v5070 = vpop.f32.mrf.mxu0
    %v5071 = vadd.f32 %v4998, %v5070
    %5072 = vmatmul.bf16.gmra.mxu0 %v1324
    %v5073 = vpop.f32.mrf.mxu0
    %v5074 = vadd.f32 %v5001, %v5073
    %v5075 = vpop.f32.mrf.mxu0
    %5076 = vdwg.mxu0
    %5077 = vmatpush.bf16.msra.mxu0 %v2557
    %5078 = vmatpush.bf16.msra.mxu0 %v2555
    %5079 = vmatpush.bf16.msra.mxu0 %v2553
    %5080 = vmatpush.bf16.msra.mxu0 %v2551
    %5081 = vmatpush.bf16.msra.mxu0 %v2549
    %5082 = vmatpush.bf16.msra.mxu0 %v2547
    %5083 = vmatpush.bf16.msra.mxu0 %v2545
    %5084 = vmatpush.bf16.msra.mxu0 %v2543
    %5085 = vmatmul.bf16.gmra.mxu0 %v1133
    %v5086 = vpop.f32.mrf.mxu0
    %v5087 = vadd.f32 %v5014, %v5086
    %v5088 = vpop.f32.mrf.mxu0
    %v5089 = vadd.f32 %v5016, %v5088
    %5090 = vmatmul.bf16.gmra.mxu0 %v1149
    %v5091 = vpop.f32.mrf.mxu0
    %v5092 = vadd.f32 %v5019, %v5091
    %v5093 = vpop.f32.mrf.mxu0
    %v5094 = vadd.f32 %v5021, %v5093
    %5095 = vmatmul.bf16.gmra.mxu0 %v1165
    %v5096 = vpop.f32.mrf.mxu0
    %v5097 = vadd.f32 %v5024, %v5096
    %v5098 = vpop.f32.mrf.mxu0
    %v5099 = vadd.f32 %v5026, %v5098
    %5100 = vmatmul.bf16.gmra.mxu0 %v1181
    %v5101 = vpop.f32.mrf.mxu0
    %v5102 = vadd.f32 %v5029, %v5101
    %v5103 = vpop.f32.mrf.mxu0
    %v5104 = vadd.f32 %v5031, %v5103
    %5105 = vmatmul.bf16.gmra.mxu0 %v1197
    %v5106 = vpop.f32.mrf.mxu0
    %v5107 = vadd.f32 %v5034, %v5106
    %v5108 = vpop.f32.mrf.mxu0
    %v5109 = vadd.f32 %v5036, %v5108
    %5110 = vmatmul.bf16.gmra.mxu0 %v1213
    %v5111 = vpop.f32.mrf.mxu0
    %v5112 = vadd.f32 %v5039, %v5111
    %v5113 = vpop.f32.mrf.mxu0
    %v5114 = vadd.f32 %v5041, %v5113
    %5115 = vmatmul.bf16.gmra.mxu0 %v1229
    %v5116 = vpop.f32.mrf.mxu0
    %v5117 = vadd.f32 %v5044, %v5116
    %v5118 = vpop.f32.mrf.mxu0
    %v5119 = vadd.f32 %v5046, %v5118
    %5120 = vmatmul.bf16.gmra.mxu0 %v1245
    %v5121 = vpop.f32.mrf.mxu0
    %v5122 = vadd.f32 %v5049, %v5121
    %v5123 = vpop.f32.mrf.mxu0
    %v5124 = vadd.f32 %v5051, %v5123
    %5125 = vmatmul.bf16.gmra.mxu0 %v1261
    %v5126 = vpop.f32.mrf.mxu0
    %v5127 = vadd.f32 %v5054, %v5126
    %v5128 = vpop.f32.mrf.mxu0
    %v5129 = vadd.f32 %v5056, %v5128
    %5130 = vmatmul.bf16.gmra.mxu0 %v1277
    %v5131 = vpop.f32.mrf.mxu0
    %v5132 = vadd.f32 %v5059, %v5131
    %v5133 = vpop.f32.mrf.mxu0
    %v5134 = vadd.f32 %v5061, %v5133
    %5135 = vmatmul.bf16.gmra.mxu0 %v1293
    %v5136 = vpop.f32.mrf.mxu0
    %v5137 = vadd.f32 %v5064, %v5136
    %v5138 = vpop.f32.mrf.mxu0
    %v5139 = vadd.f32 %v5066, %v5138
    %5140 = vmatmul.bf16.gmra.mxu0 %v1309
    %v5141 = vpop.f32.mrf.mxu0
    %v5142 = vadd.f32 %v5069, %v5141
    %v5143 = vpop.f32.mrf.mxu0
    %v5144 = vadd.f32 %v5071, %v5143
    %5145 = vmatmul.bf16.gmra.mxu0 %v1325
    %v5146 = vpop.f32.mrf.mxu0
    %v5147 = vadd.f32 %v5074, %v5146
    %v5148 = vpop.f32.mrf.mxu0
    %5149 = vdwg.mxu0
    %v5150 = vld [vmem:[%s3] sm:$0xff]
    %v5151 = vld [vmem:[%s3 + $0x8] sm:$0xff]
    %v5152 = vld [vmem:[%s3 + $0x10] sm:$0xff]
    %v5153 = vld [vmem:[%s3 + $0x18] sm:$0xff]
    %v5154 = vld [vmem:[%s3 + $0x20] sm:$0xff]
    %v5155 = vld [vmem:[%s3 + $0x28] sm:$0xff]
    %v5156 = vld [vmem:[%s3 + $0x30] sm:$0xff]
    %v5157 = vld [vmem:[%s3 + $0x38] sm:$0xff]
    %v5158 = vld [vmem:[%s3 + $0x40] sm:$0xff]
    %v5159 = vld [vmem:[%s3 + $0x48] sm:$0xff]
    %v5160 = vld [vmem:[%s3 + $0x50] sm:$0xff]
    %v5161 = vld [vmem:[%s3 + $0x58] sm:$0xff]
    %v5162 = vld [vmem:[%s3 + $0x60] sm:$0xff]
    %v5163 = vld [vmem:[%s3 + $0x68] sm:$0xff]
    %v5164 = vld [vmem:[%s3 + $0x70] sm:$0xff]
    %v5165 = vld [vmem:[%s3 + $0x78] sm:$0xff]
    %v5166 = vld [vmem:[%s3 + $0x80] sm:$0xff]
    %v5167 = vld [vmem:[%s3 + $0x88] sm:$0xff]
    %v5168 = vld [vmem:[%s3 + $0x90] sm:$0xff]
    %v5169 = vld [vmem:[%s3 + $0x98] sm:$0xff]
    %v5170 = vld [vmem:[%s3 + $0xa0] sm:$0xff]
    %v5171 = vld [vmem:[%s3 + $0xa8] sm:$0xff]
    %v5172 = vld [vmem:[%s3 + $0xb0] sm:$0xff]
    %v5173 = vld [vmem:[%s3 + $0xb8] sm:$0xff]
    %v5174 = vld [vmem:[%s3 + $0xc0] sm:$0xff]
    %v5175 = vld [vmem:[%s3 + $0xc8] sm:$0xff]
    %v5176 = vld [vmem:[%s3 + $0xd0] sm:$0xff]
    %v5177 = vld [vmem:[%s3 + $0xd8] sm:$0xff]
    %v5178 = vld [vmem:[%s3 + $0xe0] sm:$0xff]
    %v5179 = vld [vmem:[%s3 + $0xe8] sm:$0xff]
    %v5180 = vld [vmem:[%s3 + $0xf0] sm:$0xff]
    %v5181 = vld [vmem:[%s3 + $0xf8] sm:$0xff]
    %v5182 = vld [vmem:[%s3 + $0x100] sm:$0xff]
    %v5183 = vld [vmem:[%s3 + $0x108] sm:$0xff]
    %v5184 = vld [vmem:[%s3 + $0x110] sm:$0xff]
    %v5185 = vld [vmem:[%s3 + $0x118] sm:$0xff]
    %v5186 = vld [vmem:[%s3 + $0x120] sm:$0xff]
    %v5187 = vld [vmem:[%s3 + $0x128] sm:$0xff]
    %v5188 = vld [vmem:[%s3 + $0x130] sm:$0xff]
    %v5189 = vld [vmem:[%s3 + $0x138] sm:$0xff]
    %v5190 = vld [vmem:[%s3 + $0x140] sm:$0xff]
    %v5191 = vld [vmem:[%s3 + $0x148] sm:$0xff]
    %v5192 = vld [vmem:[%s3 + $0x150] sm:$0xff]
    %v5193 = vld [vmem:[%s3 + $0x158] sm:$0xff]
    %v5194 = vld [vmem:[%s3 + $0x160] sm:$0xff]
    %v5195 = vld [vmem:[%s3 + $0x168] sm:$0xff]
    %v5196 = vld [vmem:[%s3 + $0x170] sm:$0xff]
    %v5197 = vld [vmem:[%s3 + $0x178] sm:$0xff]
    %v5198 = vld [vmem:[%s3 + $0x180] sm:$0xf]
    %v5199 = vld [vmem:[%s3 + $0x188] sm:$0xf]
    %v5200 = vmul.f32 %v3919, %v5150
    %v5201 = vmul.f32 %v5087, %v5151
    %v5202 = vmul.f32 %v3921, %v5152
    %v5203 = vmul.f32 %v5089, %v5153
    %v5204 = vmul.f32 %v3924, %v5154
    %v5205 = vmul.f32 %v5092, %v5155
    %v5206 = vmul.f32 %v3926, %v5156
    %v5207 = vmul.f32 %v5094, %v5157
    %v5208 = vmul.f32 %v3929, %v5158
    %v5209 = vmul.f32 %v5097, %v5159
    %v5210 = vmul.f32 %v3931, %v5160
    %v5211 = vmul.f32 %v5099, %v5161
    %v5212 = vmul.f32 %v3934, %v5162
    %v5213 = vmul.f32 %v5102, %v5163
    %v5214 = vmul.f32 %v3936, %v5164
    %v5215 = vmul.f32 %v5104, %v5165
    %v5216 = vmul.f32 %v3939, %v5166
    %v5217 = vmul.f32 %v5107, %v5167
    %v5218 = vmul.f32 %v3941, %v5168
    %v5219 = vmul.f32 %v5109, %v5169
    %v5220 = vmul.f32 %v3944, %v5170
    %v5221 = vmul.f32 %v5112, %v5171
    %v5222 = vmul.f32 %v3946, %v5172
    %v5223 = vmul.f32 %v5114, %v5173
    %v5224 = vmul.f32 %v3949, %v5174
    %v5225 = vmul.f32 %v5117, %v5175
    %v5226 = vmul.f32 %v3951, %v5176
    %v5227 = vmul.f32 %v5119, %v5177
    %v5228 = vmul.f32 %v3954, %v5178
    %v5229 = vmul.f32 %v5122, %v5179
    %v5230 = vmul.f32 %v3956, %v5180
    %v5231 = vmul.f32 %v5124, %v5181
    %v5232 = vmul.f32 %v3959, %v5182
    %v5233 = vmul.f32 %v5127, %v5183
    %v5234 = vmul.f32 %v3961, %v5184
    %v5235 = vmul.f32 %v5129, %v5185
    %v5236 = vmul.f32 %v3964, %v5186
    %v5237 = vmul.f32 %v5132, %v5187
    %v5238 = vmul.f32 %v3966, %v5188
    %v5239 = vmul.f32 %v5134, %v5189
    %v5240 = vmul.f32 %v3969, %v5190
    %v5241 = vmul.f32 %v5137, %v5191
    %v5242 = vmul.f32 %v3971, %v5192
    %v5243 = vmul.f32 %v5139, %v5193
    %v5244 = vmul.f32 %v3974, %v5194
    %v5245 = vmul.f32 %v5142, %v5195
    %v5246 = vmul.f32 %v3976, %v5196
    %v5247 = vmul.f32 %v5144, %v5197
    %v5248 = vmul.f32 %v3979, %v5198
    %v5249 = vmul.f32 %v5147, %v5199
    %v5250 = vadd.f32 %v5200, %v5201
    %5251 = vadd.xlane.f32.xlu0 %v5250
    %v5252 = vpop.xlane.xlu0 %5251
    %v5253 = vadd.f32 %v5202, %v5203
    %5254 = vadd.xlane.f32.xlu0 %v5253
    %v5255 = vpop.xlane.xlu0 %5254
    %v5256 = vadd.f32 %v5204, %v5205
    %5257 = vadd.xlane.f32.xlu0 %v5256
    %v5258 = vpop.xlane.xlu0 %5257
    %v5259 = vadd.f32 %v5206, %v5207
    %5260 = vadd.xlane.f32.xlu0 %v5259
    %v5261 = vpop.xlane.xlu0 %5260
    %v5262 = vadd.f32 %v5208, %v5209
    %5263 = vadd.xlane.f32.xlu0 %v5262
    %v5264 = vpop.xlane.xlu0 %5263
    %v5265 = vadd.f32 %v5210, %v5211
    %5266 = vadd.xlane.f32.xlu0 %v5265
    %v5267 = vpop.xlane.xlu0 %5266
    %v5268 = vadd.f32 %v5212, %v5213
    %5269 = vadd.xlane.f32.xlu0 %v5268
    %v5270 = vpop.xlane.xlu0 %5269
    %v5271 = vadd.f32 %v5214, %v5215
    %5272 = vadd.xlane.f32.xlu0 %v5271
    %v5273 = vpop.xlane.xlu0 %5272
    %v5274 = vadd.f32 %v5216, %v5217
    %5275 = vadd.xlane.f32.xlu0 %v5274
    %v5276 = vpop.xlane.xlu0 %5275
    %v5277 = vadd.f32 %v5218, %v5219
    %5278 = vadd.xlane.f32.xlu0 %v5277
    %v5279 = vpop.xlane.xlu0 %5278
    %v5280 = vadd.f32 %v5220, %v5221
    %5281 = vadd.xlane.f32.xlu0 %v5280
    %v5282 = vpop.xlane.xlu0 %5281
    %v5283 = vadd.f32 %v5222, %v5223
    %5284 = vadd.xlane.f32.xlu0 %v5283
    %v5285 = vpop.xlane.xlu0 %5284
    %v5286 = vadd.f32 %v5224, %v5225
    %5287 = vadd.xlane.f32.xlu0 %v5286
    %v5288 = vpop.xlane.xlu0 %5287
    %v5289 = vadd.f32 %v5226, %v5227
    %5290 = vadd.xlane.f32.xlu0 %v5289
    %v5291 = vpop.xlane.xlu0 %5290
    %v5292 = vadd.f32 %v5228, %v5229
    %5293 = vadd.xlane.f32.xlu0 %v5292
    %v5294 = vpop.xlane.xlu0 %5293
    %v5295 = vadd.f32 %v5230, %v5231
    %5296 = vadd.xlane.f32.xlu0 %v5295
    %v5297 = vpop.xlane.xlu0 %5296
    %v5298 = vadd.f32 %v5232, %v5233
    %5299 = vadd.xlane.f32.xlu0 %v5298
    %v5300 = vpop.xlane.xlu0 %5299
    %v5301 = vadd.f32 %v5234, %v5235
    %5302 = vadd.xlane.f32.xlu0 %v5301
    %v5303 = vpop.xlane.xlu0 %5302
    %v5304 = vadd.f32 %v5236, %v5237
    %5305 = vadd.xlane.f32.xlu0 %v5304
    %v5306 = vpop.xlane.xlu0 %5305
    %v5307 = vadd.f32 %v5238, %v5239
    %5308 = vadd.xlane.f32.xlu0 %v5307
    %v5309 = vpop.xlane.xlu0 %5308
    %v5310 = vadd.f32 %v5240, %v5241
    %5311 = vadd.xlane.f32.xlu0 %v5310
    %v5312 = vpop.xlane.xlu0 %5311
    %v5313 = vadd.f32 %v5242, %v5243
    %5314 = vadd.xlane.f32.xlu0 %v5313
    %v5315 = vpop.xlane.xlu0 %5314
    %v5316 = vadd.f32 %v5244, %v5245
    %5317 = vadd.xlane.f32.xlu0 %v5316
    %v5318 = vpop.xlane.xlu0 %5317
    %v5319 = vadd.f32 %v5246, %v5247
    %5320 = vadd.xlane.f32.xlu0 %v5319
    %v5321 = vpop.xlane.xlu0 %5320
    %vm5322 = vcmask 1043456
    %v5323 = vsel %vm5322, %v5248, 0.0
    %v5324 = vsel %vm5322, %v5249, 0.0
    %v5325 = vadd.f32 %v5323, %v5324
    %5326 = vadd.xlane.f32.xlu0 %v5325
    %v5327 = vpop.xlane.xlu0 %5326
    %v5328 = vmul.f32 %v3919, %v3919
    %v5329 = vmul.f32 %v5087, %v5087
    %v5330 = vmul.f32 %v3921, %v3921
    %v5331 = vmul.f32 %v5089, %v5089
    %v5332 = vmul.f32 %v3924, %v3924
    %v5333 = vmul.f32 %v5092, %v5092
    %v5334 = vmul.f32 %v3926, %v3926
    %v5335 = vmul.f32 %v5094, %v5094
    %v5336 = vmul.f32 %v3929, %v3929
    %v5337 = vmul.f32 %v5097, %v5097
    %v5338 = vmul.f32 %v3931, %v3931
    %v5339 = vmul.f32 %v5099, %v5099
    %v5340 = vmul.f32 %v3934, %v3934
    %v5341 = vmul.f32 %v5102, %v5102
    %v5342 = vmul.f32 %v3936, %v3936
    %v5343 = vmul.f32 %v5104, %v5104
    %v5344 = vmul.f32 %v3939, %v3939
    %v5345 = vmul.f32 %v5107, %v5107
    %v5346 = vmul.f32 %v3941, %v3941
    %v5347 = vmul.f32 %v5109, %v5109
    %v5348 = vmul.f32 %v3944, %v3944
    %v5349 = vmul.f32 %v5112, %v5112
    %v5350 = vmul.f32 %v3946, %v3946
    %v5351 = vmul.f32 %v5114, %v5114
    %v5352 = vmul.f32 %v3949, %v3949
    %v5353 = vmul.f32 %v5117, %v5117
    %v5354 = vmul.f32 %v3951, %v3951
    %v5355 = vmul.f32 %v5119, %v5119
    %v5356 = vmul.f32 %v3954, %v3954
    %v5357 = vmul.f32 %v5122, %v5122
    %v5358 = vmul.f32 %v3956, %v3956
    %v5359 = vmul.f32 %v5124, %v5124
    %v5360 = vmul.f32 %v3959, %v3959
    %v5361 = vmul.f32 %v5127, %v5127
    %v5362 = vmul.f32 %v3961, %v3961
    %v5363 = vmul.f32 %v5129, %v5129
    %v5364 = vmul.f32 %v3964, %v3964
    %v5365 = vmul.f32 %v5132, %v5132
    %v5366 = vmul.f32 %v3966, %v3966
    %v5367 = vmul.f32 %v5134, %v5134
    %v5368 = vmul.f32 %v3969, %v3969
    %v5369 = vmul.f32 %v5137, %v5137
    %v5370 = vmul.f32 %v3971, %v3971
    %v5371 = vmul.f32 %v5139, %v5139
    %v5372 = vmul.f32 %v3974, %v3974
    %v5373 = vmul.f32 %v5142, %v5142
    %v5374 = vmul.f32 %v3976, %v3976
    %v5375 = vmul.f32 %v5144, %v5144
    %v5376 = vmul.f32 %v3979, %v3979
    %v5377 = vmul.f32 %v5147, %v5147
    %v5378 = vadd.f32 %v5328, %v5329
    %5379 = vadd.xlane.f32.xlu0 %v5378
    %v5380 = vpop.xlane.xlu0 %5379
    %v5381 = vadd.f32 %v5330, %v5331
    %5382 = vadd.xlane.f32.xlu0 %v5381
    %v5383 = vpop.xlane.xlu0 %5382
    %v5384 = vadd.f32 %v5332, %v5333
    %5385 = vadd.xlane.f32.xlu0 %v5384
    %v5386 = vpop.xlane.xlu0 %5385
    %v5387 = vadd.f32 %v5334, %v5335
    %5388 = vadd.xlane.f32.xlu0 %v5387
    %v5389 = vpop.xlane.xlu0 %5388
    %v5390 = vadd.f32 %v5336, %v5337
    %5391 = vadd.xlane.f32.xlu0 %v5390
    %v5392 = vpop.xlane.xlu0 %5391
    %v5393 = vadd.f32 %v5338, %v5339
    %5394 = vadd.xlane.f32.xlu0 %v5393
    %v5395 = vpop.xlane.xlu0 %5394
    %v5396 = vadd.f32 %v5340, %v5341
    %5397 = vadd.xlane.f32.xlu0 %v5396
    %v5398 = vpop.xlane.xlu0 %5397
    %v5399 = vadd.f32 %v5342, %v5343
    %5400 = vadd.xlane.f32.xlu0 %v5399
    %v5401 = vpop.xlane.xlu0 %5400
    %v5402 = vadd.f32 %v5344, %v5345
    %5403 = vadd.xlane.f32.xlu0 %v5402
    %v5404 = vpop.xlane.xlu0 %5403
    %v5405 = vadd.f32 %v5346, %v5347
    %5406 = vadd.xlane.f32.xlu0 %v5405
    %v5407 = vpop.xlane.xlu0 %5406
    %v5408 = vadd.f32 %v5348, %v5349
    %5409 = vadd.xlane.f32.xlu0 %v5408
    %v5410 = vpop.xlane.xlu0 %5409
    %v5411 = vadd.f32 %v5350, %v5351
    %5412 = vadd.xlane.f32.xlu0 %v5411
    %v5413 = vpop.xlane.xlu0 %5412
    %v5414 = vadd.f32 %v5352, %v5353
    %5415 = vadd.xlane.f32.xlu0 %v5414
    %v5416 = vpop.xlane.xlu0 %5415
    %v5417 = vadd.f32 %v5354, %v5355
    %5418 = vadd.xlane.f32.xlu0 %v5417
    %v5419 = vpop.xlane.xlu0 %5418
    %v5420 = vadd.f32 %v5356, %v5357
    %5421 = vadd.xlane.f32.xlu0 %v5420
    %v5422 = vpop.xlane.xlu0 %5421
    %v5423 = vadd.f32 %v5358, %v5359
    %5424 = vadd.xlane.f32.xlu0 %v5423
    %v5425 = vpop.xlane.xlu0 %5424
    %v5426 = vadd.f32 %v5360, %v5361
    %5427 = vadd.xlane.f32.xlu0 %v5426
    %v5428 = vpop.xlane.xlu0 %5427
    %v5429 = vadd.f32 %v5362, %v5363
    %5430 = vadd.xlane.f32.xlu0 %v5429
    %v5431 = vpop.xlane.xlu0 %5430
    %v5432 = vadd.f32 %v5364, %v5365
    %5433 = vadd.xlane.f32.xlu0 %v5432
    %v5434 = vpop.xlane.xlu0 %5433
    %v5435 = vadd.f32 %v5366, %v5367
    %5436 = vadd.xlane.f32.xlu0 %v5435
    %v5437 = vpop.xlane.xlu0 %5436
    %v5438 = vadd.f32 %v5368, %v5369
    %5439 = vadd.xlane.f32.xlu0 %v5438
    %v5440 = vpop.xlane.xlu0 %5439
    %v5441 = vadd.f32 %v5370, %v5371
    %5442 = vadd.xlane.f32.xlu0 %v5441
    %v5443 = vpop.xlane.xlu0 %5442
    %v5444 = vadd.f32 %v5372, %v5373
    %5445 = vadd.xlane.f32.xlu0 %v5444
    %v5446 = vpop.xlane.xlu0 %5445
    %v5447 = vadd.f32 %v5374, %v5375
    %5448 = vadd.xlane.f32.xlu0 %v5447
    %v5449 = vpop.xlane.xlu0 %5448
    %v5450 = vsel %vm5322, %v5376, 0.0
    %v5451 = vsel %vm5322, %v5377, 0.0
    %v5452 = vadd.f32 %v5450, %v5451
    %5453 = vadd.xlane.f32.xlu0 %v5452
    %v5454 = vpop.xlane.xlu0 %5453
    %v5455 = vmul.f32 %v5150, %v5150
    %v5456 = vmul.f32 %v5151, %v5151
    %v5457 = vmul.f32 %v5152, %v5152
    %v5458 = vmul.f32 %v5153, %v5153
    %v5459 = vmul.f32 %v5154, %v5154
    %v5460 = vmul.f32 %v5155, %v5155
    %v5461 = vmul.f32 %v5156, %v5156
    %v5462 = vmul.f32 %v5157, %v5157
    %v5463 = vmul.f32 %v5158, %v5158
    %v5464 = vmul.f32 %v5159, %v5159
    %v5465 = vmul.f32 %v5160, %v5160
    %v5466 = vmul.f32 %v5161, %v5161
    %v5467 = vmul.f32 %v5162, %v5162
    %v5468 = vmul.f32 %v5163, %v5163
    %v5469 = vmul.f32 %v5164, %v5164
    %v5470 = vmul.f32 %v5165, %v5165
    %v5471 = vmul.f32 %v5166, %v5166
    %v5472 = vmul.f32 %v5167, %v5167
    %v5473 = vmul.f32 %v5168, %v5168
    %v5474 = vmul.f32 %v5169, %v5169
    %v5475 = vmul.f32 %v5170, %v5170
    %v5476 = vmul.f32 %v5171, %v5171
    %v5477 = vmul.f32 %v5172, %v5172
    %v5478 = vmul.f32 %v5173, %v5173
    %v5479 = vmul.f32 %v5174, %v5174
    %v5480 = vmul.f32 %v5175, %v5175
    %v5481 = vmul.f32 %v5176, %v5176
    %v5482 = vmul.f32 %v5177, %v5177
    %v5483 = vmul.f32 %v5178, %v5178
    %v5484 = vmul.f32 %v5179, %v5179
    %v5485 = vmul.f32 %v5180, %v5180
    %v5486 = vmul.f32 %v5181, %v5181
    %v5487 = vmul.f32 %v5182, %v5182
    %v5488 = vmul.f32 %v5183, %v5183
    %v5489 = vmul.f32 %v5184, %v5184
    %v5490 = vmul.f32 %v5185, %v5185
    %v5491 = vmul.f32 %v5186, %v5186
    %v5492 = vmul.f32 %v5187, %v5187
    %v5493 = vmul.f32 %v5188, %v5188
    %v5494 = vmul.f32 %v5189, %v5189
    %v5495 = vmul.f32 %v5190, %v5190
    %v5496 = vmul.f32 %v5191, %v5191
    %v5497 = vmul.f32 %v5192, %v5192
    %v5498 = vmul.f32 %v5193, %v5193
    %v5499 = vmul.f32 %v5194, %v5194
    %v5500 = vmul.f32 %v5195, %v5195
    %v5501 = vmul.f32 %v5196, %v5196
    %v5502 = vmul.f32 %v5197, %v5197
    %v5503 = vmul.f32 %v5198, %v5198
    %v5504 = vmul.f32 %v5199, %v5199
    %v5505 = vadd.f32 %v5455, %v5456
    %5506 = vadd.xlane.f32.xlu0 %v5505
    %v5507 = vpop.xlane.xlu0 %5506
    %v5508 = vadd.f32 %v5457, %v5458
    %5509 = vadd.xlane.f32.xlu0 %v5508
    %v5510 = vpop.xlane.xlu0 %5509
    %v5511 = vadd.f32 %v5459, %v5460
    %5512 = vadd.xlane.f32.xlu0 %v5511
    %v5513 = vpop.xlane.xlu0 %5512
    %v5514 = vadd.f32 %v5461, %v5462
    %5515 = vadd.xlane.f32.xlu0 %v5514
    %v5516 = vpop.xlane.xlu0 %5515
    %v5517 = vadd.f32 %v5463, %v5464
    %5518 = vadd.xlane.f32.xlu0 %v5517
    %v5519 = vpop.xlane.xlu0 %5518
    %v5520 = vadd.f32 %v5465, %v5466
    %5521 = vadd.xlane.f32.xlu0 %v5520
    %v5522 = vpop.xlane.xlu0 %5521
    %v5523 = vadd.f32 %v5467, %v5468
    %5524 = vadd.xlane.f32.xlu0 %v5523
    %v5525 = vpop.xlane.xlu0 %5524
    %v5526 = vadd.f32 %v5469, %v5470
    %5527 = vadd.xlane.f32.xlu0 %v5526
    %v5528 = vpop.xlane.xlu0 %5527
    %v5529 = vadd.f32 %v5471, %v5472
    %5530 = vadd.xlane.f32.xlu0 %v5529
    %v5531 = vpop.xlane.xlu0 %5530
    %v5532 = vadd.f32 %v5473, %v5474
    %5533 = vadd.xlane.f32.xlu0 %v5532
    %v5534 = vpop.xlane.xlu0 %5533
    %v5535 = vadd.f32 %v5475, %v5476
    %5536 = vadd.xlane.f32.xlu0 %v5535
    %v5537 = vpop.xlane.xlu0 %5536
    %v5538 = vadd.f32 %v5477, %v5478
    %5539 = vadd.xlane.f32.xlu0 %v5538
    %v5540 = vpop.xlane.xlu0 %5539
    %v5541 = vadd.f32 %v5479, %v5480
    %5542 = vadd.xlane.f32.xlu0 %v5541
    %v5543 = vpop.xlane.xlu0 %5542
    %v5544 = vadd.f32 %v5481, %v5482
    %5545 = vadd.xlane.f32.xlu0 %v5544
    %v5546 = vpop.xlane.xlu0 %5545
    %v5547 = vadd.f32 %v5483, %v5484
    %5548 = vadd.xlane.f32.xlu0 %v5547
    %v5549 = vpop.xlane.xlu0 %5548
    %v5550 = vadd.f32 %v5485, %v5486
    %5551 = vadd.xlane.f32.xlu0 %v5550
    %v5552 = vpop.xlane.xlu0 %5551
    %v5553 = vadd.f32 %v5487, %v5488
    %5554 = vadd.xlane.f32.xlu0 %v5553
    %v5555 = vpop.xlane.xlu0 %5554
    %v5556 = vadd.f32 %v5489, %v5490
    %5557 = vadd.xlane.f32.xlu0 %v5556
    %v5558 = vpop.xlane.xlu0 %5557
    %v5559 = vadd.f32 %v5491, %v5492
    %5560 = vadd.xlane.f32.xlu0 %v5559
    %v5561 = vpop.xlane.xlu0 %5560
    %v5562 = vadd.f32 %v5493, %v5494
    %5563 = vadd.xlane.f32.xlu0 %v5562
    %v5564 = vpop.xlane.xlu0 %5563
    %v5565 = vadd.f32 %v5495, %v5496
    %5566 = vadd.xlane.f32.xlu0 %v5565
    %v5567 = vpop.xlane.xlu0 %5566
    %v5568 = vadd.f32 %v5497, %v5498
    %5569 = vadd.xlane.f32.xlu0 %v5568
    %v5570 = vpop.xlane.xlu0 %5569
    %v5571 = vadd.f32 %v5499, %v5500
    %5572 = vadd.xlane.f32.xlu0 %v5571
    %v5573 = vpop.xlane.xlu0 %5572
    %v5574 = vadd.f32 %v5501, %v5502
    %5575 = vadd.xlane.f32.xlu0 %v5574
    %v5576 = vpop.xlane.xlu0 %5575
    %v5577 = vsel %vm5322, %v5503, 0.0
    %v5578 = vsel %vm5322, %v5504, 0.0
    %v5579 = vadd.f32 %v5577, %v5578
    %5580 = vadd.xlane.f32.xlu0 %v5579
    %v5581 = vpop.xlane.xlu0 %5580
    %v5582 = vmax.f32 %v5380, 1e-16
    %v5583 = vmax.f32 %v5383, 1e-16
    %v5584 = vmax.f32 %v5386, 1e-16
    %v5585 = vmax.f32 %v5389, 1e-16
    %v5586 = vmax.f32 %v5392, 1e-16
    %v5587 = vmax.f32 %v5395, 1e-16
    %v5588 = vmax.f32 %v5398, 1e-16
    %v5589 = vmax.f32 %v5401, 1e-16
    %v5590 = vmax.f32 %v5404, 1e-16
    %v5591 = vmax.f32 %v5407, 1e-16
    %v5592 = vmax.f32 %v5410, 1e-16
    %v5593 = vmax.f32 %v5413, 1e-16
    %v5594 = vmax.f32 %v5416, 1e-16
    %v5595 = vmax.f32 %v5419, 1e-16
    %v5596 = vmax.f32 %v5422, 1e-16
    %v5597 = vmax.f32 %v5425, 1e-16
    %v5598 = vmax.f32 %v5428, 1e-16
    %v5599 = vmax.f32 %v5431, 1e-16
    %v5600 = vmax.f32 %v5434, 1e-16
    %v5601 = vmax.f32 %v5437, 1e-16
    %v5602 = vmax.f32 %v5440, 1e-16
    %v5603 = vmax.f32 %v5443, 1e-16
    %v5604 = vmax.f32 %v5446, 1e-16
    %v5605 = vmax.f32 %v5449, 1e-16
    %v5606 = vmax.f32 %v5454, 1e-16
    %v5607 = vrsqrt.pop %v5582
    %v5608 = vmul.f32 %v5607, %v5582
    %v5609 = vmul.f32 %v5608, %v5607
    %v5610 = vmul.f32 0.5, %v5609
    %v5611 = vsub.f32 1.5, %v5610
    %v5612 = vmul.f32 %v5607, %v5611
    %vm5613 = vweird.f32 %v5582
    %vm5614 = vweird.f32 %v5607
    %vm5615 = vmor %vm5613, %vm5614
    %v5616 = vsel %vm5615, %v5607, %v5612
    %v5617 = vrsqrt.pop %v5583
    %v5618 = vmul.f32 %v5617, %v5583
    %v5619 = vmul.f32 %v5618, %v5617
    %v5620 = vmul.f32 0.5, %v5619
    %v5621 = vsub.f32 1.5, %v5620
    %v5622 = vmul.f32 %v5617, %v5621
    %vm5623 = vweird.f32 %v5583
    %vm5624 = vweird.f32 %v5617
    %vm5625 = vmor %vm5623, %vm5624
    %v5626 = vsel %vm5625, %v5617, %v5622
    %v5627 = vrsqrt.pop %v5584
    %v5628 = vmul.f32 %v5627, %v5584
    %v5629 = vmul.f32 %v5628, %v5627
    %v5630 = vmul.f32 0.5, %v5629
    %v5631 = vsub.f32 1.5, %v5630
    %v5632 = vmul.f32 %v5627, %v5631
    %vm5633 = vweird.f32 %v5584
    %vm5634 = vweird.f32 %v5627
    %vm5635 = vmor %vm5633, %vm5634
    %v5636 = vsel %vm5635, %v5627, %v5632
    %v5637 = vrsqrt.pop %v5585
    %v5638 = vmul.f32 %v5637, %v5585
    %v5639 = vmul.f32 %v5638, %v5637
    %v5640 = vmul.f32 0.5, %v5639
    %v5641 = vsub.f32 1.5, %v5640
    %v5642 = vmul.f32 %v5637, %v5641
    %vm5643 = vweird.f32 %v5585
    %vm5644 = vweird.f32 %v5637
    %vm5645 = vmor %vm5643, %vm5644
    %v5646 = vsel %vm5645, %v5637, %v5642
    %v5647 = vrsqrt.pop %v5586
    %v5648 = vmul.f32 %v5647, %v5586
    %v5649 = vmul.f32 %v5648, %v5647
    %v5650 = vmul.f32 0.5, %v5649
    %v5651 = vsub.f32 1.5, %v5650
    %v5652 = vmul.f32 %v5647, %v5651
    %vm5653 = vweird.f32 %v5586
    %vm5654 = vweird.f32 %v5647
    %vm5655 = vmor %vm5653, %vm5654
    %v5656 = vsel %vm5655, %v5647, %v5652
    %v5657 = vrsqrt.pop %v5587
    %v5658 = vmul.f32 %v5657, %v5587
    %v5659 = vmul.f32 %v5658, %v5657
    %v5660 = vmul.f32 0.5, %v5659
    %v5661 = vsub.f32 1.5, %v5660
    %v5662 = vmul.f32 %v5657, %v5661
    %vm5663 = vweird.f32 %v5587
    %vm5664 = vweird.f32 %v5657
    %vm5665 = vmor %vm5663, %vm5664
    %v5666 = vsel %vm5665, %v5657, %v5662
    %v5667 = vrsqrt.pop %v5588
    %v5668 = vmul.f32 %v5667, %v5588
    %v5669 = vmul.f32 %v5668, %v5667
    %v5670 = vmul.f32 0.5, %v5669
    %v5671 = vsub.f32 1.5, %v5670
    %v5672 = vmul.f32 %v5667, %v5671
    %vm5673 = vweird.f32 %v5588
    %vm5674 = vweird.f32 %v5667
    %vm5675 = vmor %vm5673, %vm5674
    %v5676 = vsel %vm5675, %v5667, %v5672
    %v5677 = vrsqrt.pop %v5589
    %v5678 = vmul.f32 %v5677, %v5589
    %v5679 = vmul.f32 %v5678, %v5677
    %v5680 = vmul.f32 0.5, %v5679
    %v5681 = vsub.f32 1.5, %v5680
    %v5682 = vmul.f32 %v5677, %v5681
    %vm5683 = vweird.f32 %v5589
    %vm5684 = vweird.f32 %v5677
    %vm5685 = vmor %vm5683, %vm5684
    %v5686 = vsel %vm5685, %v5677, %v5682
    %v5687 = vrsqrt.pop %v5590
    %v5688 = vmul.f32 %v5687, %v5590
    %v5689 = vmul.f32 %v5688, %v5687
    %v5690 = vmul.f32 0.5, %v5689
    %v5691 = vsub.f32 1.5, %v5690
    %v5692 = vmul.f32 %v5687, %v5691
    %vm5693 = vweird.f32 %v5590
    %vm5694 = vweird.f32 %v5687
    %vm5695 = vmor %vm5693, %vm5694
    %v5696 = vsel %vm5695, %v5687, %v5692
    %v5697 = vrsqrt.pop %v5591
    %v5698 = vmul.f32 %v5697, %v5591
    %v5699 = vmul.f32 %v5698, %v5697
    %v5700 = vmul.f32 0.5, %v5699
    %v5701 = vsub.f32 1.5, %v5700
    %v5702 = vmul.f32 %v5697, %v5701
    %vm5703 = vweird.f32 %v5591
    %vm5704 = vweird.f32 %v5697
    %vm5705 = vmor %vm5703, %vm5704
    %v5706 = vsel %vm5705, %v5697, %v5702
    %v5707 = vrsqrt.pop %v5592
    %v5708 = vmul.f32 %v5707, %v5592
    %v5709 = vmul.f32 %v5708, %v5707
    %v5710 = vmul.f32 0.5, %v5709
    %v5711 = vsub.f32 1.5, %v5710
    %v5712 = vmul.f32 %v5707, %v5711
    %vm5713 = vweird.f32 %v5592
    %vm5714 = vweird.f32 %v5707
    %vm5715 = vmor %vm5713, %vm5714
    %v5716 = vsel %vm5715, %v5707, %v5712
    %v5717 = vrsqrt.pop %v5593
    %v5718 = vmul.f32 %v5717, %v5593
    %v5719 = vmul.f32 %v5718, %v5717
    %v5720 = vmul.f32 0.5, %v5719
    %v5721 = vsub.f32 1.5, %v5720
    %v5722 = vmul.f32 %v5717, %v5721
    %vm5723 = vweird.f32 %v5593
    %vm5724 = vweird.f32 %v5717
    %vm5725 = vmor %vm5723, %vm5724
    %v5726 = vsel %vm5725, %v5717, %v5722
    %v5727 = vrsqrt.pop %v5594
    %v5728 = vmul.f32 %v5727, %v5594
    %v5729 = vmul.f32 %v5728, %v5727
    %v5730 = vmul.f32 0.5, %v5729
    %v5731 = vsub.f32 1.5, %v5730
    %v5732 = vmul.f32 %v5727, %v5731
    %vm5733 = vweird.f32 %v5594
    %vm5734 = vweird.f32 %v5727
    %vm5735 = vmor %vm5733, %vm5734
    %v5736 = vsel %vm5735, %v5727, %v5732
    %v5737 = vrsqrt.pop %v5595
    %v5738 = vmul.f32 %v5737, %v5595
    %v5739 = vmul.f32 %v5738, %v5737
    %v5740 = vmul.f32 0.5, %v5739
    %v5741 = vsub.f32 1.5, %v5740
    %v5742 = vmul.f32 %v5737, %v5741
    %vm5743 = vweird.f32 %v5595
    %vm5744 = vweird.f32 %v5737
    %vm5745 = vmor %vm5743, %vm5744
    %v5746 = vsel %vm5745, %v5737, %v5742
    %v5747 = vrsqrt.pop %v5596
    %v5748 = vmul.f32 %v5747, %v5596
    %v5749 = vmul.f32 %v5748, %v5747
    %v5750 = vmul.f32 0.5, %v5749
    %v5751 = vsub.f32 1.5, %v5750
    %v5752 = vmul.f32 %v5747, %v5751
    %vm5753 = vweird.f32 %v5596
    %vm5754 = vweird.f32 %v5747
    %vm5755 = vmor %vm5753, %vm5754
    %v5756 = vsel %vm5755, %v5747, %v5752
    %v5757 = vrsqrt.pop %v5597
    %v5758 = vmul.f32 %v5757, %v5597
    %v5759 = vmul.f32 %v5758, %v5757
    %v5760 = vmul.f32 0.5, %v5759
    %v5761 = vsub.f32 1.5, %v5760
    %v5762 = vmul.f32 %v5757, %v5761
    %vm5763 = vweird.f32 %v5597
    %vm5764 = vweird.f32 %v5757
    %vm5765 = vmor %vm5763, %vm5764
    %v5766 = vsel %vm5765, %v5757, %v5762
    %v5767 = vrsqrt.pop %v5598
    %v5768 = vmul.f32 %v5767, %v5598
    %v5769 = vmul.f32 %v5768, %v5767
    %v5770 = vmul.f32 0.5, %v5769
    %v5771 = vsub.f32 1.5, %v5770
    %v5772 = vmul.f32 %v5767, %v5771
    %vm5773 = vweird.f32 %v5598
    %vm5774 = vweird.f32 %v5767
    %vm5775 = vmor %vm5773, %vm5774
    %v5776 = vsel %vm5775, %v5767, %v5772
    %v5777 = vrsqrt.pop %v5599
    %v5778 = vmul.f32 %v5777, %v5599
    %v5779 = vmul.f32 %v5778, %v5777
    %v5780 = vmul.f32 0.5, %v5779
    %v5781 = vsub.f32 1.5, %v5780
    %v5782 = vmul.f32 %v5777, %v5781
    %vm5783 = vweird.f32 %v5599
    %vm5784 = vweird.f32 %v5777
    %vm5785 = vmor %vm5783, %vm5784
    %v5786 = vsel %vm5785, %v5777, %v5782
    %v5787 = vrsqrt.pop %v5600
    %v5788 = vmul.f32 %v5787, %v5600
    %v5789 = vmul.f32 %v5788, %v5787
    %v5790 = vmul.f32 0.5, %v5789
    %v5791 = vsub.f32 1.5, %v5790
    %v5792 = vmul.f32 %v5787, %v5791
    %vm5793 = vweird.f32 %v5600
    %vm5794 = vweird.f32 %v5787
    %vm5795 = vmor %vm5793, %vm5794
    %v5796 = vsel %vm5795, %v5787, %v5792
    %v5797 = vrsqrt.pop %v5601
    %v5798 = vmul.f32 %v5797, %v5601
    %v5799 = vmul.f32 %v5798, %v5797
    %v5800 = vmul.f32 0.5, %v5799
    %v5801 = vsub.f32 1.5, %v5800
    %v5802 = vmul.f32 %v5797, %v5801
    %vm5803 = vweird.f32 %v5601
    %vm5804 = vweird.f32 %v5797
    %vm5805 = vmor %vm5803, %vm5804
    %v5806 = vsel %vm5805, %v5797, %v5802
    %v5807 = vrsqrt.pop %v5602
    %v5808 = vmul.f32 %v5807, %v5602
    %v5809 = vmul.f32 %v5808, %v5807
    %v5810 = vmul.f32 0.5, %v5809
    %v5811 = vsub.f32 1.5, %v5810
    %v5812 = vmul.f32 %v5807, %v5811
    %vm5813 = vweird.f32 %v5602
    %vm5814 = vweird.f32 %v5807
    %vm5815 = vmor %vm5813, %vm5814
    %v5816 = vsel %vm5815, %v5807, %v5812
    %v5817 = vrsqrt.pop %v5603
    %v5818 = vmul.f32 %v5817, %v5603
    %v5819 = vmul.f32 %v5818, %v5817
    %v5820 = vmul.f32 0.5, %v5819
    %v5821 = vsub.f32 1.5, %v5820
    %v5822 = vmul.f32 %v5817, %v5821
    %vm5823 = vweird.f32 %v5603
    %vm5824 = vweird.f32 %v5817
    %vm5825 = vmor %vm5823, %vm5824
    %v5826 = vsel %vm5825, %v5817, %v5822
    %v5827 = vrsqrt.pop %v5604
    %v5828 = vmul.f32 %v5827, %v5604
    %v5829 = vmul.f32 %v5828, %v5827
    %v5830 = vmul.f32 0.5, %v5829
    %v5831 = vsub.f32 1.5, %v5830
    %v5832 = vmul.f32 %v5827, %v5831
    %vm5833 = vweird.f32 %v5604
    %vm5834 = vweird.f32 %v5827
    %vm5835 = vmor %vm5833, %vm5834
    %v5836 = vsel %vm5835, %v5827, %v5832
    %v5837 = vrsqrt.pop %v5605
    %v5838 = vmul.f32 %v5837, %v5605
    %v5839 = vmul.f32 %v5838, %v5837
    %v5840 = vmul.f32 0.5, %v5839
    %v5841 = vsub.f32 1.5, %v5840
    %v5842 = vmul.f32 %v5837, %v5841
    %vm5843 = vweird.f32 %v5605
    %vm5844 = vweird.f32 %v5837
    %vm5845 = vmor %vm5843, %vm5844
    %v5846 = vsel %vm5845, %v5837, %v5842
    %v5847 = vrsqrt.pop %v5606
    %v5848 = vmul.f32 %v5847, %v5606
    %v5849 = vmul.f32 %v5848, %v5847
    %v5850 = vmul.f32 0.5, %v5849
    %v5851 = vsub.f32 1.5, %v5850
    %v5852 = vmul.f32 %v5847, %v5851
    %vm5853 = vweird.f32 %v5606
    %vm5854 = vweird.f32 %v5847
    %vm5855 = vmor %vm5853, %vm5854
    %v5856 = vsel %vm5855, %v5847, %v5852
    %v5857 = vmul.f32 %v5252, %v5616
    %v5858 = vmul.f32 %v5255, %v5626
    %v5859 = vmul.f32 %v5258, %v5636
    %v5860 = vmul.f32 %v5261, %v5646
    %v5861 = vmul.f32 %v5264, %v5656
    %v5862 = vmul.f32 %v5267, %v5666
    %v5863 = vmul.f32 %v5270, %v5676
    %v5864 = vmul.f32 %v5273, %v5686
    %v5865 = vmul.f32 %v5276, %v5696
    %v5866 = vmul.f32 %v5279, %v5706
    %v5867 = vmul.f32 %v5282, %v5716
    %v5868 = vmul.f32 %v5285, %v5726
    %v5869 = vmul.f32 %v5288, %v5736
    %v5870 = vmul.f32 %v5291, %v5746
    %v5871 = vmul.f32 %v5294, %v5756
    %v5872 = vmul.f32 %v5297, %v5766
    %v5873 = vmul.f32 %v5300, %v5776
    %v5874 = vmul.f32 %v5303, %v5786
    %v5875 = vmul.f32 %v5306, %v5796
    %v5876 = vmul.f32 %v5309, %v5806
    %v5877 = vmul.f32 %v5312, %v5816
    %v5878 = vmul.f32 %v5315, %v5826
    %v5879 = vmul.f32 %v5318, %v5836
    %v5880 = vmul.f32 %v5321, %v5846
    %v5881 = vmul.f32 %v5327, %v5856
    %v5882 = vmax.f32 %v5507, 1e-16
    %v5883 = vmax.f32 %v5510, 1e-16
    %v5884 = vmax.f32 %v5513, 1e-16
    %v5885 = vmax.f32 %v5516, 1e-16
    %v5886 = vmax.f32 %v5519, 1e-16
    %v5887 = vmax.f32 %v5522, 1e-16
    %v5888 = vmax.f32 %v5525, 1e-16
    %v5889 = vmax.f32 %v5528, 1e-16
    %v5890 = vmax.f32 %v5531, 1e-16
    %v5891 = vmax.f32 %v5534, 1e-16
    %v5892 = vmax.f32 %v5537, 1e-16
    %v5893 = vmax.f32 %v5540, 1e-16
    %v5894 = vmax.f32 %v5543, 1e-16
    %v5895 = vmax.f32 %v5546, 1e-16
    %v5896 = vmax.f32 %v5549, 1e-16
    %v5897 = vmax.f32 %v5552, 1e-16
    %v5898 = vmax.f32 %v5555, 1e-16
    %v5899 = vmax.f32 %v5558, 1e-16
    %v5900 = vmax.f32 %v5561, 1e-16
    %v5901 = vmax.f32 %v5564, 1e-16
    %v5902 = vmax.f32 %v5567, 1e-16
    %v5903 = vmax.f32 %v5570, 1e-16
    %v5904 = vmax.f32 %v5573, 1e-16
    %v5905 = vmax.f32 %v5576, 1e-16
    %v5906 = vmax.f32 %v5581, 1e-16
    %v5907 = vrsqrt.pop %v5882
    %v5908 = vmul.f32 %v5907, %v5882
    %v5909 = vmul.f32 %v5908, %v5907
    %v5910 = vmul.f32 0.5, %v5909
    %v5911 = vsub.f32 1.5, %v5910
    %v5912 = vmul.f32 %v5907, %v5911
    %vm5913 = vweird.f32 %v5882
    %vm5914 = vweird.f32 %v5907
    %vm5915 = vmor %vm5913, %vm5914
    %v5916 = vsel %vm5915, %v5907, %v5912
    %v5917 = vrsqrt.pop %v5883
    %v5918 = vmul.f32 %v5917, %v5883
    %v5919 = vmul.f32 %v5918, %v5917
    %v5920 = vmul.f32 0.5, %v5919
    %v5921 = vsub.f32 1.5, %v5920
    %v5922 = vmul.f32 %v5917, %v5921
    %vm5923 = vweird.f32 %v5883
    %vm5924 = vweird.f32 %v5917
    %vm5925 = vmor %vm5923, %vm5924
    %v5926 = vsel %vm5925, %v5917, %v5922
    %v5927 = vrsqrt.pop %v5884
    %v5928 = vmul.f32 %v5927, %v5884
    %v5929 = vmul.f32 %v5928, %v5927
    %v5930 = vmul.f32 0.5, %v5929
    %v5931 = vsub.f32 1.5, %v5930
    %v5932 = vmul.f32 %v5927, %v5931
    %vm5933 = vweird.f32 %v5884
    %vm5934 = vweird.f32 %v5927
    %vm5935 = vmor %vm5933, %vm5934
    %v5936 = vsel %vm5935, %v5927, %v5932
    %v5937 = vrsqrt.pop %v5885
    %v5938 = vmul.f32 %v5937, %v5885
    %v5939 = vmul.f32 %v5938, %v5937
    %v5940 = vmul.f32 0.5, %v5939
    %v5941 = vsub.f32 1.5, %v5940
    %v5942 = vmul.f32 %v5937, %v5941
    %vm5943 = vweird.f32 %v5885
    %vm5944 = vweird.f32 %v5937
    %vm5945 = vmor %vm5943, %vm5944
    %v5946 = vsel %vm5945, %v5937, %v5942
    %v5947 = vrsqrt.pop %v5886
    %v5948 = vmul.f32 %v5947, %v5886
    %v5949 = vmul.f32 %v5948, %v5947
    %v5950 = vmul.f32 0.5, %v5949
    %v5951 = vsub.f32 1.5, %v5950
    %v5952 = vmul.f32 %v5947, %v5951
    %vm5953 = vweird.f32 %v5886
    %vm5954 = vweird.f32 %v5947
    %vm5955 = vmor %vm5953, %vm5954
    %v5956 = vsel %vm5955, %v5947, %v5952
    %v5957 = vrsqrt.pop %v5887
    %v5958 = vmul.f32 %v5957, %v5887
    %v5959 = vmul.f32 %v5958, %v5957
    %v5960 = vmul.f32 0.5, %v5959
    %v5961 = vsub.f32 1.5, %v5960
    %v5962 = vmul.f32 %v5957, %v5961
    %vm5963 = vweird.f32 %v5887
    %vm5964 = vweird.f32 %v5957
    %vm5965 = vmor %vm5963, %vm5964
    %v5966 = vsel %vm5965, %v5957, %v5962
    %v5967 = vrsqrt.pop %v5888
    %v5968 = vmul.f32 %v5967, %v5888
    %v5969 = vmul.f32 %v5968, %v5967
    %v5970 = vmul.f32 0.5, %v5969
    %v5971 = vsub.f32 1.5, %v5970
    %v5972 = vmul.f32 %v5967, %v5971
    %vm5973 = vweird.f32 %v5888
    %vm5974 = vweird.f32 %v5967
    %vm5975 = vmor %vm5973, %vm5974
    %v5976 = vsel %vm5975, %v5967, %v5972
    %v5977 = vrsqrt.pop %v5889
    %v5978 = vmul.f32 %v5977, %v5889
    %v5979 = vmul.f32 %v5978, %v5977
    %v5980 = vmul.f32 0.5, %v5979
    %v5981 = vsub.f32 1.5, %v5980
    %v5982 = vmul.f32 %v5977, %v5981
    %vm5983 = vweird.f32 %v5889
    %vm5984 = vweird.f32 %v5977
    %vm5985 = vmor %vm5983, %vm5984
    %v5986 = vsel %vm5985, %v5977, %v5982
    %v5987 = vrsqrt.pop %v5890
    %v5988 = vmul.f32 %v5987, %v5890
    %v5989 = vmul.f32 %v5988, %v5987
    %v5990 = vmul.f32 0.5, %v5989
    %v5991 = vsub.f32 1.5, %v5990
    %v5992 = vmul.f32 %v5987, %v5991
    %vm5993 = vweird.f32 %v5890
    %vm5994 = vweird.f32 %v5987
    %vm5995 = vmor %vm5993, %vm5994
    %v5996 = vsel %vm5995, %v5987, %v5992
    %v5997 = vrsqrt.pop %v5891
    %v5998 = vmul.f32 %v5997, %v5891
    %v5999 = vmul.f32 %v5998, %v5997
    %v6000 = vmul.f32 0.5, %v5999
    %v6001 = vsub.f32 1.5, %v6000
    %v6002 = vmul.f32 %v5997, %v6001
    %vm6003 = vweird.f32 %v5891
    %vm6004 = vweird.f32 %v5997
    %vm6005 = vmor %vm6003, %vm6004
    %v6006 = vsel %vm6005, %v5997, %v6002
    %v6007 = vrsqrt.pop %v5892
    %v6008 = vmul.f32 %v6007, %v5892
    %v6009 = vmul.f32 %v6008, %v6007
    %v6010 = vmul.f32 0.5, %v6009
    %v6011 = vsub.f32 1.5, %v6010
    %v6012 = vmul.f32 %v6007, %v6011
    %vm6013 = vweird.f32 %v5892
    %vm6014 = vweird.f32 %v6007
    %vm6015 = vmor %vm6013, %vm6014
    %v6016 = vsel %vm6015, %v6007, %v6012
    %v6017 = vrsqrt.pop %v5893
    %v6018 = vmul.f32 %v6017, %v5893
    %v6019 = vmul.f32 %v6018, %v6017
    %v6020 = vmul.f32 0.5, %v6019
    %v6021 = vsub.f32 1.5, %v6020
    %v6022 = vmul.f32 %v6017, %v6021
    %vm6023 = vweird.f32 %v5893
    %vm6024 = vweird.f32 %v6017
    %vm6025 = vmor %vm6023, %vm6024
    %v6026 = vsel %vm6025, %v6017, %v6022
    %v6027 = vrsqrt.pop %v5894
    %v6028 = vmul.f32 %v6027, %v5894
    %v6029 = vmul.f32 %v6028, %v6027
    %v6030 = vmul.f32 0.5, %v6029
    %v6031 = vsub.f32 1.5, %v6030
    %v6032 = vmul.f32 %v6027, %v6031
    %vm6033 = vweird.f32 %v5894
    %vm6034 = vweird.f32 %v6027
    %vm6035 = vmor %vm6033, %vm6034
    %v6036 = vsel %vm6035, %v6027, %v6032
    %v6037 = vrsqrt.pop %v5895
    %v6038 = vmul.f32 %v6037, %v5895
    %v6039 = vmul.f32 %v6038, %v6037
    %v6040 = vmul.f32 0.5, %v6039
    %v6041 = vsub.f32 1.5, %v6040
    %v6042 = vmul.f32 %v6037, %v6041
    %vm6043 = vweird.f32 %v5895
    %vm6044 = vweird.f32 %v6037
    %vm6045 = vmor %vm6043, %vm6044
    %v6046 = vsel %vm6045, %v6037, %v6042
    %v6047 = vrsqrt.pop %v5896
    %v6048 = vmul.f32 %v6047, %v5896
    %v6049 = vmul.f32 %v6048, %v6047
    %v6050 = vmul.f32 0.5, %v6049
    %v6051 = vsub.f32 1.5, %v6050
    %v6052 = vmul.f32 %v6047, %v6051
    %vm6053 = vweird.f32 %v5896
    %vm6054 = vweird.f32 %v6047
    %vm6055 = vmor %vm6053, %vm6054
    %v6056 = vsel %vm6055, %v6047, %v6052
    %v6057 = vrsqrt.pop %v5897
    %v6058 = vmul.f32 %v6057, %v5897
    %v6059 = vmul.f32 %v6058, %v6057
    %v6060 = vmul.f32 0.5, %v6059
    %v6061 = vsub.f32 1.5, %v6060
    %v6062 = vmul.f32 %v6057, %v6061
    %vm6063 = vweird.f32 %v5897
    %vm6064 = vweird.f32 %v6057
    %vm6065 = vmor %vm6063, %vm6064
    %v6066 = vsel %vm6065, %v6057, %v6062
    %v6067 = vrsqrt.pop %v5898
    %v6068 = vmul.f32 %v6067, %v5898
    %v6069 = vmul.f32 %v6068, %v6067
    %v6070 = vmul.f32 0.5, %v6069
    %v6071 = vsub.f32 1.5, %v6070
    %v6072 = vmul.f32 %v6067, %v6071
    %vm6073 = vweird.f32 %v5898
    %vm6074 = vweird.f32 %v6067
    %vm6075 = vmor %vm6073, %vm6074
    %v6076 = vsel %vm6075, %v6067, %v6072
    %v6077 = vrsqrt.pop %v5899
    %v6078 = vmul.f32 %v6077, %v5899
    %v6079 = vmul.f32 %v6078, %v6077
    %v6080 = vmul.f32 0.5, %v6079
    %v6081 = vsub.f32 1.5, %v6080
    %v6082 = vmul.f32 %v6077, %v6081
    %vm6083 = vweird.f32 %v5899
    %vm6084 = vweird.f32 %v6077
    %vm6085 = vmor %vm6083, %vm6084
    %v6086 = vsel %vm6085, %v6077, %v6082
    %v6087 = vrsqrt.pop %v5900
    %v6088 = vmul.f32 %v6087, %v5900
    %v6089 = vmul.f32 %v6088, %v6087
    %v6090 = vmul.f32 0.5, %v6089
    %v6091 = vsub.f32 1.5, %v6090
    %v6092 = vmul.f32 %v6087, %v6091
    %vm6093 = vweird.f32 %v5900
    %vm6094 = vweird.f32 %v6087
    %vm6095 = vmor %vm6093, %vm6094
    %v6096 = vsel %vm6095, %v6087, %v6092
    %v6097 = vrsqrt.pop %v5901
    %v6098 = vmul.f32 %v6097, %v5901
    %v6099 = vmul.f32 %v6098, %v6097
    %v6100 = vmul.f32 0.5, %v6099
    %v6101 = vsub.f32 1.5, %v6100
    %v6102 = vmul.f32 %v6097, %v6101
    %vm6103 = vweird.f32 %v5901
    %vm6104 = vweird.f32 %v6097
    %vm6105 = vmor %vm6103, %vm6104
    %v6106 = vsel %vm6105, %v6097, %v6102
    %v6107 = vrsqrt.pop %v5902
    %v6108 = vmul.f32 %v6107, %v5902
    %v6109 = vmul.f32 %v6108, %v6107
    %v6110 = vmul.f32 0.5, %v6109
    %v6111 = vsub.f32 1.5, %v6110
    %v6112 = vmul.f32 %v6107, %v6111
    %vm6113 = vweird.f32 %v5902
    %vm6114 = vweird.f32 %v6107
    %vm6115 = vmor %vm6113, %vm6114
    %v6116 = vsel %vm6115, %v6107, %v6112
    %v6117 = vrsqrt.pop %v5903
    %v6118 = vmul.f32 %v6117, %v5903
    %v6119 = vmul.f32 %v6118, %v6117
    %v6120 = vmul.f32 0.5, %v6119
    %v6121 = vsub.f32 1.5, %v6120
    %v6122 = vmul.f32 %v6117, %v6121
    %vm6123 = vweird.f32 %v5903
    %vm6124 = vweird.f32 %v6117
    %vm6125 = vmor %vm6123, %vm6124
    %v6126 = vsel %vm6125, %v6117, %v6122
    %v6127 = vrsqrt.pop %v5904
    %v6128 = vmul.f32 %v6127, %v5904
    %v6129 = vmul.f32 %v6128, %v6127
    %v6130 = vmul.f32 0.5, %v6129
    %v6131 = vsub.f32 1.5, %v6130
    %v6132 = vmul.f32 %v6127, %v6131
    %vm6133 = vweird.f32 %v5904
    %vm6134 = vweird.f32 %v6127
    %vm6135 = vmor %vm6133, %vm6134
    %v6136 = vsel %vm6135, %v6127, %v6132
    %v6137 = vrsqrt.pop %v5905
    %v6138 = vmul.f32 %v6137, %v5905
    %v6139 = vmul.f32 %v6138, %v6137
    %v6140 = vmul.f32 0.5, %v6139
    %v6141 = vsub.f32 1.5, %v6140
    %v6142 = vmul.f32 %v6137, %v6141
    %vm6143 = vweird.f32 %v5905
    %vm6144 = vweird.f32 %v6137
    %vm6145 = vmor %vm6143, %vm6144
    %v6146 = vsel %vm6145, %v6137, %v6142
    %v6147 = vrsqrt.pop %v5906
    %v6148 = vmul.f32 %v6147, %v5906
    %v6149 = vmul.f32 %v6148, %v6147
    %v6150 = vmul.f32 0.5, %v6149
    %v6151 = vsub.f32 1.5, %v6150
    %v6152 = vmul.f32 %v6147, %v6151
    %vm6153 = vweird.f32 %v5906
    %vm6154 = vweird.f32 %v6147
    %vm6155 = vmor %vm6153, %vm6154
    %v6156 = vsel %vm6155, %v6147, %v6152
    %v6157 = vmul.f32 %v5857, %v5916
    %v6158 = vmul.f32 %v5858, %v5926
    %v6159 = vmul.f32 %v5859, %v5936
    %v6160 = vmul.f32 %v5860, %v5946
    %v6161 = vmul.f32 %v5861, %v5956
    %v6162 = vmul.f32 %v5862, %v5966
    %v6163 = vmul.f32 %v5863, %v5976
    %v6164 = vmul.f32 %v5864, %v5986
    %v6165 = vmul.f32 %v5865, %v5996
    %v6166 = vmul.f32 %v5866, %v6006
    %v6167 = vmul.f32 %v5867, %v6016
    %v6168 = vmul.f32 %v5868, %v6026
    %v6169 = vmul.f32 %v5869, %v6036
    %v6170 = vmul.f32 %v5870, %v6046
    %v6171 = vmul.f32 %v5871, %v6056
    %v6172 = vmul.f32 %v5872, %v6066
    %v6173 = vmul.f32 %v5873, %v6076
    %v6174 = vmul.f32 %v5874, %v6086
    %v6175 = vmul.f32 %v5875, %v6096
    %v6176 = vmul.f32 %v5876, %v6106
    %v6177 = vmul.f32 %v5877, %v6116
    %v6178 = vmul.f32 %v5878, %v6126
    %v6179 = vmul.f32 %v5879, %v6136
    %v6180 = vmul.f32 %v5880, %v6146
    %v6181 = vmul.f32 %v5881, %v6156
    %v6182 = vld [vmem:[%s4] sm:$0xff]
    %v6183 = vld [vmem:[%s4 + $0x8] sm:$0xff]
    %v6184 = vld [vmem:[%s4 + $0x10] sm:$0xff]
    %v6185 = vld [vmem:[%s4 + $0x18] sm:$0xff]
    %v6186 = vld [vmem:[%s4 + $0x20] sm:$0xff]
    %v6187 = vld [vmem:[%s4 + $0x28] sm:$0xff]
    %v6188 = vld [vmem:[%s4 + $0x30] sm:$0xff]
    %v6189 = vld [vmem:[%s4 + $0x38] sm:$0xff]
    %v6190 = vld [vmem:[%s4 + $0x40] sm:$0xff]
    %v6191 = vld [vmem:[%s4 + $0x48] sm:$0xff]
    %v6192 = vld [vmem:[%s4 + $0x50] sm:$0xff]
    %v6193 = vld [vmem:[%s4 + $0x58] sm:$0xff]
    %v6194 = vld [vmem:[%s4 + $0x60] sm:$0xff]
    %v6195 = vld [vmem:[%s4 + $0x68] sm:$0xff]
    %v6196 = vld [vmem:[%s4 + $0x70] sm:$0xff]
    %v6197 = vld [vmem:[%s4 + $0x78] sm:$0xff]
    %v6198 = vld [vmem:[%s4 + $0x80] sm:$0xff]
    %v6199 = vld [vmem:[%s4 + $0x88] sm:$0xff]
    %v6200 = vld [vmem:[%s4 + $0x90] sm:$0xff]
    %v6201 = vld [vmem:[%s4 + $0x98] sm:$0xff]
    %v6202 = vld [vmem:[%s4 + $0xa0] sm:$0xff]
    %v6203 = vld [vmem:[%s4 + $0xa8] sm:$0xff]
    %v6204 = vld [vmem:[%s4 + $0xb0] sm:$0xff]
    %v6205 = vld [vmem:[%s4 + $0xb8] sm:$0xff]
    %v6206 = vld [vmem:[%s4 + $0xc0] sm:$0xf]
    %v6207 = vsub.f32 %v6157, %v6182
    %v6208 = vsub.f32 %v6158, %v6183
    %v6209 = vsub.f32 %v6159, %v6184
    %v6210 = vsub.f32 %v6160, %v6185
    %v6211 = vsub.f32 %v6161, %v6186
    %v6212 = vsub.f32 %v6162, %v6187
    %v6213 = vsub.f32 %v6163, %v6188
    %v6214 = vsub.f32 %v6164, %v6189
    %v6215 = vsub.f32 %v6165, %v6190
    %v6216 = vsub.f32 %v6166, %v6191
    %v6217 = vsub.f32 %v6167, %v6192
    %v6218 = vsub.f32 %v6168, %v6193
    %v6219 = vsub.f32 %v6169, %v6194
    %v6220 = vsub.f32 %v6170, %v6195
    %v6221 = vsub.f32 %v6171, %v6196
    %v6222 = vsub.f32 %v6172, %v6197
    %v6223 = vsub.f32 %v6173, %v6198
    %v6224 = vsub.f32 %v6174, %v6199
    %v6225 = vsub.f32 %v6175, %v6200
    %v6226 = vsub.f32 %v6176, %v6201
    %v6227 = vsub.f32 %v6177, %v6202
    %v6228 = vsub.f32 %v6178, %v6203
    %v6229 = vsub.f32 %v6179, %v6204
    %v6230 = vsub.f32 %v6180, %v6205
    %v6231 = vsub.f32 %v6181, %v6206
    %v6232 = vand.u32 2147483647, %v6207
    %v6233 = vand.u32 2147483647, %v6208
    %v6234 = vand.u32 2147483647, %v6209
    %v6235 = vand.u32 2147483647, %v6210
    %v6236 = vand.u32 2147483647, %v6211
    %v6237 = vand.u32 2147483647, %v6212
    %v6238 = vand.u32 2147483647, %v6213
    %v6239 = vand.u32 2147483647, %v6214
    %v6240 = vand.u32 2147483647, %v6215
    %v6241 = vand.u32 2147483647, %v6216
    %v6242 = vand.u32 2147483647, %v6217
    %v6243 = vand.u32 2147483647, %v6218
    %v6244 = vand.u32 2147483647, %v6219
    %v6245 = vand.u32 2147483647, %v6220
    %v6246 = vand.u32 2147483647, %v6221
    %v6247 = vand.u32 2147483647, %v6222
    %v6248 = vand.u32 2147483647, %v6223
    %v6249 = vand.u32 2147483647, %v6224
    %v6250 = vand.u32 2147483647, %v6225
    %v6251 = vand.u32 2147483647, %v6226
    %v6252 = vand.u32 2147483647, %v6227
    %v6253 = vand.u32 2147483647, %v6228
    %v6254 = vand.u32 2147483647, %v6229
    %v6255 = vand.u32 2147483647, %v6230
    %v6256 = vand.u32 2147483647, %v6231
    %v6257 = vld [vmem:[%s5] sm:$0xff]
    %v6258 = vld [vmem:[%s5 + $0x8] sm:$0xff]
    %v6259 = vld [vmem:[%s5 + $0x10] sm:$0xff]
    %v6260 = vld [vmem:[%s5 + $0x18] sm:$0xff]
    %v6261 = vld [vmem:[%s5 + $0x20] sm:$0xff]
    %v6262 = vld [vmem:[%s5 + $0x28] sm:$0xff]
    %v6263 = vld [vmem:[%s5 + $0x30] sm:$0xff]
    %v6264 = vld [vmem:[%s5 + $0x38] sm:$0xff]
    %v6265 = vld [vmem:[%s5 + $0x40] sm:$0xff]
    %v6266 = vld [vmem:[%s5 + $0x48] sm:$0xff]
    %v6267 = vld [vmem:[%s5 + $0x50] sm:$0xff]
    %v6268 = vld [vmem:[%s5 + $0x58] sm:$0xff]
    %v6269 = vld [vmem:[%s5 + $0x60] sm:$0xff]
    %v6270 = vld [vmem:[%s5 + $0x68] sm:$0xff]
    %v6271 = vld [vmem:[%s5 + $0x70] sm:$0xff]
    %v6272 = vld [vmem:[%s5 + $0x78] sm:$0xff]
    %v6273 = vld [vmem:[%s5 + $0x80] sm:$0xff]
    %v6274 = vld [vmem:[%s5 + $0x88] sm:$0xff]
    %v6275 = vld [vmem:[%s5 + $0x90] sm:$0xff]
    %v6276 = vld [vmem:[%s5 + $0x98] sm:$0xff]
    %v6277 = vld [vmem:[%s5 + $0xa0] sm:$0xff]
    %v6278 = vld [vmem:[%s5 + $0xa8] sm:$0xff]
    %v6279 = vld [vmem:[%s5 + $0xb0] sm:$0xff]
    %v6280 = vld [vmem:[%s5 + $0xb8] sm:$0xff]
    %v6281 = vld [vmem:[%s5 + $0xc0] sm:$0xf]
    %vm6282 = vcmp.gt.f32.partialorder %v6257, 0.5
    %vm6283 = vcmp.gt.f32.partialorder %v6258, 0.5
    %vm6284 = vcmp.gt.f32.partialorder %v6259, 0.5
    %vm6285 = vcmp.gt.f32.partialorder %v6260, 0.5
    %vm6286 = vcmp.gt.f32.partialorder %v6261, 0.5
    %vm6287 = vcmp.gt.f32.partialorder %v6262, 0.5
    %vm6288 = vcmp.gt.f32.partialorder %v6263, 0.5
    %vm6289 = vcmp.gt.f32.partialorder %v6264, 0.5
    %vm6290 = vcmp.gt.f32.partialorder %v6265, 0.5
    %vm6291 = vcmp.gt.f32.partialorder %v6266, 0.5
    %vm6292 = vcmp.gt.f32.partialorder %v6267, 0.5
    %vm6293 = vcmp.gt.f32.partialorder %v6268, 0.5
    %vm6294 = vcmp.gt.f32.partialorder %v6269, 0.5
    %vm6295 = vcmp.gt.f32.partialorder %v6270, 0.5
    %vm6296 = vcmp.gt.f32.partialorder %v6271, 0.5
    %vm6297 = vcmp.gt.f32.partialorder %v6272, 0.5
    %vm6298 = vcmp.gt.f32.partialorder %v6273, 0.5
    %vm6299 = vcmp.gt.f32.partialorder %v6274, 0.5
    %vm6300 = vcmp.gt.f32.partialorder %v6275, 0.5
    %vm6301 = vcmp.gt.f32.partialorder %v6276, 0.5
    %vm6302 = vcmp.gt.f32.partialorder %v6277, 0.5
    %vm6303 = vcmp.gt.f32.partialorder %v6278, 0.5
    %vm6304 = vcmp.gt.f32.partialorder %v6279, 0.5
    %vm6305 = vcmp.gt.f32.partialorder %v6280, 0.5
    %vm6306 = vcmp.gt.f32.partialorder %v6281, 0.5
    %v6307 = vsel %vm6282, %v6232, 0.0
    %v6308 = vsel %vm6283, %v6233, 0.0
    %v6309 = vsel %vm6284, %v6234, 0.0
    %v6310 = vsel %vm6285, %v6235, 0.0
    %v6311 = vsel %vm6286, %v6236, 0.0
    %v6312 = vsel %vm6287, %v6237, 0.0
    %v6313 = vsel %vm6288, %v6238, 0.0
    %v6314 = vsel %vm6289, %v6239, 0.0
    %v6315 = vsel %vm6290, %v6240, 0.0
    %v6316 = vsel %vm6291, %v6241, 0.0
    %v6317 = vsel %vm6292, %v6242, 0.0
    %v6318 = vsel %vm6293, %v6243, 0.0
    %v6319 = vsel %vm6294, %v6244, 0.0
    %v6320 = vsel %vm6295, %v6245, 0.0
    %v6321 = vsel %vm6296, %v6246, 0.0
    %v6322 = vsel %vm6297, %v6247, 0.0
    %v6323 = vsel %vm6298, %v6248, 0.0
    %v6324 = vsel %vm6299, %v6249, 0.0
    %v6325 = vsel %vm6300, %v6250, 0.0
    %v6326 = vsel %vm6301, %v6251, 0.0
    %v6327 = vsel %vm6302, %v6252, 0.0
    %v6328 = vsel %vm6303, %v6253, 0.0
    %v6329 = vsel %vm6304, %v6254, 0.0
    %v6330 = vsel %vm6305, %v6255, 0.0
    %v6331 = vsel %vm6306, %v6256, 0.0
    %vm6332 = vcmask 7168
    %v6333 = vsel %vm6332, %v6307, 0.0
    %v6334 = vsel %vm6332, %v6308, 0.0
    %v6335 = vadd.f32 %v6333, %v6334
    %v6336 = vsel %vm6332, %v6309, 0.0
    %v6337 = vadd.f32 %v6335, %v6336
    %v6338 = vsel %vm6332, %v6310, 0.0
    %v6339 = vadd.f32 %v6337, %v6338
    %v6340 = vsel %vm6332, %v6311, 0.0
    %v6341 = vadd.f32 %v6339, %v6340
    %v6342 = vsel %vm6332, %v6312, 0.0
    %v6343 = vadd.f32 %v6341, %v6342
    %v6344 = vsel %vm6332, %v6313, 0.0
    %v6345 = vadd.f32 %v6343, %v6344
    %v6346 = vsel %vm6332, %v6314, 0.0
    %v6347 = vadd.f32 %v6345, %v6346
    %v6348 = vsel %vm6332, %v6315, 0.0
    %v6349 = vadd.f32 %v6347, %v6348
    %v6350 = vsel %vm6332, %v6316, 0.0
    %v6351 = vadd.f32 %v6349, %v6350
    %v6352 = vsel %vm6332, %v6317, 0.0
    %v6353 = vadd.f32 %v6351, %v6352
    %v6354 = vsel %vm6332, %v6318, 0.0
    %v6355 = vadd.f32 %v6353, %v6354
    %v6356 = vsel %vm6332, %v6319, 0.0
    %v6357 = vadd.f32 %v6355, %v6356
    %v6358 = vsel %vm6332, %v6320, 0.0
    %v6359 = vadd.f32 %v6357, %v6358
    %v6360 = vsel %vm6332, %v6321, 0.0
    %v6361 = vadd.f32 %v6359, %v6360
    %v6362 = vsel %vm6332, %v6322, 0.0
    %v6363 = vadd.f32 %v6361, %v6362
    %v6364 = vsel %vm6332, %v6323, 0.0
    %v6365 = vadd.f32 %v6363, %v6364
    %v6366 = vsel %vm6332, %v6324, 0.0
    %v6367 = vadd.f32 %v6365, %v6366
    %v6368 = vsel %vm6332, %v6325, 0.0
    %v6369 = vadd.f32 %v6367, %v6368
    %v6370 = vsel %vm6332, %v6326, 0.0
    %v6371 = vadd.f32 %v6369, %v6370
    %v6372 = vsel %vm6332, %v6327, 0.0
    %v6373 = vadd.f32 %v6371, %v6372
    %v6374 = vsel %vm6332, %v6328, 0.0
    %v6375 = vadd.f32 %v6373, %v6374
    %v6376 = vsel %vm6332, %v6329, 0.0
    %v6377 = vadd.f32 %v6375, %v6376
    %v6378 = vsel %vm6332, %v6330, 0.0
    %v6379 = vadd.f32 %v6377, %v6378
    %vm6380 = vcmask 3072
    %v6381 = vsel %vm6380, %v6331, 0.0
    %v6382 = vadd.f32 %v6379, %v6381
    %6383 = vadd.xlane.f32.xlu0 %v6382
    %v6384 = vpop.xlane.xlu0 %6383
    %v6385 = vrot.slane %v6384, 4
    %v6386 = vadd.f32 %v6384, %v6385
    %v6387 = vrot.slane %v6386, 2
    %v6388 = vadd.f32 %v6386, %v6387
    %v6389 = vrot.slane %v6388, 1
    %v6390 = vadd.f32 %v6388, %v6389
    %s6391 = vtos %v6390
    %v6392 = vstv %s6391
    %v6393 = vmul.f32 %v6392, 0.0030864198
    %vm6394 = vcmask 0
    %6395 = vst.msk [vmem:[#allocation7] sm:$0x1] %vm6394, %v6393
    // Predicated region
    $region34: #{tpu_custom_call.1} parent=1 // pred_check
      _
    $region35: #{tpu_custom_call.1} parent=1 // pred_check_branch
      %6397 = sbr.rel (0) target = $region37
    $region36: #{tpu_custom_call.1} parent=1 // pred_region
      %6399 = vsyncadd [#allocation4], 0
      %s6401 = sshll.u32 [#allocation7], 4
      %s6402 = int_to_ptr.vmem [resolvable:$true] %s6401
      %s6403 = sshll.u32 %s6, 4
      %s6404 = int_to_ptr.hbm [resolvable:$true] %s6403
      %6406 = dma.vmem_to_hbm [thread:$0]  %s6402, 16, %s6404, [#allocation4]
    $region37: #{tpu_custom_call.1} parent=1 // pred_fallthru
      _
    // Predicated region
    $region38: #{tpu_custom_call.1} parent=1 // pred_check
      _
    $region39: #{tpu_custom_call.1} parent=1 // pred_check_branch
      %6408 = sbr.rel (0) target = $region41
    $region40: #{tpu_custom_call.1} parent=1 // pred_region
      %6410 = dma.done [#allocation4], 16
    $region41: #{tpu_custom_call.1} parent=1 // pred_fallthru
      _
    %6411 = vsyncpa [#allocation3], 1
    %6412 = vsyncpa [#allocation6], 1
    %6413 = vsyncpa [#allocation4], 1

</llo_original>
